<compile_context>
chip_gen: v7x
topology: tpu7x:2x2x1
jax: 0.10.0
libtpu: 0.0.40
codegen_flags: <defaults>
</compile_context>

<pallas_src>
import jax
import jax.numpy as jnp
from jax import lax
from jax.experimental import pallas as pl
from jax.experimental.pallas import tpu as pltpu

# ----------------------------- small config ---------------------------------
N_CLS = 4                      # number of prompts (batch)
N_CTX = 8                      # learned context tokens
SEQ_LEN = 16                   # prefix(1) + ctx(8) + suffix(7)
CTX_DIM = 128                  # text transformer width (scaled down)
N_LAYERS = 2                   # transformer depth (scaled down)
N_HEADS = 4
HEAD_DIM = CTX_DIM // N_HEADS  # 32
EMBED_DIM = 1024               # text_projection output dim


# ----------------------------- in-kernel helpers -----------------------------
def _ln(x, g, b, eps=1e-5):
    # Row-wise LayerNorm in f32.  g, b: (1, D)
    mu = jnp.mean(x, axis=-1, keepdims=True)
    xc = x - mu
    var = jnp.mean(xc * xc, axis=-1, keepdims=True)
    return xc * lax.rsqrt(var + eps) * g + b


def _mm(a, w):
    # bf16 MXU operands (weights already bf16), f32 accumulation.
    return jnp.dot(a.astype(jnp.bfloat16), w.astype(jnp.bfloat16),
                   preferred_element_type=jnp.float32)


# --------------------- fully fused TextEncoder kernel ------------------------
def _encoder_kernel(eot_ref,                      # SMEM scalar prefetch (N,)
                    prompts_ref, pos_ref,         # (N,L,D), (L,D) f32
                    g1_ref, b1_ref, wqkv_ref, bqkv_ref, wout_ref, bout_ref,
                    g2_ref, b2_ref, w1_ref, bb1_ref, w2_ref, bb2_ref,
                    gf_ref, bf_ref, proj_ref,     # final LN + projection
                    o_ref,                        # (N, EMBED_DIM) f32 output
                    x_sc):                        # (N*L, D) f32 residual stream
    layer = pl.program_id(0)
    n_layers = pl.num_programs(0)
    N, L, D = prompts_ref.shape
    NL = N * L
    Dh = HEAD_DIM

    # ---- first grid step: embed prompts + positional embedding -------------
    @pl.when(layer == 0)
    def _():
        x_sc[...] = (prompts_ref[...] + pos_ref[...][None, :, :]).reshape(NL, D)

    x = x_sc[...]                                          # (NL, D) f32

    # ---- attention branch ---------------------------------------------------
    h = _ln(x, g1_ref[0], b1_ref[0])
    # 1/sqrt(HEAD_DIM) already folded into the Q columns of wqkv/bqkv at init.
    qkv = _mm(h, wqkv_ref[0]) + bqkv_ref[0]                # (NL, 3D) f32

    # causal mask (CLIP text transformer): key index <= query index
    causal = (lax.broadcasted_iota(jnp.int32, (L, L), 1)
              <= lax.broadcasted_iota(jnp.int32, (L, L), 0))[None]   # (1,L,L)

    head_outs = []
    for hd in range(N_HEADS):                              # static unroll (4)
        # slice per-head views straight out of qkv (no full q/k/v copies)
        qh = qkv[:, hd * Dh:(hd + 1) * Dh].reshape(N, L, Dh).astype(jnp.bfloat16)
        kh = qkv[:, D + hd * Dh:D + (hd + 1) * Dh].reshape(N, L, Dh).astype(jnp.bfloat16)
        vh = qkv[:, 2 * D + hd * Dh:2 * D + (hd + 1) * Dh].reshape(N, L, Dh).astype(jnp.bfloat16)
        s = jnp.einsum("nqd,nkd->nqk", qh, kh,
                       preferred_element_type=jnp.float32)  # (N,L,L) f32
        s = jnp.where(causal, s, -1e30)
        s = s - jnp.max(s, axis=-1, keepdims=True)
        p = jnp.exp(s)
        p = p * pl.reciprocal(jnp.sum(p, axis=-1, keepdims=True), approx=True)
        head_outs.append(jnp.einsum("nqk,nkd->nqd", p.astype(jnp.bfloat16), vh,
                                    preferred_element_type=jnp.float32))
    # assemble heads contiguously in D and apply ONE full-K out-projection
    attn = jnp.concatenate(head_outs, axis=-1).reshape(NL, D)
    attn = _mm(attn, wout_ref[0]) + bout_ref[0]

    x1 = x + attn                                          # residual 1

    # ---- MLP branch (fc1 -> QuickGELU -> fc2) -------------------------------
    h2 = _ln(x1, g2_ref[0], b2_ref[0])
    m = _mm(h2, w1_ref[0]) + bb1_ref[0]
    m = m * jax.nn.sigmoid(1.702 * m)                      # QuickGELU in f32
    m = _mm(m, w2_ref[0]) + bb2_ref[0]

    x_sc[...] = x1 + m                                     # residual 2 (stays in VMEM)

    # ---- last grid step: EOT gather + ln_final + text_projection -----------
    @pl.when(layer == n_layers - 1)
    def _():
        rows = []
        for c in range(N):                                 # static unroll (4)
            idx = eot_ref[c]                               # SMEM scalar
            rows.append(x_sc[pl.ds(c * L + idx, 1), :])    # (1, D) EOT row
        sel = jnp.concatenate(rows, axis=0)                # (N, D)
        hf = _ln(sel, gf_ref[...], bf_ref[...])            # ln_final
        o_ref[...] = _mm(hf, proj_ref[...])                # (N, EMBED_DIM), lane-dense


# ------------------------------ TextEncoder ----------------------------------
def text_encoder(prompts, tokenized_prompts, params):
    n, L, D = prompts.shape
    e = params["text_proj"].shape[1]
    # EOT index per class (trivial int reduction, plain JAX).
    eot = jnp.argmax(tokenized_prompts, axis=-1).astype(jnp.int32)   # (n_cls,)

    layer_spec = lambda shape: pl.BlockSpec(shape, lambda l, eot: (l, 0, 0))
    const3 = lambda shape: pl.BlockSpec(shape, lambda l, eot: (0, 0, 0))
    const2 = lambda shape: pl.BlockSpec(shape, lambda l, eot: (0, 0))

    grid_spec = pltpu.PrefetchScalarGridSpec(
        num_scalar_prefetch=1,
        grid=(N_LAYERS,),
        in_specs=[
            const3((n, L, D)),                 # prompts
            const2((L, D)),                    # positional embedding
            layer_spec((1, 1, D)),             # ln1_g
            layer_spec((1, 1, D)),             # ln1_b
            layer_spec((1, D, 3 * D)),         # attn_in_w  (bf16)
            layer_spec((1, 1, 3 * D)),         # attn_in_b
            layer_spec((1, D, D)),             # attn_out_w (bf16)
            layer_spec((1, 1, D)),             # attn_out_b
            layer_spec((1, 1, D)),             # ln2_g
            layer_spec((1, 1, D)),             # ln2_b
            layer_spec((1, D, 4 * D)),         # fc1_w (bf16)
            layer_spec((1, 1, 4 * D)),         # fc1_b
            layer_spec((1, 4 * D, D)),         # fc2_w (bf16)
            layer_spec((1, 1, D)),             # fc2_b
            const2((1, D)),                    # lnf_g
            const2((1, D)),                    # lnf_b
            const2((D, e)),                    # text_projection (bf16)
        ],
        out_specs=pl.BlockSpec((n, e), lambda l, eot: (0, 0)),
        scratch_shapes=[pltpu.VMEM((n * L, D), jnp.float32)],
    )

    return pl.pallas_call(
        _encoder_kernel,
        out_shape=jax.ShapeDtypeStruct((n, e), jnp.float32),
        grid_spec=grid_spec,
        compiler_params=pltpu.CompilerParams(
            dimension_semantics=("arbitrary",)),
    )(eot, prompts.astype(jnp.float32), params["pos_emb"],
      params["ln1_g"], params["ln1_b"],
      params["attn_in_w"], params["attn_in_b"],
      params["attn_out_w"], params["attn_out_b"],
      params["ln2_g"], params["ln2_b"],
      params["fc1_w"], params["fc1_b"], params["fc2_w"], params["fc2_b"],
      params["lnf_g"], params["lnf_b"], params["text_proj"])


# ------------------------------- parameter init ------------------------------
def init_params(key):
    keys = iter(jax.random.split(key, 32))

    def nrm(shape, std=0.02):
        return std * jax.random.normal(next(keys), shape, jnp.float32)

    scale = 1.0 / float(HEAD_DIM) ** 0.5

    # Weights stacked along a leading layer axis, pre-transposed (in, out),
    # matmul weights stored in bf16; LN params and biases stay f32.
    attn_in_w = nrm((N_LAYERS, CTX_DIM, 3 * CTX_DIM))
    attn_in_b = jnp.zeros((N_LAYERS, 1, 3 * CTX_DIM), jnp.float32)
    # Fold 1/sqrt(HEAD_DIM) into the Q columns of the QKV projection.
    attn_in_w = attn_in_w.at[:, :, :CTX_DIM].multiply(scale)
    attn_in_b = attn_in_b.at[:, :, :CTX_DIM].multiply(scale)

    return dict(
        pos_emb=nrm((SEQ_LEN, CTX_DIM), 0.01),
        ln1_g=jnp.ones((N_LAYERS, 1, CTX_DIM), jnp.float32),
        ln1_b=jnp.zeros((N_LAYERS, 1, CTX_DIM), jnp.float32),
        attn_in_w=attn_in_w.astype(jnp.bfloat16),
        attn_in_b=attn_in_b,
        attn_out_w=nrm((N_LAYERS, CTX_DIM, CTX_DIM)).astype(jnp.bfloat16),
        attn_out_b=jnp.zeros((N_LAYERS, 1, CTX_DIM), jnp.float32),
        ln2_g=jnp.ones((N_LAYERS, 1, CTX_DIM), jnp.float32),
        ln2_b=jnp.zeros((N_LAYERS, 1, CTX_DIM), jnp.float32),
        fc1_w=nrm((N_LAYERS, CTX_DIM, 4 * CTX_DIM)).astype(jnp.bfloat16),
        fc1_b=jnp.zeros((N_LAYERS, 1, 4 * CTX_DIM), jnp.float32),
        fc2_w=nrm((N_LAYERS, 4 * CTX_DIM, CTX_DIM)).astype(jnp.bfloat16),
        fc2_b=jnp.zeros((N_LAYERS, 1, CTX_DIM), jnp.float32),
        lnf_g=jnp.ones((1, CTX_DIM), jnp.float32),
        lnf_b=jnp.zeros((1, CTX_DIM), jnp.float32),
        text_proj=nrm((CTX_DIM, EMBED_DIM)).astype(jnp.bfloat16),
    )


if __name__ == "__main__":
    key = jax.random.PRNGKey(0)
    pkey, prkey, tkey = jax.random.split(key, 3)
    params = init_params(pkey)

    # Deterministic example inputs, shapes implied by the module:
    #   prompts:           (n_cls, seq_len, ctx_dim)
    #   tokenized_prompts: (n_cls, seq_len) — argmax(-1) gives the EOT position
    prompts = 0.02 * jax.random.normal(prkey, (N_CLS, SEQ_LEN, CTX_DIM), jnp.float32)
    eot_pos = (jnp.arange(N_CLS, dtype=jnp.int32) + 10) % SEQ_LEN
    base = jax.random.randint(tkey, (N_CLS, SEQ_LEN), 1, 100, dtype=jnp.int32)
    tokenized_prompts = base.at[jnp.arange(N_CLS), eot_pos].set(49407)

    fwd = jax.jit(lambda pr, tok: text_encoder(pr, tok, params))
    out = jax.block_until_ready(fwd(prompts, tokenized_prompts))

    assert out.shape == (N_CLS, EMBED_DIM), out.shape
    assert bool(jnp.all(jnp.isfinite(out)))
    print("KERNEL_OK")
</pallas_src>

<mosaic_0001>
module attributes {stable_mosaic.version = 11 : i64} {
  func.func @_encoder_kernel(%arg0: i32, %arg1: memref<4xi32, #tpu.memory_space<smem>>, %arg2: memref<4x16x128xf32, #tpu.memory_space<vmem>>, %arg3: memref<16x128xf32, #tpu.memory_space<vmem>>, %arg4: memref<1x1x128xf32, #tpu.memory_space<vmem>>, %arg5: memref<1x1x128xf32, #tpu.memory_space<vmem>>, %arg6: memref<1x128x384xbf16, #tpu.memory_space<vmem>>, %arg7: memref<1x1x384xf32, #tpu.memory_space<vmem>>, %arg8: memref<1x128x128xbf16, #tpu.memory_space<vmem>>, %arg9: memref<1x1x128xf32, #tpu.memory_space<vmem>>, %arg10: memref<1x1x128xf32, #tpu.memory_space<vmem>>, %arg11: memref<1x1x128xf32, #tpu.memory_space<vmem>>, %arg12: memref<1x128x512xbf16, #tpu.memory_space<vmem>>, %arg13: memref<1x1x512xf32, #tpu.memory_space<vmem>>, %arg14: memref<1x512x128xbf16, #tpu.memory_space<vmem>>, %arg15: memref<1x1x128xf32, #tpu.memory_space<vmem>>, %arg16: memref<1x128xf32, #tpu.memory_space<vmem>>, %arg17: memref<1x128xf32, #tpu.memory_space<vmem>>, %arg18: memref<128x1024xbf16, #tpu.memory_space<vmem>>, %arg19: memref<4x1024xf32, #tpu.memory_space<vmem>>, %arg20: memref<64x128xf32, #tpu.memory_space<vmem>>) attributes {dimension_semantics = [#tpu.dimension_semantics<arbitrary>], iteration_bounds = array<i64: 2>, scalar_prefetch = 1 : i64, scratch_operands = 1 : i64, tpu.core_type = #tpu.core_type<tc>, window_params = [{pipeline_mode = #tpu.pipeline_mode<synchronous>, transform_indices = @transform_0, window_bounds = array<i64: 4, 16, 128>}, {pipeline_mode = #tpu.pipeline_mode<synchronous>, transform_indices = @transform_1, window_bounds = array<i64: 16, 128>}, {transform_indices = @transform_2, window_bounds = array<i64: 1, 1, 128>}, {transform_indices = @transform_3, window_bounds = array<i64: 1, 1, 128>}, {transform_indices = @transform_4, window_bounds = array<i64: 1, 128, 384>}, {transform_indices = @transform_5, window_bounds = array<i64: 1, 1, 384>}, {transform_indices = @transform_6, window_bounds = array<i64: 1, 128, 128>}, {transform_indices = @transform_7, window_bounds = array<i64: 1, 1, 128>}, {transform_indices = @transform_8, window_bounds = array<i64: 1, 1, 128>}, {transform_indices = @transform_9, window_bounds = array<i64: 1, 1, 128>}, {transform_indices = @transform_10, window_bounds = array<i64: 1, 128, 512>}, {transform_indices = @transform_11, window_bounds = array<i64: 1, 1, 512>}, {transform_indices = @transform_12, window_bounds = array<i64: 1, 512, 128>}, {transform_indices = @transform_13, window_bounds = array<i64: 1, 1, 128>}, {pipeline_mode = #tpu.pipeline_mode<synchronous>, transform_indices = @transform_14, window_bounds = array<i64: 1, 128>}, {pipeline_mode = #tpu.pipeline_mode<synchronous>, transform_indices = @transform_15, window_bounds = array<i64: 1, 128>}, {pipeline_mode = #tpu.pipeline_mode<synchronous>, transform_indices = @transform_16, window_bounds = array<i64: 128, 1024>}, {pipeline_mode = #tpu.pipeline_mode<synchronous>, transform_indices = @transform_17, window_bounds = array<i64: 4, 1024>}]} {
    %c0_i32 = arith.constant 0 : i32
    %0 = arith.cmpi eq, %arg0, %c0_i32 : i32
    %1 = arith.extui %0 : i1 to i32
    %c0_i32_0 = arith.constant 0 : i32
    %2 = arith.cmpi ne, %1, %c0_i32_0 : i32
    scf.if %2 {
      %c0_76 = arith.constant 0 : index
      %c0_77 = arith.constant 0 : index
      %c0_78 = arith.constant 0 : index
      %208 = vector.load %arg2[%c0_76, %c0_77, %c0_78] : memref<4x16x128xf32, #tpu.memory_space<vmem>>, vector<4x16x128xf32>
      %c0_79 = arith.constant 0 : index
      %c0_80 = arith.constant 0 : index
      %209 = vector.load %arg3[%c0_79, %c0_80] : memref<16x128xf32, #tpu.memory_space<vmem>>, vector<16x128xf32>
      %210 = vector.shape_cast %209 : vector<16x128xf32> to vector<1x16x128xf32>
      %211 = vector.broadcast %210 : vector<1x16x128xf32> to vector<4x16x128xf32>
      %212 = arith.addf %208, %211 : vector<4x16x128xf32>
      %213 = vector.shape_cast %212 : vector<4x16x128xf32> to vector<64x128xf32>
      %c0_81 = arith.constant 0 : index
      %c0_82 = arith.constant 0 : index
      %214 = vector.load %arg20[%c0_81, %c0_82] : memref<64x128xf32, #tpu.memory_space<vmem>>, vector<64x128xf32>
      tpu.vector_store %arg20[%c0_81, %c0_82], %213 {strides = array<i32>} : memref<64x128xf32, #tpu.memory_space<vmem>>, vector<64x128xf32>,
    } else {
    }
    %c0 = arith.constant 0 : index
    %c0_1 = arith.constant 0 : index
    %3 = vector.load %arg20[%c0, %c0_1] : memref<64x128xf32, #tpu.memory_space<vmem>>, vector<64x128xf32>
    %c0_2 = arith.constant 0 : index
    %c0_3 = arith.constant 0 : index
    %c0_4 = arith.constant 0 : index
    %4 = vector.load %arg4[%c0_2, %c0_3, %c0_4] : memref<1x1x128xf32, #tpu.memory_space<vmem>>, vector<1x1x128xf32>
    %5 = vector.shape_cast %4 : vector<1x1x128xf32> to vector<1x128xf32>
    %c0_5 = arith.constant 0 : index
    %c0_6 = arith.constant 0 : index
    %c0_7 = arith.constant 0 : index
    %6 = vector.load %arg5[%c0_5, %c0_6, %c0_7] : memref<1x1x128xf32, #tpu.memory_space<vmem>>, vector<1x1x128xf32>
    %7 = vector.shape_cast %6 : vector<1x1x128xf32> to vector<1x128xf32>
    %cst = arith.constant dense<0.000000e+00> : vector<64xf32>
    %8 = vector.multi_reduction <add>, %3, %cst [1] : vector<64x128xf32> to vector<64xf32>
    %9 = vector.shape_cast %8 : vector<64xf32> to vector<64x1xf32>
    %cst_8 = arith.constant 1.280000e+02 : f32
    %10 = vector.broadcast %cst_8 : f32 to vector<64x1xf32>
    %11 = arith.divf %9, %10 : vector<64x1xf32>
    %12 = vector.broadcast %11 : vector<64x1xf32> to vector<64x128xf32>
    %13 = arith.subf %3, %12 : vector<64x128xf32>
    %14 = arith.mulf %13, %13 : vector<64x128xf32>
    %cst_9 = arith.constant dense<0.000000e+00> : vector<64xf32>
    %15 = vector.multi_reduction <add>, %14, %cst_9 [1] : vector<64x128xf32> to vector<64xf32>
    %16 = vector.shape_cast %15 : vector<64xf32> to vector<64x1xf32>
    %cst_10 = arith.constant 1.280000e+02 : f32
    %17 = vector.broadcast %cst_10 : f32 to vector<64x1xf32>
    %18 = arith.divf %16, %17 : vector<64x1xf32>
    %cst_11 = arith.constant 9.99999974E-6 : f32
    %19 = vector.broadcast %cst_11 : f32 to vector<64x1xf32>
    %20 = arith.addf %18, %19 : vector<64x1xf32>
    %21 = math.rsqrt %20 : vector<64x1xf32>
    %22 = vector.broadcast %21 : vector<64x1xf32> to vector<64x128xf32>
    %23 = arith.mulf %13, %22 : vector<64x128xf32>
    %24 = vector.broadcast %5 : vector<1x128xf32> to vector<64x128xf32>
    %25 = arith.mulf %23, %24 : vector<64x128xf32>
    %26 = vector.broadcast %7 : vector<1x128xf32> to vector<64x128xf32>
    %27 = arith.addf %25, %26 : vector<64x128xf32>
    %c0_12 = arith.constant 0 : index
    %c0_13 = arith.constant 0 : index
    %c0_14 = arith.constant 0 : index
    %28 = vector.load %arg6[%c0_12, %c0_13, %c0_14] : memref<1x128x384xbf16, #tpu.memory_space<vmem>>, vector<1x128x384xbf16>
    %29 = vector.shape_cast %28 : vector<1x128x384xbf16> to vector<128x384xbf16>
    %30 = arith.truncf %27 : vector<64x128xf32> to vector<64x128xbf16>
    %cst_15 = arith.constant dense<0.000000e+00> : vector<64x384xf32>
    %31 = tpu.matmul %30, %29, %cst_15 {dimension_numbers = #tpu.dot_dimension_numbers<[1], [0], [0], [1], [0, 0, 1, 1], [], []>} : vector<64x128xbf16>, vector<128x384xbf16>, vector<64x384xf32> -> vector<64x384xf32>
    %c0_16 = arith.constant 0 : index
    %c0_17 = arith.constant 0 : index
    %c0_18 = arith.constant 0 : index
    %32 = vector.load %arg7[%c0_16, %c0_17, %c0_18] : memref<1x1x384xf32, #tpu.memory_space<vmem>>, vector<1x1x384xf32>
    %33 = vector.shape_cast %32 : vector<1x1x384xf32> to vector<1x384xf32>
    %34 = vector.broadcast %33 : vector<1x384xf32> to vector<64x384xf32>
    %35 = arith.addf %31, %34 : vector<64x384xf32>
    %36 = tpu.iota {dimensions = array<i32: 1>} : vector<16x16xi32>
    %37 = tpu.iota {dimensions = array<i32: 0>} : vector<16x16xi32>
    %38 = arith.cmpi sle, %36, %37 : vector<16x16xi32>
    %39 = vector.shape_cast %38 : vector<16x16xi1> to vector<1x16x16xi1>
    %40 = vector.extract_strided_slice %35 {offsets = [0, 0], sizes = [64, 32], strides = [1, 1]} : vector<64x384xf32> to vector<64x32xf32>
    %41 = vector.shape_cast %40 : vector<64x32xf32> to vector<4x16x32xf32>
    %42 = arith.truncf %41 : vector<4x16x32xf32> to vector<4x16x32xbf16>
    %43 = vector.extract_strided_slice %35 {offsets = [0, 128], sizes = [64, 32], strides = [1, 1]} : vector<64x384xf32> to vector<64x32xf32>
    %44 = vector.shape_cast %43 : vector<64x32xf32> to vector<4x16x32xf32>
    %45 = arith.truncf %44 : vector<4x16x32xf32> to vector<4x16x32xbf16>
    %46 = vector.extract_strided_slice %35 {offsets = [0, 256], sizes = [64, 32], strides = [1, 1]} : vector<64x384xf32> to vector<64x32xf32>
    %47 = vector.shape_cast %46 : vector<64x32xf32> to vector<4x16x32xf32>
    %48 = arith.truncf %47 : vector<4x16x32xf32> to vector<4x16x32xbf16>
    "tpu.trace_start"() <{level = 10 : i32, message = "nqd,nkd->nqk"}> : () -> ()
    %cst_19 = arith.constant dense<0.000000e+00> : vector<4x16x16xf32>
    %49 = tpu.matmul %42, %45, %cst_19 {dimension_numbers = #tpu.dot_dimension_numbers<[2], [2], [1], [1], [0, 0, 0, 1, 1, 1], [0], [0]>} : vector<4x16x32xbf16>, vector<4x16x32xbf16>, vector<4x16x16xf32> -> vector<4x16x16xf32>
    %cst_20 = arith.constant -1.000000e+30 : f32
    "tpu.trace_stop"() : () -> ()
    %50 = vector.shape_cast %39 : vector<1x16x16xi1> to vector<1x16x16xi1>
    %51 = vector.broadcast %50 : vector<1x16x16xi1> to vector<4x16x16xi1>
    %52 = vector.broadcast %cst_20 : f32 to vector<4x16x16xf32>
    %53 = arith.select %51, %49, %52 : vector<4x16x16xi1>, vector<4x16x16xf32>
    %cst_21 = arith.constant dense<0xFF800000> : vector<4x16xf32>
    %54 = vector.multi_reduction <maximumf>, %53, %cst_21 [2] : vector<4x16x16xf32> to vector<4x16xf32>
    %55 = vector.shape_cast %54 : vector<4x16xf32> to vector<4x16x1xf32>
    %56 = vector.broadcast %55 : vector<4x16x1xf32> to vector<4x16x16xf32>
    %57 = arith.subf %53, %56 : vector<4x16x16xf32>
    %58 = math.exp %57 : vector<4x16x16xf32>
    %cst_22 = arith.constant dense<0.000000e+00> : vector<4x16xf32>
    %59 = vector.multi_reduction <add>, %58, %cst_22 [2] : vector<4x16x16xf32> to vector<4x16xf32>
    %60 = vector.shape_cast %59 : vector<4x16xf32> to vector<4x16x1xf32>
    %61 = tpu.reciprocal %60 {approx = true} : vector<4x16x1xf32> -> vector<4x16x1xf32>
    %62 = vector.broadcast %61 : vector<4x16x1xf32> to vector<4x16x16xf32>
    %63 = arith.mulf %58, %62 : vector<4x16x16xf32>
    %64 = arith.truncf %63 : vector<4x16x16xf32> to vector<4x16x16xbf16>
    "tpu.trace_start"() <{level = 10 : i32, message = "nqk,nkd->nqd"}> : () -> ()
    %cst_23 = arith.constant dense<0.000000e+00> : vector<4x16x32xf32>
    %65 = tpu.matmul %64, %48, %cst_23 {dimension_numbers = #tpu.dot_dimension_numbers<[2], [1], [1], [2], [0, 0, 0, 1, 1, 2], [0], [0]>} : vector<4x16x16xbf16>, vector<4x16x32xbf16>, vector<4x16x32xf32> -> vector<4x16x32xf32>
    "tpu.trace_stop"() : () -> ()
    %66 = vector.extract_strided_slice %35 {offsets = [0, 32], sizes = [64, 32], strides = [1, 1]} : vector<64x384xf32> to vector<64x32xf32>
    %67 = vector.shape_cast %66 : vector<64x32xf32> to vector<4x16x32xf32>
    %68 = arith.truncf %67 : vector<4x16x32xf32> to vector<4x16x32xbf16>
    %69 = vector.extract_strided_slice %35 {offsets = [0, 160], sizes = [64, 32], strides = [1, 1]} : vector<64x384xf32> to vector<64x32xf32>
    %70 = vector.shape_cast %69 : vector<64x32xf32> to vector<4x16x32xf32>
    %71 = arith.truncf %70 : vector<4x16x32xf32> to vector<4x16x32xbf16>
    %72 = vector.extract_strided_slice %35 {offsets = [0, 288], sizes = [64, 32], strides = [1, 1]} : vector<64x384xf32> to vector<64x32xf32>
    %73 = vector.shape_cast %72 : vector<64x32xf32> to vector<4x16x32xf32>
    %74 = arith.truncf %73 : vector<4x16x32xf32> to vector<4x16x32xbf16>
    "tpu.trace_start"() <{level = 10 : i32, message = "nqd,nkd->nqk"}> : () -> ()
    %cst_24 = arith.constant dense<0.000000e+00> : vector<4x16x16xf32>
    %75 = tpu.matmul %68, %71, %cst_24 {dimension_numbers = #tpu.dot_dimension_numbers<[2], [2], [1], [1], [0, 0, 0, 1, 1, 1], [0], [0]>} : vector<4x16x32xbf16>, vector<4x16x32xbf16>, vector<4x16x16xf32> -> vector<4x16x16xf32>
    %cst_25 = arith.constant -1.000000e+30 : f32
    "tpu.trace_stop"() : () -> ()
    %76 = vector.shape_cast %39 : vector<1x16x16xi1> to vector<1x16x16xi1>
    %77 = vector.broadcast %76 : vector<1x16x16xi1> to vector<4x16x16xi1>
    %78 = vector.broadcast %cst_25 : f32 to vector<4x16x16xf32>
    %79 = arith.select %77, %75, %78 : vector<4x16x16xi1>, vector<4x16x16xf32>
    %cst_26 = arith.constant dense<0xFF800000> : vector<4x16xf32>
    %80 = vector.multi_reduction <maximumf>, %79, %cst_26 [2] : vector<4x16x16xf32> to vector<4x16xf32>
    %81 = vector.shape_cast %80 : vector<4x16xf32> to vector<4x16x1xf32>
    %82 = vector.broadcast %81 : vector<4x16x1xf32> to vector<4x16x16xf32>
    %83 = arith.subf %79, %82 : vector<4x16x16xf32>
    %84 = math.exp %83 : vector<4x16x16xf32>
    %cst_27 = arith.constant dense<0.000000e+00> : vector<4x16xf32>
    %85 = vector.multi_reduction <add>, %84, %cst_27 [2] : vector<4x16x16xf32> to vector<4x16xf32>
    %86 = vector.shape_cast %85 : vector<4x16xf32> to vector<4x16x1xf32>
    %87 = tpu.reciprocal %86 {approx = true} : vector<4x16x1xf32> -> vector<4x16x1xf32>
    %88 = vector.broadcast %87 : vector<4x16x1xf32> to vector<4x16x16xf32>
    %89 = arith.mulf %84, %88 : vector<4x16x16xf32>
    %90 = arith.truncf %89 : vector<4x16x16xf32> to vector<4x16x16xbf16>
    "tpu.trace_start"() <{level = 10 : i32, message = "nqk,nkd->nqd"}> : () -> ()
    %cst_28 = arith.constant dense<0.000000e+00> : vector<4x16x32xf32>
    %91 = tpu.matmul %90, %74, %cst_28 {dimension_numbers = #tpu.dot_dimension_numbers<[2], [1], [1], [2], [0, 0, 0, 1, 1, 2], [0], [0]>} : vector<4x16x16xbf16>, vector<4x16x32xbf16>, vector<4x16x32xf32> -> vector<4x16x32xf32>
    "tpu.trace_stop"() : () -> ()
    %92 = vector.extract_strided_slice %35 {offsets = [0, 64], sizes = [64, 32], strides = [1, 1]} : vector<64x384xf32> to vector<64x32xf32>
    %93 = vector.shape_cast %92 : vector<64x32xf32> to vector<4x16x32xf32>
    %94 = arith.truncf %93 : vector<4x16x32xf32> to vector<4x16x32xbf16>
    %95 = vector.extract_strided_slice %35 {offsets = [0, 192], sizes = [64, 32], strides = [1, 1]} : vector<64x384xf32> to vector<64x32xf32>
    %96 = vector.shape_cast %95 : vector<64x32xf32> to vector<4x16x32xf32>
    %97 = arith.truncf %96 : vector<4x16x32xf32> to vector<4x16x32xbf16>
    %98 = vector.extract_strided_slice %35 {offsets = [0, 320], sizes = [64, 32], strides = [1, 1]} : vector<64x384xf32> to vector<64x32xf32>
    %99 = vector.shape_cast %98 : vector<64x32xf32> to vector<4x16x32xf32>
    %100 = arith.truncf %99 : vector<4x16x32xf32> to vector<4x16x32xbf16>
    "tpu.trace_start"() <{level = 10 : i32, message = "nqd,nkd->nqk"}> : () -> ()
    %cst_29 = arith.constant dense<0.000000e+00> : vector<4x16x16xf32>
    %101 = tpu.matmul %94, %97, %cst_29 {dimension_numbers = #tpu.dot_dimension_numbers<[2], [2], [1], [1], [0, 0, 0, 1, 1, 1], [0], [0]>} : vector<4x16x32xbf16>, vector<4x16x32xbf16>, vector<4x16x16xf32> -> vector<4x16x16xf32>
    %cst_30 = arith.constant -1.000000e+30 : f32
    "tpu.trace_stop"() : () -> ()
    %102 = vector.shape_cast %39 : vector<1x16x16xi1> to vector<1x16x16xi1>
    %103 = vector.broadcast %102 : vector<1x16x16xi1> to vector<4x16x16xi1>
    %104 = vector.broadcast %cst_30 : f32 to vector<4x16x16xf32>
    %105 = arith.select %103, %101, %104 : vector<4x16x16xi1>, vector<4x16x16xf32>
    %cst_31 = arith.constant dense<0xFF800000> : vector<4x16xf32>
    %106 = vector.multi_reduction <maximumf>, %105, %cst_31 [2] : vector<4x16x16xf32> to vector<4x16xf32>
    %107 = vector.shape_cast %106 : vector<4x16xf32> to vector<4x16x1xf32>
    %108 = vector.broadcast %107 : vector<4x16x1xf32> to vector<4x16x16xf32>
    %109 = arith.subf %105, %108 : vector<4x16x16xf32>
    %110 = math.exp %109 : vector<4x16x16xf32>
    %cst_32 = arith.constant dense<0.000000e+00> : vector<4x16xf32>
    %111 = vector.multi_reduction <add>, %110, %cst_32 [2] : vector<4x16x16xf32> to vector<4x16xf32>
    %112 = vector.shape_cast %111 : vector<4x16xf32> to vector<4x16x1xf32>
    %113 = tpu.reciprocal %112 {approx = true} : vector<4x16x1xf32> -> vector<4x16x1xf32>
    %114 = vector.broadcast %113 : vector<4x16x1xf32> to vector<4x16x16xf32>
    %115 = arith.mulf %110, %114 : vector<4x16x16xf32>
    %116 = arith.truncf %115 : vector<4x16x16xf32> to vector<4x16x16xbf16>
    "tpu.trace_start"() <{level = 10 : i32, message = "nqk,nkd->nqd"}> : () -> ()
    %cst_33 = arith.constant dense<0.000000e+00> : vector<4x16x32xf32>
    %117 = tpu.matmul %116, %100, %cst_33 {dimension_numbers = #tpu.dot_dimension_numbers<[2], [1], [1], [2], [0, 0, 0, 1, 1, 2], [0], [0]>} : vector<4x16x16xbf16>, vector<4x16x32xbf16>, vector<4x16x32xf32> -> vector<4x16x32xf32>
    "tpu.trace_stop"() : () -> ()
    %118 = vector.extract_strided_slice %35 {offsets = [0, 96], sizes = [64, 32], strides = [1, 1]} : vector<64x384xf32> to vector<64x32xf32>
    %119 = vector.shape_cast %118 : vector<64x32xf32> to vector<4x16x32xf32>
    %120 = arith.truncf %119 : vector<4x16x32xf32> to vector<4x16x32xbf16>
    %121 = vector.extract_strided_slice %35 {offsets = [0, 224], sizes = [64, 32], strides = [1, 1]} : vector<64x384xf32> to vector<64x32xf32>
    %122 = vector.shape_cast %121 : vector<64x32xf32> to vector<4x16x32xf32>
    %123 = arith.truncf %122 : vector<4x16x32xf32> to vector<4x16x32xbf16>
    %124 = vector.extract_strided_slice %35 {offsets = [0, 352], sizes = [64, 32], strides = [1, 1]} : vector<64x384xf32> to vector<64x32xf32>
    %125 = vector.shape_cast %124 : vector<64x32xf32> to vector<4x16x32xf32>
    %126 = arith.truncf %125 : vector<4x16x32xf32> to vector<4x16x32xbf16>
    "tpu.trace_start"() <{level = 10 : i32, message = "nqd,nkd->nqk"}> : () -> ()
    %cst_34 = arith.constant dense<0.000000e+00> : vector<4x16x16xf32>
    %127 = tpu.matmul %120, %123, %cst_34 {dimension_numbers = #tpu.dot_dimension_numbers<[2], [2], [1], [1], [0, 0, 0, 1, 1, 1], [0], [0]>} : vector<4x16x32xbf16>, vector<4x16x32xbf16>, vector<4x16x16xf32> -> vector<4x16x16xf32>
    %cst_35 = arith.constant -1.000000e+30 : f32
    "tpu.trace_stop"() : () -> ()
    %128 = vector.shape_cast %39 : vector<1x16x16xi1> to vector<1x16x16xi1>
    %129 = vector.broadcast %128 : vector<1x16x16xi1> to vector<4x16x16xi1>
    %130 = vector.broadcast %cst_35 : f32 to vector<4x16x16xf32>
    %131 = arith.select %129, %127, %130 : vector<4x16x16xi1>, vector<4x16x16xf32>
    %cst_36 = arith.constant dense<0xFF800000> : vector<4x16xf32>
    %132 = vector.multi_reduction <maximumf>, %131, %cst_36 [2] : vector<4x16x16xf32> to vector<4x16xf32>
    %133 = vector.shape_cast %132 : vector<4x16xf32> to vector<4x16x1xf32>
    %134 = vector.broadcast %133 : vector<4x16x1xf32> to vector<4x16x16xf32>
    %135 = arith.subf %131, %134 : vector<4x16x16xf32>
    %136 = math.exp %135 : vector<4x16x16xf32>
    %cst_37 = arith.constant dense<0.000000e+00> : vector<4x16xf32>
    %137 = vector.multi_reduction <add>, %136, %cst_37 [2] : vector<4x16x16xf32> to vector<4x16xf32>
    %138 = vector.shape_cast %137 : vector<4x16xf32> to vector<4x16x1xf32>
    %139 = tpu.reciprocal %138 {approx = true} : vector<4x16x1xf32> -> vector<4x16x1xf32>
    %140 = vector.broadcast %139 : vector<4x16x1xf32> to vector<4x16x16xf32>
    %141 = arith.mulf %136, %140 : vector<4x16x16xf32>
    %142 = arith.truncf %141 : vector<4x16x16xf32> to vector<4x16x16xbf16>
    "tpu.trace_start"() <{level = 10 : i32, message = "nqk,nkd->nqd"}> : () -> ()
    %cst_38 = arith.constant dense<0.000000e+00> : vector<4x16x32xf32>
    %143 = tpu.matmul %142, %126, %cst_38 {dimension_numbers = #tpu.dot_dimension_numbers<[2], [1], [1], [2], [0, 0, 0, 1, 1, 2], [0], [0]>} : vector<4x16x16xbf16>, vector<4x16x32xbf16>, vector<4x16x32xf32> -> vector<4x16x32xf32>
    "tpu.trace_stop"() : () -> ()
    %144 = tpu.concatenate %65, %91, %117, %143 in 2 : vector<4x16x32xf32>, vector<4x16x32xf32>, vector<4x16x32xf32>, vector<4x16x32xf32> -> vector<4x16x128xf32>
    %145 = vector.shape_cast %144 : vector<4x16x128xf32> to vector<64x128xf32>
    %c0_39 = arith.constant 0 : index
    %c0_40 = arith.constant 0 : index
    %c0_41 = arith.constant 0 : index
    %146 = vector.load %arg8[%c0_39, %c0_40, %c0_41] : memref<1x128x128xbf16, #tpu.memory_space<vmem>>, vector<1x128x128xbf16>
    %147 = vector.shape_cast %146 : vector<1x128x128xbf16> to vector<128x128xbf16>
    %148 = arith.truncf %145 : vector<64x128xf32> to vector<64x128xbf16>
    %cst_42 = arith.constant dense<0.000000e+00> : vector<64x128xf32>
    %149 = tpu.matmul %148, %147, %cst_42 {dimension_numbers = #tpu.dot_dimension_numbers<[1], [0], [0], [1], [0, 0, 1, 1], [], []>} : vector<64x128xbf16>, vector<128x128xbf16>, vector<64x128xf32> -> vector<64x128xf32>
    %c0_43 = arith.constant 0 : index
    %c0_44 = arith.constant 0 : index
    %c0_45 = arith.constant 0 : index
    %150 = vector.load %arg9[%c0_43, %c0_44, %c0_45] : memref<1x1x128xf32, #tpu.memory_space<vmem>>, vector<1x1x128xf32>
    %151 = vector.shape_cast %150 : vector<1x1x128xf32> to vector<1x128xf32>
    %152 = vector.broadcast %151 : vector<1x128xf32> to vector<64x128xf32>
    %153 = arith.addf %149, %152 : vector<64x128xf32>
    %154 = arith.addf %3, %153 : vector<64x128xf32>
    %c0_46 = arith.constant 0 : index
    %c0_47 = arith.constant 0 : index
    %c0_48 = arith.constant 0 : index
    %155 = vector.load %arg10[%c0_46, %c0_47, %c0_48] : memref<1x1x128xf32, #tpu.memory_space<vmem>>, vector<1x1x128xf32>
    %156 = vector.shape_cast %155 : vector<1x1x128xf32> to vector<1x128xf32>
    %c0_49 = arith.constant 0 : index
    %c0_50 = arith.constant 0 : index
    %c0_51 = arith.constant 0 : index
    %157 = vector.load %arg11[%c0_49, %c0_50, %c0_51] : memref<1x1x128xf32, #tpu.memory_space<vmem>>, vector<1x1x128xf32>
    %158 = vector.shape_cast %157 : vector<1x1x128xf32> to vector<1x128xf32>
    %cst_52 = arith.constant dense<0.000000e+00> : vector<64xf32>
    %159 = vector.multi_reduction <add>, %154, %cst_52 [1] : vector<64x128xf32> to vector<64xf32>
    %160 = vector.shape_cast %159 : vector<64xf32> to vector<64x1xf32>
    %cst_53 = arith.constant 1.280000e+02 : f32
    %161 = vector.broadcast %cst_53 : f32 to vector<64x1xf32>
    %162 = arith.divf %160, %161 : vector<64x1xf32>
    %163 = vector.broadcast %162 : vector<64x1xf32> to vector<64x128xf32>
    %164 = arith.subf %154, %163 : vector<64x128xf32>
    %165 = arith.mulf %164, %164 : vector<64x128xf32>
    %cst_54 = arith.constant dense<0.000000e+00> : vector<64xf32>
    %166 = vector.multi_reduction <add>, %165, %cst_54 [1] : vector<64x128xf32> to vector<64xf32>
    %167 = vector.shape_cast %166 : vector<64xf32> to vector<64x1xf32>
    %cst_55 = arith.constant 1.280000e+02 : f32
    %168 = vector.broadcast %cst_55 : f32 to vector<64x1xf32>
    %169 = arith.divf %167, %168 : vector<64x1xf32>
    %cst_56 = arith.constant 9.99999974E-6 : f32
    %170 = vector.broadcast %cst_56 : f32 to vector<64x1xf32>
    %171 = arith.addf %169, %170 : vector<64x1xf32>
    %172 = math.rsqrt %171 : vector<64x1xf32>
    %173 = vector.broadcast %172 : vector<64x1xf32> to vector<64x128xf32>
    %174 = arith.mulf %164, %173 : vector<64x128xf32>
    %175 = vector.broadcast %156 : vector<1x128xf32> to vector<64x128xf32>
    %176 = arith.mulf %174, %175 : vector<64x128xf32>
    %177 = vector.broadcast %158 : vector<1x128xf32> to vector<64x128xf32>
    %178 = arith.addf %176, %177 : vector<64x128xf32>
    %c0_57 = arith.constant 0 : index
    %c0_58 = arith.constant 0 : index
    %c0_59 = arith.constant 0 : index
    %179 = vector.load %arg12[%c0_57, %c0_58, %c0_59] : memref<1x128x512xbf16, #tpu.memory_space<vmem>>, vector<1x128x512xbf16>
    %180 = vector.shape_cast %179 : vector<1x128x512xbf16> to vector<128x512xbf16>
    %181 = arith.truncf %178 : vector<64x128xf32> to vector<64x128xbf16>
    %cst_60 = arith.constant dense<0.000000e+00> : vector<64x512xf32>
    %182 = tpu.matmul %181, %180, %cst_60 {dimension_numbers = #tpu.dot_dimension_numbers<[1], [0], [0], [1], [0, 0, 1, 1], [], []>} : vector<64x128xbf16>, vector<128x512xbf16>, vector<64x512xf32> -> vector<64x512xf32>
    %c0_61 = arith.constant 0 : index
    %c0_62 = arith.constant 0 : index
    %c0_63 = arith.constant 0 : index
    %183 = vector.load %arg13[%c0_61, %c0_62, %c0_63] : memref<1x1x512xf32, #tpu.memory_space<vmem>>, vector<1x1x512xf32>
    %184 = vector.shape_cast %183 : vector<1x1x512xf32> to vector<1x512xf32>
    %185 = vector.broadcast %184 : vector<1x512xf32> to vector<64x512xf32>
    %186 = arith.addf %182, %185 : vector<64x512xf32>
    %cst_64 = arith.constant 1.702000e+00 : f32
    %187 = vector.broadcast %cst_64 : f32 to vector<64x512xf32>
    %188 = arith.mulf %187, %186 : vector<64x512xf32>
    %189 = arith.negf %188 : vector<64x512xf32>
    %190 = math.exp %189 : vector<64x512xf32>
    %cst_65 = arith.constant 1.000000e+00 : f32
    %191 = vector.broadcast %cst_65 : f32 to vector<64x512xf32>
    %192 = arith.addf %191, %190 : vector<64x512xf32>
    %193 = arith.divf %191, %192 : vector<64x512xf32>
    %194 = arith.mulf %186, %193 : vector<64x512xf32>
    %c0_66 = arith.constant 0 : index
    %c0_67 = arith.constant 0 : index
    %c0_68 = arith.constant 0 : index
    %195 = vector.load %arg14[%c0_66, %c0_67, %c0_68] : memref<1x512x128xbf16, #tpu.memory_space<vmem>>, vector<1x512x128xbf16>
    %196 = vector.shape_cast %195 : vector<1x512x128xbf16> to vector<512x128xbf16>
    %197 = arith.truncf %194 : vector<64x512xf32> to vector<64x512xbf16>
    %cst_69 = arith.constant dense<0.000000e+00> : vector<64x128xf32>
    %198 = tpu.matmul %197, %196, %cst_69 {dimension_numbers = #tpu.dot_dimension_numbers<[1], [0], [0], [1], [0, 0, 1, 1], [], []>} : vector<64x512xbf16>, vector<512x128xbf16>, vector<64x128xf32> -> vector<64x128xf32>
    %c0_70 = arith.constant 0 : index
    %c0_71 = arith.constant 0 : index
    %c0_72 = arith.constant 0 : index
    %199 = vector.load %arg15[%c0_70, %c0_71, %c0_72] : memref<1x1x128xf32, #tpu.memory_space<vmem>>, vector<1x1x128xf32>
    %200 = vector.shape_cast %199 : vector<1x1x128xf32> to vector<1x128xf32>
    %201 = vector.broadcast %200 : vector<1x128xf32> to vector<64x128xf32>
    %202 = arith.addf %198, %201 : vector<64x128xf32>
    %203 = arith.addf %154, %202 : vector<64x128xf32>
    %c0_73 = arith.constant 0 : index
    %c0_74 = arith.constant 0 : index
    %204 = vector.load %arg20[%c0_73, %c0_74] : memref<64x128xf32, #tpu.memory_space<vmem>>, vector<64x128xf32>
    tpu.vector_store %arg20[%c0_73, %c0_74], %203 {strides = array<i32>} : memref<64x128xf32, #tpu.memory_space<vmem>>, vector<64x128xf32>,
    %c1_i32 = arith.constant 1 : i32
    %205 = arith.cmpi eq, %arg0, %c1_i32 : i32
    %206 = arith.extui %205 : i1 to i32
    %c0_i32_75 = arith.constant 0 : i32
    %207 = arith.cmpi ne, %206, %c0_i32_75 : i32
    scf.if %207 {
      %c0_76 = arith.constant 0 : index
      %208 = memref.load %arg1[%c0_76] : memref<4xi32, #tpu.memory_space<smem>>
      %c0_i32_77 = arith.constant 0 : i32
      %209 = arith.addi %c0_i32_77, %208 : i32
      %210 = arith.index_cast %209 : i32 to index
      %c0_78 = arith.constant 0 : index
      %211 = vector.load %arg20[%210, %c0_78] : memref<64x128xf32, #tpu.memory_space<vmem>>, vector<1x128xf32>
      %c1 = arith.constant 1 : index
      %212 = memref.load %arg1[%c1] : memref<4xi32, #tpu.memory_space<smem>>
      %c16_i32 = arith.constant 16 : i32
      %213 = arith.addi %c16_i32, %212 : i32
      %214 = arith.index_cast %213 : i32 to index
      %c0_79 = arith.constant 0 : index
      %215 = vector.load %arg20[%214, %c0_79] : memref<64x128xf32, #tpu.memory_space<vmem>>, vector<1x128xf32>
      %c2 = arith.constant 2 : index
      %216 = memref.load %arg1[%c2] : memref<4xi32, #tpu.memory_space<smem>>
      %c32_i32 = arith.constant 32 : i32
      %217 = arith.addi %c32_i32, %216 : i32
      %218 = arith.index_cast %217 : i32 to index
      %c0_80 = arith.constant 0 : index
      %219 = vector.load %arg20[%218, %c0_80] : memref<64x128xf32, #tpu.memory_space<vmem>>, vector<1x128xf32>
      %c3 = arith.constant 3 : index
      %220 = memref.load %arg1[%c3] : memref<4xi32, #tpu.memory_space<smem>>
      %c48_i32 = arith.constant 48 : i32
      %221 = arith.addi %c48_i32, %220 : i32
      %222 = arith.index_cast %221 : i32 to index
      %c0_81 = arith.constant 0 : index
      %223 = vector.load %arg20[%222, %c0_81] : memref<64x128xf32, #tpu.memory_space<vmem>>, vector<1x128xf32>
      %224 = tpu.concatenate %211, %215, %219, %223 in 0 : vector<1x128xf32>, vector<1x128xf32>, vector<1x128xf32>, vector<1x128xf32> -> vector<4x128xf32>
      %c0_82 = arith.constant 0 : index
      %c0_83 = arith.constant 0 : index
      %225 = vector.load %arg16[%c0_82, %c0_83] : memref<1x128xf32, #tpu.memory_space<vmem>>, vector<1x128xf32>
      %c0_84 = arith.constant 0 : index
      %c0_85 = arith.constant 0 : index
      %226 = vector.load %arg17[%c0_84, %c0_85] : memref<1x128xf32, #tpu.memory_space<vmem>>, vector<1x128xf32>
      %cst_86 = arith.constant dense<0.000000e+00> : vector<4xf32>
      %227 = vector.multi_reduction <add>, %224, %cst_86 [1] : vector<4x128xf32> to vector<4xf32>
      %228 = vector.shape_cast %227 : vector<4xf32> to vector<4x1xf32>
      %cst_87 = arith.constant 1.280000e+02 : f32
      %229 = vector.broadcast %cst_87 : f32 to vector<4x1xf32>
      %230 = arith.divf %228, %229 : vector<4x1xf32>
      %231 = vector.broadcast %230 : vector<4x1xf32> to vector<4x128xf32>
      %232 = arith.subf %224, %231 : vector<4x128xf32>
      %233 = arith.mulf %232, %232 : vector<4x128xf32>
      %cst_88 = arith.constant dense<0.000000e+00> : vector<4xf32>
      %234 = vector.multi_reduction <add>, %233, %cst_88 [1] : vector<4x128xf32> to vector<4xf32>
      %235 = vector.shape_cast %234 : vector<4xf32> to vector<4x1xf32>
      %cst_89 = arith.constant 1.280000e+02 : f32
      %236 = vector.broadcast %cst_89 : f32 to vector<4x1xf32>
      %237 = arith.divf %235, %236 : vector<4x1xf32>
      %cst_90 = arith.constant 9.99999974E-6 : f32
      %238 = vector.broadcast %cst_90 : f32 to vector<4x1xf32>
      %239 = arith.addf %237, %238 : vector<4x1xf32>
      %240 = math.rsqrt %239 : vector<4x1xf32>
      %241 = vector.broadcast %240 : vector<4x1xf32> to vector<4x128xf32>
      %242 = arith.mulf %232, %241 : vector<4x128xf32>
      %243 = vector.broadcast %225 : vector<1x128xf32> to vector<4x128xf32>
      %244 = arith.mulf %242, %243 : vector<4x128xf32>
      %245 = vector.broadcast %226 : vector<1x128xf32> to vector<4x128xf32>
      %246 = arith.addf %244, %245 : vector<4x128xf32>
      %c0_91 = arith.constant 0 : index
      %c0_92 = arith.constant 0 : index
      %247 = vector.load %arg18[%c0_91, %c0_92] : memref<128x1024xbf16, #tpu.memory_space<vmem>>, vector<128x1024xbf16>
      %248 = arith.truncf %246 : vector<4x128xf32> to vector<4x128xbf16>
      %cst_93 = arith.constant dense<0.000000e+00> : vector<4x1024xf32>
      %249 = tpu.matmul %248, %247, %cst_93 {dimension_numbers = #tpu.dot_dimension_numbers<[1], [0], [0], [1], [0, 0, 1, 1], [], []>} : vector<4x128xbf16>, vector<128x1024xbf16>, vector<4x1024xf32> -> vector<4x1024xf32>
      %c0_94 = arith.constant 0 : index
      %c0_95 = arith.constant 0 : index
      %250 = vector.load %arg19[%c0_94, %c0_95] : memref<4x1024xf32, #tpu.memory_space<vmem>>, vector<4x1024xf32>
      tpu.vector_store %arg19[%c0_94, %c0_95], %249 {strides = array<i32>} : memref<4x1024xf32, #tpu.memory_space<vmem>>, vector<4x1024xf32>,
    } else {
    }
    return
  }
  func.func @transform_0(%arg0: i32, %arg1: memref<4xi32, #tpu.memory_space<smem>>) -> (i32, i32, i32) {
    %c0_i32 = arith.constant 0 : i32
    %c0_i32_0 = arith.constant 0 : i32
    %c0_i32_1 = arith.constant 0 : i32
    %c0_i32_2 = arith.constant 0 : i32
    return %c0_i32, %c0_i32_0, %c0_i32_1 : i32, i32, i32
  }
  func.func @transform_1(%arg0: i32, %arg1: memref<4xi32, #tpu.memory_space<smem>>) -> (i32, i32) {
    %c0_i32 = arith.constant 0 : i32
    %c0_i32_0 = arith.constant 0 : i32
    %c0_i32_1 = arith.constant 0 : i32
    return %c0_i32, %c0_i32_0 : i32, i32
  }
  func.func @transform_2(%arg0: i32, %arg1: memref<4xi32, #tpu.memory_space<smem>>) -> (i32, i32, i32) {
    %c0_i32 = arith.constant 0 : i32
    %c0_i32_0 = arith.constant 0 : i32
    %c0_i32_1 = arith.constant 0 : i32
    return %arg0, %c0_i32, %c0_i32_0 : i32, i32, i32
  }
  func.func @transform_3(%arg0: i32, %arg1: memref<4xi32, #tpu.memory_space<smem>>) -> (i32, i32, i32) {
    %c0_i32 = arith.constant 0 : i32
    %c0_i32_0 = arith.constant 0 : i32
    %c0_i32_1 = arith.constant 0 : i32
    return %arg0, %c0_i32, %c0_i32_0 : i32, i32, i32
  }
  func.func @transform_4(%arg0: i32, %arg1: memref<4xi32, #tpu.memory_space<smem>>) -> (i32, i32, i32) {
    %c0_i32 = arith.constant 0 : i32
    %c0_i32_0 = arith.constant 0 : i32
    %c0_i32_1 = arith.constant 0 : i32
    return %arg0, %c0_i32, %c0_i32_0 : i32, i32, i32
  }
  func.func @transform_5(%arg0: i32, %arg1: memref<4xi32, #tpu.memory_space<smem>>) -> (i32, i32, i32) {
    %c0_i32 = arith.constant 0 : i32
    %c0_i32_0 = arith.constant 0 : i32
    %c0_i32_1 = arith.constant 0 : i32
    return %arg0, %c0_i32, %c0_i32_0 : i32, i32, i32
  }
  func.func @transform_6(%arg0: i32, %arg1: memref<4xi32, #tpu.memory_space<smem>>) -> (i32, i32, i32) {
    %c0_i32 = arith.constant 0 : i32
    %c0_i32_0 = arith.constant 0 : i32
    %c0_i32_1 = arith.constant 0 : i32
    return %arg0, %c0_i32, %c0_i32_0 : i32, i32, i32
  }
  func.func @transform_7(%arg0: i32, %arg1: memref<4xi32, #tpu.memory_space<smem>>) -> (i32, i32, i32) {
    %c0_i32 = arith.constant 0 : i32
    %c0_i32_0 = arith.constant 0 : i32
    %c0_i32_1 = arith.constant 0 : i32
    return %arg0, %c0_i32, %c0_i32_0 : i32, i32, i32
  }
  func.func @transform_8(%arg0: i32, %arg1: memref<4xi32, #tpu.memory_space<smem>>) -> (i32, i32, i32) {
    %c0_i32 = arith.constant 0 : i32
    %c0_i32_0 = arith.constant 0 : i32
    %c0_i32_1 = arith.constant 0 : i32
    return %arg0, %c0_i32, %c0_i32_0 : i32, i32, i32
  }
  func.func @transform_9(%arg0: i32, %arg1: memref<4xi32, #tpu.memory_space<smem>>) -> (i32, i32, i32) {
    %c0_i32 = arith.constant 0 : i32
    %c0_i32_0 = arith.constant 0 : i32
    %c0_i32_1 = arith.constant 0 : i32
    return %arg0, %c0_i32, %c0_i32_0 : i32, i32, i32
  }
  func.func @transform_10(%arg0: i32, %arg1: memref<4xi32, #tpu.memory_space<smem>>) -> (i32, i32, i32) {
    %c0_i32 = arith.constant 0 : i32
    %c0_i32_0 = arith.constant 0 : i32
    %c0_i32_1 = arith.constant 0 : i32
    return %arg0, %c0_i32, %c0_i32_0 : i32, i32, i32
  }
  func.func @transform_11(%arg0: i32, %arg1: memref<4xi32, #tpu.memory_space<smem>>) -> (i32, i32, i32) {
    %c0_i32 = arith.constant 0 : i32
    %c0_i32_0 = arith.constant 0 : i32
    %c0_i32_1 = arith.constant 0 : i32
    return %arg0, %c0_i32, %c0_i32_0 : i32, i32, i32
  }
  func.func @transform_12(%arg0: i32, %arg1: memref<4xi32, #tpu.memory_space<smem>>) -> (i32, i32, i32) {
    %c0_i32 = arith.constant 0 : i32
    %c0_i32_0 = arith.constant 0 : i32
    %c0_i32_1 = arith.constant 0 : i32
    return %arg0, %c0_i32, %c0_i32_0 : i32, i32, i32
  }
  func.func @transform_13(%arg0: i32, %arg1: memref<4xi32, #tpu.memory_space<smem>>) -> (i32, i32, i32) {
    %c0_i32 = arith.constant 0 : i32
    %c0_i32_0 = arith.constant 0 : i32
    %c0_i32_1 = arith.constant 0 : i32
    return %arg0, %c0_i32, %c0_i32_0 : i32, i32, i32
  }
  func.func @transform_14(%arg0: i32, %arg1: memref<4xi32, #tpu.memory_space<smem>>) -> (i32, i32) {
    %c0_i32 = arith.constant 0 : i32
    %c0_i32_0 = arith.constant 0 : i32
    %c0_i32_1 = arith.constant 0 : i32
    return %c0_i32, %c0_i32_0 : i32, i32
  }
  func.func @transform_15(%arg0: i32, %arg1: memref<4xi32, #tpu.memory_space<smem>>) -> (i32, i32) {
    %c0_i32 = arith.constant 0 : i32
    %c0_i32_0 = arith.constant 0 : i32
    %c0_i32_1 = arith.constant 0 : i32
    return %c0_i32, %c0_i32_0 : i32, i32
  }
  func.func @transform_16(%arg0: i32, %arg1: memref<4xi32, #tpu.memory_space<smem>>) -> (i32, i32) {
    %c0_i32 = arith.constant 0 : i32
    %c0_i32_0 = arith.constant 0 : i32
    %c0_i32_1 = arith.constant 0 : i32
    return %c0_i32, %c0_i32_0 : i32, i32
  }
  func.func @transform_17(%arg0: i32, %arg1: memref<4xi32, #tpu.memory_space<smem>>) -> (i32, i32) {
    %c0_i32 = arith.constant 0 : i32
    %c0_i32_0 = arith.constant 0 : i32
    %c0_i32_1 = arith.constant 0 : i32
    return %c0_i32, %c0_i32_0 : i32, i32
  }
}

</mosaic_0001>

<llo_original>
// kernel: _lambda_.1
$region0: #{_lambda_.1}
  #allocation0 [shape = 'u32[]', space=smem, size = 0x4, offset = 0x4, fixed_abs, tag = 'smem constant byte address 0x4 - core index']
  #allocation1 [shape = 'u32[144,128]{1,0:T(1,128)}', space=vmem, size = 0x12000, scoped, tag = 'internal scratch']
  #allocation2 [shape = 'f32[64,128]{1,0:T(8,128)}', space=vmem, size = 0x8000, scoped, tag = 'scratch operand']
  #allocation3 [shape = 's32[1]{0}', space=sflag, size = 0x4, scoped, tag = 'scoped memory for _lambda_.1']
  #allocation4 [shape = 'u8[512]{0}', space=smem, size = 0x200, scoped, tag = 'prefetched SMEM operand 0']
  %s0 = inlined_call_operand.vmem [shape: s32[4], index: 0, kind: input, shape index: {}]
  %s1 = inlined_call_operand.vmem [shape: f32[4,16,128], index: 1, kind: input, shape index: {}]
  %s2 = inlined_call_operand.vmem [shape: f32[16,128], index: 2, kind: input, shape index: {}]
  %s3 = inlined_call_operand.vmem [shape: f32[2,1,128], index: 3, kind: input, shape index: {}, may-alias: {3,9}]
  %s4 = inlined_call_operand.vmem [shape: f32[2,1,128], index: 4, kind: input, shape index: {}, may-alias: {4,8,10,14}]
  %s5 = inlined_call_operand.vmem [shape: bf16[2,128,384], index: 5, kind: input, shape index: {}]
  %s6 = inlined_call_operand.vmem [shape: f32[2,1,384], index: 6, kind: input, shape index: {}]
  %s7 = inlined_call_operand.vmem [shape: bf16[2,128,128], index: 7, kind: input, shape index: {}]
  %s8 = inlined_call_operand.vmem [shape: f32[2,1,128], index: 8, kind: input, shape index: {}, may-alias: {4,8,10,14}]
  %s9 = inlined_call_operand.vmem [shape: f32[2,1,128], index: 9, kind: input, shape index: {}, may-alias: {3,9}]
  %s10 = inlined_call_operand.vmem [shape: f32[2,1,128], index: 10, kind: input, shape index: {}, may-alias: {4,8,10,14}]
  %s11 = inlined_call_operand.vmem [shape: bf16[2,128,512], index: 11, kind: input, shape index: {}]
  %s12 = inlined_call_operand.vmem [shape: f32[2,1,512], index: 12, kind: input, shape index: {}]
  %s13 = inlined_call_operand.vmem [shape: bf16[2,512,128], index: 13, kind: input, shape index: {}]
  %s14 = inlined_call_operand.vmem [shape: f32[2,1,128], index: 14, kind: input, shape index: {}, may-alias: {4,8,10,14}]
  %s15 = inlined_call_operand.vmem [shape: f32[1,128], index: 15, kind: input, shape index: {}]
  %s16 = inlined_call_operand.vmem [shape: f32[1,128], index: 16, kind: input, shape index: {}]
  %s17 = inlined_call_operand.vmem [shape: bf16[128,1024], index: 17, kind: input, shape index: {}]
  %s18 = inlined_call_operand.hbm [shape: f32[4,1024], index: 18, kind: output, shape index: {}]
  %s19 = sld [smem:[#allocation0]]
  $region109: #{_lambda_.1} parent=0
    _
  %s21 = ssub.s32 1, %s19
  %s22 = scalar_select 0, %s21, %s19
  %s23 = sshll.u32 %s0, 4
  %s24 = int_to_ptr.vmem [resolvable:$true] %s23
  %26 = dma.vmem_to_smem %s24, 16, [#allocation4], [#allocation3]
  %27 = dma.done [#allocation3], 16
  %28 = sfence
  $region1: #{_lambda_.1} parent=0
    #allocation5 [shape = 'u8[16384]{0}', space=vmem, size = 0x4000, scoped, tag = 'output window, operand 0, single buffered']
    #allocation6 [shape = 's32[2]{0}', space=sflag, size = 0x8, scoped, tag = 'scoped memory for _lambda_.1']
    %29 = vsyncpa [#allocation6], 0
    loop: start=0, step=1, limit=4
    $region2: #{_lambda_.1} parent=1 // loop_pre_header
      _
    $region3: #{_lambda_.1} parent=1 // loop_header
      %s31 = sphi 0, %s35
      %p32 = scmp.ge.s32.totalorder %s31, 4
      %s39 = sphi 0, %s39
      %s41 = sphi 0, %s39
      %s42 = sphi 0, %s41
      %s56 = sphi 0, %s42
      %s60 = sphi 0, %s60
      %s62 = sphi 0, %s60
      %s63 = sphi 0, %s62
      %s77 = sphi 0, %s63
      %s83 = sphi 0, %s85
      %s86 = sphi 0, %s83
      %s87 = sphi 0, %s86
      %s103 = sphi 0, %s87
      %s109 = sphi 0, %s111
      %s112 = sphi 0, %s109
      %s113 = sphi 0, %s112
      %s129 = sphi 0, %s113
      %s135 = sphi 0, %s137
      %s138 = sphi 0, %s135
      %s139 = sphi 0, %s138
      %s155 = sphi 0, %s139
      %s161 = sphi 0, %s163
      %s164 = sphi 0, %s161
      %s165 = sphi 0, %s164
      %s181 = sphi 0, %s165
      %s187 = sphi 0, %s189
      %s190 = sphi 0, %s187
      %s191 = sphi 0, %s190
      %s207 = sphi 0, %s191
      %s213 = sphi 0, %s215
      %s216 = sphi 0, %s213
      %s217 = sphi 0, %s216
      %s233 = sphi 0, %s217
      %s239 = sphi 0, %s241
      %s242 = sphi 0, %s239
      %s243 = sphi 0, %s242
      %s259 = sphi 0, %s243
      %s265 = sphi 0, %s267
      %s268 = sphi 0, %s265
      %s269 = sphi 0, %s268
      %s285 = sphi 0, %s269
      %s291 = sphi 0, %s293
      %s294 = sphi 0, %s291
      %s295 = sphi 0, %s294
      %s311 = sphi 0, %s295
      %s317 = sphi 0, %s319
      %s320 = sphi 0, %s317
      %s321 = sphi 0, %s320
      %s337 = sphi 0, %s321
      %s343 = sphi 0, %s345
      %s346 = sphi 0, %s343
      %s347 = sphi 0, %s346
      %s363 = sphi 0, %s347
      %s369 = sphi 0, %s371
      %s372 = sphi 0, %s369
      %s373 = sphi 0, %s372
      %s389 = sphi 0, %s373
      %s393 = sphi 0, %s393
      %s395 = sphi 0, %s393
      %s396 = sphi 0, %s395
      %s410 = sphi 0, %s396
      %s414 = sphi 0, %s414
      %s416 = sphi 0, %s414
      %s417 = sphi 0, %s416
      %s431 = sphi 0, %s417
      %s435 = sphi 0, %s435
      %s437 = sphi 0, %s435
      %s438 = sphi 0, %s437
      %s452 = sphi 0, %s438
      %s456 = sphi 0, %s456
      %s458 = sphi 0, %s456
      %s459 = sphi 0, %s458
      %s473 = sphi 0, %s459
    $region4: #{_lambda_.1} parent=1 // loop_header_branch
      %34 = sbr.rel (%p32) target = $region8
    $region5: #{_lambda_.1} parent=1 // loop_body
      %s36 = ssub.s32 %s31, 1
      %s37 = ssub.s32 %s31, 2
      %s38 = sadd.s32 %s31, 1
      %s40 = sadd.s32 %s39, 1
      %p43 = scmp.eq.s32.totalorder %s31, 1
      %p44 = scmp.ne.s32.totalorder %s39, %s41
      %p45 = scmp.eq.s32.totalorder %s31, 0
      %p46 = por %p44, %p45
      %p47 = scmp.ne.s32.totalorder %s39, %s41
      %p48 = scmp.eq.s32.totalorder %s36, 1
      %p49 = por %p47, %p48
      %p50 = scmp.ne.s32.totalorder %s41, %s42
      %p51 = scmp.eq.s32.totalorder %s36, 0
      %p52 = por %p50, %p51
      %p53 = scmp.ne.s32.totalorder %s41, %s42
      %p54 = scmp.eq.s32.totalorder %s37, 1
      %p55 = por %p53, %p54
      %p57 = scmp.ne.s32.totalorder %s42, %s56
      %p58 = scmp.eq.s32.totalorder %s37, 0
      %p59 = por %p57, %p58
      %s61 = sadd.s32 %s60, 1
      %p64 = scmp.eq.s32.totalorder %s31, 1
      %p65 = scmp.ne.s32.totalorder %s60, %s62
      %p66 = scmp.eq.s32.totalorder %s31, 0
      %p67 = por %p65, %p66
      %p68 = scmp.ne.s32.totalorder %s60, %s62
      %p69 = scmp.eq.s32.totalorder %s36, 1
      %p70 = por %p68, %p69
      %p71 = scmp.ne.s32.totalorder %s62, %s63
      %p72 = scmp.eq.s32.totalorder %s36, 0
      %p73 = por %p71, %p72
      %p74 = scmp.ne.s32.totalorder %s62, %s63
      %p75 = scmp.eq.s32.totalorder %s37, 1
      %p76 = por %p74, %p75
      %p78 = scmp.ne.s32.totalorder %s63, %s77
      %p79 = scmp.eq.s32.totalorder %s37, 0
      %p80 = por %p78, %p79
      %s81 = ssub.s32 %s31, %s38
      %p82 = scmp.eq.s32.totalorder %s81, 0
      %s84 = sadd.s32 %s83, 1
      %s85 = scalar_select %p82, %s83, %s84
      %p88 = pneg %p82
      %p89 = scmp.eq.s32.totalorder %s31, 1
      %p90 = por %p88, %p89
      %p91 = scmp.ne.s32.totalorder %s83, %s86
      %p92 = scmp.eq.s32.totalorder %s31, 0
      %p93 = por %p91, %p92
      %p94 = scmp.ne.s32.totalorder %s83, %s86
      %p95 = scmp.eq.s32.totalorder %s36, 1
      %p96 = por %p94, %p95
      %p97 = scmp.ne.s32.totalorder %s86, %s87
      %p98 = scmp.eq.s32.totalorder %s36, 0
      %p99 = por %p97, %p98
      %p100 = scmp.ne.s32.totalorder %s86, %s87
      %p101 = scmp.eq.s32.totalorder %s37, 1
      %p102 = por %p100, %p101
      %p104 = scmp.ne.s32.totalorder %s87, %s103
      %p105 = scmp.eq.s32.totalorder %s37, 0
      %p106 = por %p104, %p105
      %s107 = ssub.s32 %s31, %s38
      %p108 = scmp.eq.s32.totalorder %s107, 0
      %s110 = sadd.s32 %s109, 1
      %s111 = scalar_select %p108, %s109, %s110
      %p114 = pneg %p108
      %p115 = scmp.eq.s32.totalorder %s31, 1
      %p116 = por %p114, %p115
      %p117 = scmp.ne.s32.totalorder %s109, %s112
      %p118 = scmp.eq.s32.totalorder %s31, 0
      %p119 = por %p117, %p118
      %p120 = scmp.ne.s32.totalorder %s109, %s112
      %p121 = scmp.eq.s32.totalorder %s36, 1
      %p122 = por %p120, %p121
      %p123 = scmp.ne.s32.totalorder %s112, %s113
      %p124 = scmp.eq.s32.totalorder %s36, 0
      %p125 = por %p123, %p124
      %p126 = scmp.ne.s32.totalorder %s112, %s113
      %p127 = scmp.eq.s32.totalorder %s37, 1
      %p128 = por %p126, %p127
      %p130 = scmp.ne.s32.totalorder %s113, %s129
      %p131 = scmp.eq.s32.totalorder %s37, 0
      %p132 = por %p130, %p131
      %s133 = ssub.s32 %s31, %s38
      %p134 = scmp.eq.s32.totalorder %s133, 0
      %s136 = sadd.s32 %s135, 1
      %s137 = scalar_select %p134, %s135, %s136
      %p140 = pneg %p134
      %p141 = scmp.eq.s32.totalorder %s31, 1
      %p142 = por %p140, %p141
      %p143 = scmp.ne.s32.totalorder %s135, %s138
      %p144 = scmp.eq.s32.totalorder %s31, 0
      %p145 = por %p143, %p144
      %p146 = scmp.ne.s32.totalorder %s135, %s138
      %p147 = scmp.eq.s32.totalorder %s36, 1
      %p148 = por %p146, %p147
      %p149 = scmp.ne.s32.totalorder %s138, %s139
      %p150 = scmp.eq.s32.totalorder %s36, 0
      %p151 = por %p149, %p150
      %p152 = scmp.ne.s32.totalorder %s138, %s139
      %p153 = scmp.eq.s32.totalorder %s37, 1
      %p154 = por %p152, %p153
      %p156 = scmp.ne.s32.totalorder %s139, %s155
      %p157 = scmp.eq.s32.totalorder %s37, 0
      %p158 = por %p156, %p157
      %s159 = ssub.s32 %s31, %s38
      %p160 = scmp.eq.s32.totalorder %s159, 0
      %s162 = sadd.s32 %s161, 1
      %s163 = scalar_select %p160, %s161, %s162
      %p166 = pneg %p160
      %p167 = scmp.eq.s32.totalorder %s31, 1
      %p168 = por %p166, %p167
      %p169 = scmp.ne.s32.totalorder %s161, %s164
      %p170 = scmp.eq.s32.totalorder %s31, 0
      %p171 = por %p169, %p170
      %p172 = scmp.ne.s32.totalorder %s161, %s164
      %p173 = scmp.eq.s32.totalorder %s36, 1
      %p174 = por %p172, %p173
      %p175 = scmp.ne.s32.totalorder %s164, %s165
      %p176 = scmp.eq.s32.totalorder %s36, 0
      %p177 = por %p175, %p176
      %p178 = scmp.ne.s32.totalorder %s164, %s165
      %p179 = scmp.eq.s32.totalorder %s37, 1
      %p180 = por %p178, %p179
      %p182 = scmp.ne.s32.totalorder %s165, %s181
      %p183 = scmp.eq.s32.totalorder %s37, 0
      %p184 = por %p182, %p183
      %s185 = ssub.s32 %s31, %s38
      %p186 = scmp.eq.s32.totalorder %s185, 0
      %s188 = sadd.s32 %s187, 1
      %s189 = scalar_select %p186, %s187, %s188
      %p192 = pneg %p186
      %p193 = scmp.eq.s32.totalorder %s31, 1
      %p194 = por %p192, %p193
      %p195 = scmp.ne.s32.totalorder %s187, %s190
      %p196 = scmp.eq.s32.totalorder %s31, 0
      %p197 = por %p195, %p196
      %p198 = scmp.ne.s32.totalorder %s187, %s190
      %p199 = scmp.eq.s32.totalorder %s36, 1
      %p200 = por %p198, %p199
      %p201 = scmp.ne.s32.totalorder %s190, %s191
      %p202 = scmp.eq.s32.totalorder %s36, 0
      %p203 = por %p201, %p202
      %p204 = scmp.ne.s32.totalorder %s190, %s191
      %p205 = scmp.eq.s32.totalorder %s37, 1
      %p206 = por %p204, %p205
      %p208 = scmp.ne.s32.totalorder %s191, %s207
      %p209 = scmp.eq.s32.totalorder %s37, 0
      %p210 = por %p208, %p209
      %s211 = ssub.s32 %s31, %s38
      %p212 = scmp.eq.s32.totalorder %s211, 0
      %s214 = sadd.s32 %s213, 1
      %s215 = scalar_select %p212, %s213, %s214
      %p218 = pneg %p212
      %p219 = scmp.eq.s32.totalorder %s31, 1
      %p220 = por %p218, %p219
      %p221 = scmp.ne.s32.totalorder %s213, %s216
      %p222 = scmp.eq.s32.totalorder %s31, 0
      %p223 = por %p221, %p222
      %p224 = scmp.ne.s32.totalorder %s213, %s216
      %p225 = scmp.eq.s32.totalorder %s36, 1
      %p226 = por %p224, %p225
      %p227 = scmp.ne.s32.totalorder %s216, %s217
      %p228 = scmp.eq.s32.totalorder %s36, 0
      %p229 = por %p227, %p228
      %p230 = scmp.ne.s32.totalorder %s216, %s217
      %p231 = scmp.eq.s32.totalorder %s37, 1
      %p232 = por %p230, %p231
      %p234 = scmp.ne.s32.totalorder %s217, %s233
      %p235 = scmp.eq.s32.totalorder %s37, 0
      %p236 = por %p234, %p235
      %s237 = ssub.s32 %s31, %s38
      %p238 = scmp.eq.s32.totalorder %s237, 0
      %s240 = sadd.s32 %s239, 1
      %s241 = scalar_select %p238, %s239, %s240
      %p244 = pneg %p238
      %p245 = scmp.eq.s32.totalorder %s31, 1
      %p246 = por %p244, %p245
      %p247 = scmp.ne.s32.totalorder %s239, %s242
      %p248 = scmp.eq.s32.totalorder %s31, 0
      %p249 = por %p247, %p248
      %p250 = scmp.ne.s32.totalorder %s239, %s242
      %p251 = scmp.eq.s32.totalorder %s36, 1
      %p252 = por %p250, %p251
      %p253 = scmp.ne.s32.totalorder %s242, %s243
      %p254 = scmp.eq.s32.totalorder %s36, 0
      %p255 = por %p253, %p254
      %p256 = scmp.ne.s32.totalorder %s242, %s243
      %p257 = scmp.eq.s32.totalorder %s37, 1
      %p258 = por %p256, %p257
      %p260 = scmp.ne.s32.totalorder %s243, %s259
      %p261 = scmp.eq.s32.totalorder %s37, 0
      %p262 = por %p260, %p261
      %s263 = ssub.s32 %s31, %s38
      %p264 = scmp.eq.s32.totalorder %s263, 0
      %s266 = sadd.s32 %s265, 1
      %s267 = scalar_select %p264, %s265, %s266
      %p270 = pneg %p264
      %p271 = scmp.eq.s32.totalorder %s31, 1
      %p272 = por %p270, %p271
      %p273 = scmp.ne.s32.totalorder %s265, %s268
      %p274 = scmp.eq.s32.totalorder %s31, 0
      %p275 = por %p273, %p274
      %p276 = scmp.ne.s32.totalorder %s265, %s268
      %p277 = scmp.eq.s32.totalorder %s36, 1
      %p278 = por %p276, %p277
      %p279 = scmp.ne.s32.totalorder %s268, %s269
      %p280 = scmp.eq.s32.totalorder %s36, 0
      %p281 = por %p279, %p280
      %p282 = scmp.ne.s32.totalorder %s268, %s269
      %p283 = scmp.eq.s32.totalorder %s37, 1
      %p284 = por %p282, %p283
      %p286 = scmp.ne.s32.totalorder %s269, %s285
      %p287 = scmp.eq.s32.totalorder %s37, 0
      %p288 = por %p286, %p287
      %s289 = ssub.s32 %s31, %s38
      %p290 = scmp.eq.s32.totalorder %s289, 0
      %s292 = sadd.s32 %s291, 1
      %s293 = scalar_select %p290, %s291, %s292
      %p296 = pneg %p290
      %p297 = scmp.eq.s32.totalorder %s31, 1
      %p298 = por %p296, %p297
      %p299 = scmp.ne.s32.totalorder %s291, %s294
      %p300 = scmp.eq.s32.totalorder %s31, 0
      %p301 = por %p299, %p300
      %p302 = scmp.ne.s32.totalorder %s291, %s294
      %p303 = scmp.eq.s32.totalorder %s36, 1
      %p304 = por %p302, %p303
      %p305 = scmp.ne.s32.totalorder %s294, %s295
      %p306 = scmp.eq.s32.totalorder %s36, 0
      %p307 = por %p305, %p306
      %p308 = scmp.ne.s32.totalorder %s294, %s295
      %p309 = scmp.eq.s32.totalorder %s37, 1
      %p310 = por %p308, %p309
      %p312 = scmp.ne.s32.totalorder %s295, %s311
      %p313 = scmp.eq.s32.totalorder %s37, 0
      %p314 = por %p312, %p313
      %s315 = ssub.s32 %s31, %s38
      %p316 = scmp.eq.s32.totalorder %s315, 0
      %s318 = sadd.s32 %s317, 1
      %s319 = scalar_select %p316, %s317, %s318
      %p322 = pneg %p316
      %p323 = scmp.eq.s32.totalorder %s31, 1
      %p324 = por %p322, %p323
      %p325 = scmp.ne.s32.totalorder %s317, %s320
      %p326 = scmp.eq.s32.totalorder %s31, 0
      %p327 = por %p325, %p326
      %p328 = scmp.ne.s32.totalorder %s317, %s320
      %p329 = scmp.eq.s32.totalorder %s36, 1
      %p330 = por %p328, %p329
      %p331 = scmp.ne.s32.totalorder %s320, %s321
      %p332 = scmp.eq.s32.totalorder %s36, 0
      %p333 = por %p331, %p332
      %p334 = scmp.ne.s32.totalorder %s320, %s321
      %p335 = scmp.eq.s32.totalorder %s37, 1
      %p336 = por %p334, %p335
      %p338 = scmp.ne.s32.totalorder %s321, %s337
      %p339 = scmp.eq.s32.totalorder %s37, 0
      %p340 = por %p338, %p339
      %s341 = ssub.s32 %s31, %s38
      %p342 = scmp.eq.s32.totalorder %s341, 0
      %s344 = sadd.s32 %s343, 1
      %s345 = scalar_select %p342, %s343, %s344
      %p348 = pneg %p342
      %p349 = scmp.eq.s32.totalorder %s31, 1
      %p350 = por %p348, %p349
      %p351 = scmp.ne.s32.totalorder %s343, %s346
      %p352 = scmp.eq.s32.totalorder %s31, 0
      %p353 = por %p351, %p352
      %p354 = scmp.ne.s32.totalorder %s343, %s346
      %p355 = scmp.eq.s32.totalorder %s36, 1
      %p356 = por %p354, %p355
      %p357 = scmp.ne.s32.totalorder %s346, %s347
      %p358 = scmp.eq.s32.totalorder %s36, 0
      %p359 = por %p357, %p358
      %p360 = scmp.ne.s32.totalorder %s346, %s347
      %p361 = scmp.eq.s32.totalorder %s37, 1
      %p362 = por %p360, %p361
      %p364 = scmp.ne.s32.totalorder %s347, %s363
      %p365 = scmp.eq.s32.totalorder %s37, 0
      %p366 = por %p364, %p365
      %s367 = ssub.s32 %s31, %s38
      %p368 = scmp.eq.s32.totalorder %s367, 0
      %s370 = sadd.s32 %s369, 1
      %s371 = scalar_select %p368, %s369, %s370
      %p374 = pneg %p368
      %p375 = scmp.eq.s32.totalorder %s31, 1
      %p376 = por %p374, %p375
      %p377 = scmp.ne.s32.totalorder %s369, %s372
      %p378 = scmp.eq.s32.totalorder %s31, 0
      %p379 = por %p377, %p378
      %p380 = scmp.ne.s32.totalorder %s369, %s372
      %p381 = scmp.eq.s32.totalorder %s36, 1
      %p382 = por %p380, %p381
      %p383 = scmp.ne.s32.totalorder %s372, %s373
      %p384 = scmp.eq.s32.totalorder %s36, 0
      %p385 = por %p383, %p384
      %p386 = scmp.ne.s32.totalorder %s372, %s373
      %p387 = scmp.eq.s32.totalorder %s37, 1
      %p388 = por %p386, %p387
      %p390 = scmp.ne.s32.totalorder %s373, %s389
      %p391 = scmp.eq.s32.totalorder %s37, 0
      %p392 = por %p390, %p391
      %s394 = sadd.s32 %s393, 1
      %p397 = scmp.eq.s32.totalorder %s31, 1
      %p398 = scmp.ne.s32.totalorder %s393, %s395
      %p399 = scmp.eq.s32.totalorder %s31, 0
      %p400 = por %p398, %p399
      %p401 = scmp.ne.s32.totalorder %s393, %s395
      %p402 = scmp.eq.s32.totalorder %s36, 1
      %p403 = por %p401, %p402
      %p404 = scmp.ne.s32.totalorder %s395, %s396
      %p405 = scmp.eq.s32.totalorder %s36, 0
      %p406 = por %p404, %p405
      %p407 = scmp.ne.s32.totalorder %s395, %s396
      %p408 = scmp.eq.s32.totalorder %s37, 1
      %p409 = por %p407, %p408
      %p411 = scmp.ne.s32.totalorder %s396, %s410
      %p412 = scmp.eq.s32.totalorder %s37, 0
      %p413 = por %p411, %p412
      %s415 = sadd.s32 %s414, 1
      %p418 = scmp.eq.s32.totalorder %s31, 1
      %p419 = scmp.ne.s32.totalorder %s414, %s416
      %p420 = scmp.eq.s32.totalorder %s31, 0
      %p421 = por %p419, %p420
      %p422 = scmp.ne.s32.totalorder %s414, %s416
      %p423 = scmp.eq.s32.totalorder %s36, 1
      %p424 = por %p422, %p423
      %p425 = scmp.ne.s32.totalorder %s416, %s417
      %p426 = scmp.eq.s32.totalorder %s36, 0
      %p427 = por %p425, %p426
      %p428 = scmp.ne.s32.totalorder %s416, %s417
      %p429 = scmp.eq.s32.totalorder %s37, 1
      %p430 = por %p428, %p429
      %p432 = scmp.ne.s32.totalorder %s417, %s431
      %p433 = scmp.eq.s32.totalorder %s37, 0
      %p434 = por %p432, %p433
      %s436 = sadd.s32 %s435, 1
      %p439 = scmp.eq.s32.totalorder %s31, 1
      %p440 = scmp.ne.s32.totalorder %s435, %s437
      %p441 = scmp.eq.s32.totalorder %s31, 0
      %p442 = por %p440, %p441
      %p443 = scmp.ne.s32.totalorder %s435, %s437
      %p444 = scmp.eq.s32.totalorder %s36, 1
      %p445 = por %p443, %p444
      %p446 = scmp.ne.s32.totalorder %s437, %s438
      %p447 = scmp.eq.s32.totalorder %s36, 0
      %p448 = por %p446, %p447
      %p449 = scmp.ne.s32.totalorder %s437, %s438
      %p450 = scmp.eq.s32.totalorder %s37, 1
      %p451 = por %p449, %p450
      %p453 = scmp.ne.s32.totalorder %s438, %s452
      %p454 = scmp.eq.s32.totalorder %s37, 0
      %p455 = por %p453, %p454
      %s457 = sadd.s32 %s456, 1
      %p460 = scmp.eq.s32.totalorder %s31, 1
      %p461 = scmp.ne.s32.totalorder %s456, %s458
      %p462 = scmp.eq.s32.totalorder %s31, 0
      %p463 = por %p461, %p462
      %p464 = scmp.ne.s32.totalorder %s456, %s458
      %p465 = scmp.eq.s32.totalorder %s36, 1
      %p466 = por %p464, %p465
      %p467 = scmp.ne.s32.totalorder %s458, %s459
      %p468 = scmp.eq.s32.totalorder %s36, 0
      %p469 = por %p467, %p468
      %p470 = scmp.ne.s32.totalorder %s458, %s459
      %p471 = scmp.eq.s32.totalorder %s37, 1
      %p472 = por %p470, %p471
      %p474 = scmp.ne.s32.totalorder %s459, %s473
      %p475 = scmp.eq.s32.totalorder %s37, 0
      %p476 = por %p474, %p475
      %p477 = scmp.le.s32.totalorder 1, %s31
      %p478 = scmp.lt.s32.totalorder %s31, 3
      %p479 = pnand %p477, %p478
      %p480 = pneg %p479
      // Predicated region
      $region9: #{_lambda_.1} parent=5 // pred_check
        _
      $region10: #{_lambda_.1} parent=5 // pred_check_branch
        %482 = sbr.rel (%p479) target = $region12
      $region11: #{_lambda_.1} parent=5 // pred_region
        %s483 = ssub.s32 %s31, 1
        // Predicated region
        $region13: #{_lambda_.1} parent=11 // pred_check
          %p484 = pneg %p52
        $region14: #{_lambda_.1} parent=11 // pred_check_branch
          %486 = sbr.rel (%p484) target = $region16
        $region15: #{_lambda_.1} parent=11 // pred_region
          _
        $region16: #{_lambda_.1} parent=11 // pred_fallthru
          _
        // Predicated region
        $region17: #{_lambda_.1} parent=11 // pred_check
          %p487 = pneg %p73
        $region18: #{_lambda_.1} parent=11 // pred_check_branch
          %489 = sbr.rel (%p487) target = $region20
        $region19: #{_lambda_.1} parent=11 // pred_region
          _
        $region20: #{_lambda_.1} parent=11 // pred_fallthru
          _
        // Predicated region
        $region21: #{_lambda_.1} parent=11 // pred_check
          %p490 = pneg %p406
        $region22: #{_lambda_.1} parent=11 // pred_check_branch
          %492 = sbr.rel (%p490) target = $region24
        $region23: #{_lambda_.1} parent=11 // pred_region
          _
        $region24: #{_lambda_.1} parent=11 // pred_fallthru
          _
        // Predicated region
        $region25: #{_lambda_.1} parent=11 // pred_check
          %p493 = pneg %p427
        $region26: #{_lambda_.1} parent=11 // pred_check_branch
          %495 = sbr.rel (%p493) target = $region28
        $region27: #{_lambda_.1} parent=11 // pred_region
          _
        $region28: #{_lambda_.1} parent=11 // pred_fallthru
          _
        // Predicated region
        $region29: #{_lambda_.1} parent=11 // pred_check
          %p496 = pneg %p448
        $region30: #{_lambda_.1} parent=11 // pred_check_branch
          %498 = sbr.rel (%p496) target = $region32
        $region31: #{_lambda_.1} parent=11 // pred_region
          _
        $region32: #{_lambda_.1} parent=11 // pred_fallthru
          _
      $region12: #{_lambda_.1} parent=5 // pred_fallthru
        _
      %p499 = scmp.lt.s32.totalorder %s31, 2
      // Predicated region
      $region33: #{_lambda_.1} parent=5 // pred_check
        %p500 = pneg %p499
      $region34: #{_lambda_.1} parent=5 // pred_check_branch
        %502 = sbr.rel (%p500) target = $region36
      $region35: #{_lambda_.1} parent=5 // pred_region
        // Predicated region
        $region37: #{_lambda_.1} parent=35 // pred_check
          %p503 = pneg %p93
        $region38: #{_lambda_.1} parent=35 // pred_check_branch
          %505 = sbr.rel (%p503) target = $region40
        $region39: #{_lambda_.1} parent=35 // pred_region
          %p506 = scmp.lt.s32.totalorder %s31, 1
          %s507 = scalar_select %p506, %s31, 1
          %s508 = scalar_lea.vmem %s3, %s507
        $region40: #{_lambda_.1} parent=35 // pred_fallthru
          _
        // Predicated region
        $region41: #{_lambda_.1} parent=35 // pred_check
          %p509 = pneg %p119
        $region42: #{_lambda_.1} parent=35 // pred_check_branch
          %511 = sbr.rel (%p509) target = $region44
        $region43: #{_lambda_.1} parent=35 // pred_region
          %p512 = scmp.lt.s32.totalorder %s31, 1
          %s513 = scalar_select %p512, %s31, 1
          %s514 = scalar_lea.vmem %s4, %s513
        $region44: #{_lambda_.1} parent=35 // pred_fallthru
          _
        // Predicated region
        $region45: #{_lambda_.1} parent=35 // pred_check
          %p515 = pneg %p145
        $region46: #{_lambda_.1} parent=35 // pred_check_branch
          %517 = sbr.rel (%p515) target = $region48
        $region47: #{_lambda_.1} parent=35 // pred_region
          %p518 = scmp.lt.s32.totalorder %s31, 1
          %s519 = scalar_select %p518, %s31, 1
          %s520 = smul.addr %s519, 48
          %s521 = smul.addr %s520, 4
          %s522 = scalar_lea.vmem %s5, %s521
        $region48: #{_lambda_.1} parent=35 // pred_fallthru
          _
        // Predicated region
        $region49: #{_lambda_.1} parent=35 // pred_check
          %p523 = pneg %p171
        $region50: #{_lambda_.1} parent=35 // pred_check_branch
          %525 = sbr.rel (%p523) target = $region52
        $region51: #{_lambda_.1} parent=35 // pred_region
          %p526 = scmp.lt.s32.totalorder %s31, 1
          %s527 = scalar_select %p526, %s31, 1
          %s528 = smul.addr %s527, 3
          %s529 = scalar_lea.vmem %s6, %s528
        $region52: #{_lambda_.1} parent=35 // pred_fallthru
          _
        // Predicated region
        $region53: #{_lambda_.1} parent=35 // pred_check
          %p530 = pneg %p197
        $region54: #{_lambda_.1} parent=35 // pred_check_branch
          %532 = sbr.rel (%p530) target = $region56
        $region55: #{_lambda_.1} parent=35 // pred_region
          %p533 = scmp.lt.s32.totalorder %s31, 1
          %s534 = scalar_select %p533, %s31, 1
          %s535 = smul.addr %s534, 16
          %s536 = smul.addr %s535, 4
          %s537 = scalar_lea.vmem %s7, %s536
        $region56: #{_lambda_.1} parent=35 // pred_fallthru
          _
        // Predicated region
        $region57: #{_lambda_.1} parent=35 // pred_check
          %p538 = pneg %p223
        $region58: #{_lambda_.1} parent=35 // pred_check_branch
          %540 = sbr.rel (%p538) target = $region60
        $region59: #{_lambda_.1} parent=35 // pred_region
          %p541 = scmp.lt.s32.totalorder %s31, 1
          %s542 = scalar_select %p541, %s31, 1
          %s543 = scalar_lea.vmem %s8, %s542
        $region60: #{_lambda_.1} parent=35 // pred_fallthru
          _
        // Predicated region
        $region61: #{_lambda_.1} parent=35 // pred_check
          %p544 = pneg %p249
        $region62: #{_lambda_.1} parent=35 // pred_check_branch
          %546 = sbr.rel (%p544) target = $region64
        $region63: #{_lambda_.1} parent=35 // pred_region
          %p547 = scmp.lt.s32.totalorder %s31, 1
          %s548 = scalar_select %p547, %s31, 1
          %s549 = scalar_lea.vmem %s9, %s548
        $region64: #{_lambda_.1} parent=35 // pred_fallthru
          _
        // Predicated region
        $region65: #{_lambda_.1} parent=35 // pred_check
          %p550 = pneg %p275
        $region66: #{_lambda_.1} parent=35 // pred_check_branch
          %552 = sbr.rel (%p550) target = $region68
        $region67: #{_lambda_.1} parent=35 // pred_region
          %p553 = scmp.lt.s32.totalorder %s31, 1
          %s554 = scalar_select %p553, %s31, 1
          %s555 = scalar_lea.vmem %s10, %s554
        $region68: #{_lambda_.1} parent=35 // pred_fallthru
          _
        // Predicated region
        $region69: #{_lambda_.1} parent=35 // pred_check
          %p556 = pneg %p301
        $region70: #{_lambda_.1} parent=35 // pred_check_branch
          %558 = sbr.rel (%p556) target = $region72
        $region71: #{_lambda_.1} parent=35 // pred_region
          %p559 = scmp.lt.s32.totalorder %s31, 1
          %s560 = scalar_select %p559, %s31, 1
          %s561 = smul.addr %s560, 64
          %s562 = smul.addr %s561, 4
          %s563 = scalar_lea.vmem %s11, %s562
        $region72: #{_lambda_.1} parent=35 // pred_fallthru
          _
        // Predicated region
        $region73: #{_lambda_.1} parent=35 // pred_check
          %p564 = pneg %p327
        $region74: #{_lambda_.1} parent=35 // pred_check_branch
          %566 = sbr.rel (%p564) target = $region76
        $region75: #{_lambda_.1} parent=35 // pred_region
          %p567 = scmp.lt.s32.totalorder %s31, 1
          %s568 = scalar_select %p567, %s31, 1
          %s569 = smul.addr %s568, 4
          %s570 = scalar_lea.vmem %s12, %s569
        $region76: #{_lambda_.1} parent=35 // pred_fallthru
          _
        // Predicated region
        $region77: #{_lambda_.1} parent=35 // pred_check
          %p571 = pneg %p353
        $region78: #{_lambda_.1} parent=35 // pred_check_branch
          %573 = sbr.rel (%p571) target = $region80
        $region79: #{_lambda_.1} parent=35 // pred_region
          %p574 = scmp.lt.s32.totalorder %s31, 1
          %s575 = scalar_select %p574, %s31, 1
          %s576 = smul.addr %s575, 64
          %s577 = smul.addr %s576, 4
          %s578 = scalar_lea.vmem %s13, %s577
        $region80: #{_lambda_.1} parent=35 // pred_fallthru
          _
        // Predicated region
        $region81: #{_lambda_.1} parent=35 // pred_check
          %p579 = pneg %p379
        $region82: #{_lambda_.1} parent=35 // pred_check_branch
          %581 = sbr.rel (%p579) target = $region84
        $region83: #{_lambda_.1} parent=35 // pred_region
          %p582 = scmp.lt.s32.totalorder %s31, 1
          %s583 = scalar_select %p582, %s31, 1
          %s584 = scalar_lea.vmem %s14, %s583
        $region84: #{_lambda_.1} parent=35 // pred_fallthru
          _
      $region36: #{_lambda_.1} parent=5 // pred_fallthru
        _
      %p585 = scmp.le.s32.totalorder 1, %s31
      %p586 = scmp.lt.s32.totalorder %s31, 3
      %p587 = pnand %p585, %p586
      %p588 = pneg %p587
      // Predicated region
      $region85: #{_lambda_.1} parent=5 // pred_check
        _
      $region86: #{_lambda_.1} parent=5 // pred_check_branch
        %590 = sbr.rel (%p587) target = $region88
      $region87: #{_lambda_.1} parent=5 // pred_region
        %s591 = ssub.s32 %s31, 1
        %p592 = pneg %p52
        %p593 = pneg %p49
        %p594 = pneg %p73
        %p595 = pneg %p70
        %p596 = scmp.lt.s32.totalorder %s36, 1
        %s597 = scalar_select %p596, %s36, 1
        %s598 = scalar_lea.vmem %s3, %s597
        %p599 = pneg %p99
        %p600 = pneg %p96
        %p601 = scmp.lt.s32.totalorder %s36, 1
        %s602 = scalar_select %p601, %s36, 1
        %s603 = scalar_lea.vmem %s4, %s602
        %p604 = pneg %p125
        %p605 = pneg %p122
        %p606 = scmp.lt.s32.totalorder %s36, 1
        %s607 = scalar_select %p606, %s36, 1
        %s608 = smul.addr %s607, 48
        %s609 = smul.addr %s608, 4
        %s610 = scalar_lea.vmem %s5, %s609
        %p611 = pneg %p151
        %p612 = pneg %p148
        %p613 = scmp.lt.s32.totalorder %s36, 1
        %s614 = scalar_select %p613, %s36, 1
        %s615 = smul.addr %s614, 3
        %s616 = scalar_lea.vmem %s6, %s615
        %p617 = pneg %p177
        %p618 = pneg %p174
        %p619 = scmp.lt.s32.totalorder %s36, 1
        %s620 = scalar_select %p619, %s36, 1
        %s621 = smul.addr %s620, 16
        %s622 = smul.addr %s621, 4
        %s623 = scalar_lea.vmem %s7, %s622
        %p624 = pneg %p203
        %p625 = pneg %p200
        %p626 = scmp.lt.s32.totalorder %s36, 1
        %s627 = scalar_select %p626, %s36, 1
        %s628 = scalar_lea.vmem %s8, %s627
        %p629 = pneg %p229
        %p630 = pneg %p226
        %p631 = scmp.lt.s32.totalorder %s36, 1
        %s632 = scalar_select %p631, %s36, 1
        %s633 = scalar_lea.vmem %s9, %s632
        %p634 = pneg %p255
        %p635 = pneg %p252
        %p636 = scmp.lt.s32.totalorder %s36, 1
        %s637 = scalar_select %p636, %s36, 1
        %s638 = scalar_lea.vmem %s10, %s637
        %p639 = pneg %p281
        %p640 = pneg %p278
        %p641 = scmp.lt.s32.totalorder %s36, 1
        %s642 = scalar_select %p641, %s36, 1
        %s643 = smul.addr %s642, 64
        %s644 = smul.addr %s643, 4
        %s645 = scalar_lea.vmem %s11, %s644
        %p646 = pneg %p307
        %p647 = pneg %p304
        %p648 = scmp.lt.s32.totalorder %s36, 1
        %s649 = scalar_select %p648, %s36, 1
        %s650 = smul.addr %s649, 4
        %s651 = scalar_lea.vmem %s12, %s650
        %p652 = pneg %p333
        %p653 = pneg %p330
        %p654 = scmp.lt.s32.totalorder %s36, 1
        %s655 = scalar_select %p654, %s36, 1
        %s656 = smul.addr %s655, 64
        %s657 = smul.addr %s656, 4
        %s658 = scalar_lea.vmem %s13, %s657
        %p659 = pneg %p359
        %p660 = pneg %p356
        %p661 = scmp.lt.s32.totalorder %s36, 1
        %s662 = scalar_select %p661, %s36, 1
        %s663 = scalar_lea.vmem %s14, %s662
        %p664 = pneg %p385
        %p665 = pneg %p382
        %p666 = pneg %p406
        %p667 = pneg %p403
        %p668 = pneg %p427
        %p669 = pneg %p424
        %p670 = pneg %p448
        %p671 = pneg %p445
        %p672 = pneg %p469
        %p673 = pneg %p466
        %p674 = scmp.lt.s32.totalorder %s36, 1
        %s675 = scalar_select %p674, %s36, 1
        %s676 = scalar_lea.vmem %s3, %s675
        %p677 = scmp.lt.s32.totalorder %s36, 1
        %s678 = scalar_select %p677, %s36, 1
        %s679 = scalar_lea.vmem %s4, %s678
        %p680 = scmp.lt.s32.totalorder %s36, 1
        %s681 = scalar_select %p680, %s36, 1
        %s682 = smul.addr %s681, 48
        %s683 = smul.addr %s682, 4
        %s684 = scalar_lea.vmem %s5, %s683
        %p685 = scmp.lt.s32.totalorder %s36, 1
        %s686 = scalar_select %p685, %s36, 1
        %s687 = smul.addr %s686, 3
        %s688 = scalar_lea.vmem %s6, %s687
        %p689 = scmp.lt.s32.totalorder %s36, 1
        %s690 = scalar_select %p689, %s36, 1
        %s691 = smul.addr %s690, 16
        %s692 = smul.addr %s691, 4
        %s693 = scalar_lea.vmem %s7, %s692
        %p694 = scmp.lt.s32.totalorder %s36, 1
        %s695 = scalar_select %p694, %s36, 1
        %s696 = scalar_lea.vmem %s8, %s695
        %p697 = scmp.lt.s32.totalorder %s36, 1
        %s698 = scalar_select %p697, %s36, 1
        %s699 = scalar_lea.vmem %s9, %s698
        %p700 = scmp.lt.s32.totalorder %s36, 1
        %s701 = scalar_select %p700, %s36, 1
        %s702 = scalar_lea.vmem %s10, %s701
        %p703 = scmp.lt.s32.totalorder %s36, 1
        %s704 = scalar_select %p703, %s36, 1
        %s705 = smul.addr %s704, 64
        %s706 = smul.addr %s705, 4
        %s707 = scalar_lea.vmem %s11, %s706
        %p708 = scmp.lt.s32.totalorder %s36, 1
        %s709 = scalar_select %p708, %s36, 1
        %s710 = smul.addr %s709, 4
        %s711 = scalar_lea.vmem %s12, %s710
        %p712 = scmp.lt.s32.totalorder %s36, 1
        %s713 = scalar_select %p712, %s36, 1
        %s714 = smul.addr %s713, 64
        %s715 = smul.addr %s714, 4
        %s716 = scalar_lea.vmem %s13, %s715
        %p717 = scmp.lt.s32.totalorder %s36, 1
        %s718 = scalar_select %p717, %s36, 1
        %s719 = scalar_lea.vmem %s14, %s718
        %p721 = scmp.eq.s32.totalorder %s36, 0
        // Predicated region
        $region89: #{_lambda_.1} parent=87 // pred_check
          %p722 = pneg %p721
        $region90: #{_lambda_.1} parent=87 // pred_check_branch
          %724 = sbr.rel (%p722) target = $region92
        $region91: #{_lambda_.1} parent=87 // pred_region
          %v725 = vld [vmem:[%s1] sm:$0xff]
          %v726 = vld [vmem:[%s1 + $0x8] sm:$0xff]
          %v727 = vld [vmem:[%s1 + $0x10] sm:$0xff]
          %v728 = vld [vmem:[%s1 + $0x18] sm:$0xff]
          %v729 = vld [vmem:[%s1 + $0x20] sm:$0xff]
          %v730 = vld [vmem:[%s1 + $0x28] sm:$0xff]
          %v731 = vld [vmem:[%s1 + $0x30] sm:$0xff]
          %v732 = vld [vmem:[%s1 + $0x38] sm:$0xff]
          %v733 = vld [vmem:[%s2] sm:$0xff]
          %v734 = vld [vmem:[%s2 + $0x8] sm:$0xff]
          %v735 = vadd.f32 %v725, %v733
          %v736 = vadd.f32 %v726, %v734
          %v737 = vadd.f32 %v727, %v733
          %v738 = vadd.f32 %v728, %v734
          %v739 = vadd.f32 %v729, %v733
          %v740 = vadd.f32 %v730, %v734
          %v741 = vadd.f32 %v731, %v733
          %v742 = vadd.f32 %v732, %v734
          %743 = vst [vmem:[#allocation2] sm:$0xff] %v735
          %744 = vst [vmem:[#allocation2 + $0x8] sm:$0xff] %v736
          %745 = vst [vmem:[#allocation2 + $0x10] sm:$0xff] %v737
          %746 = vst [vmem:[#allocation2 + $0x18] sm:$0xff] %v738
          %747 = vst [vmem:[#allocation2 + $0x20] sm:$0xff] %v739
          %748 = vst [vmem:[#allocation2 + $0x28] sm:$0xff] %v740
          %749 = vst [vmem:[#allocation2 + $0x30] sm:$0xff] %v741
          %750 = vst [vmem:[#allocation2 + $0x38] sm:$0xff] %v742
        $region92: #{_lambda_.1} parent=87 // pred_fallthru
          _
        %v751 = vld [vmem:[#allocation2] sm:$0xff]
        %v752 = vld [vmem:[#allocation2 + $0x8] sm:$0xff]
        %v753 = vld [vmem:[#allocation2 + $0x10] sm:$0xff]
        %v754 = vld [vmem:[#allocation2 + $0x18] sm:$0xff]
        %v755 = vld [vmem:[#allocation2 + $0x20] sm:$0xff]
        %v756 = vld [vmem:[#allocation2 + $0x28] sm:$0xff]
        %v757 = vld [vmem:[#allocation2 + $0x30] sm:$0xff]
        %v758 = vld [vmem:[#allocation2 + $0x38] sm:$0xff]
        %v759 = vld [vmem:[%s676] sm:$0x1]
        %v760 = vld [vmem:[%s679] sm:$0x1]
        %761 = vadd.xlane.f32.xlu0 %v751
        %v762 = vpop.xlane.xlu0 %761
        %763 = vadd.xlane.f32.xlu0 %v752
        %v764 = vpop.xlane.xlu0 %763
        %765 = vadd.xlane.f32.xlu0 %v753
        %v766 = vpop.xlane.xlu0 %765
        %767 = vadd.xlane.f32.xlu0 %v754
        %v768 = vpop.xlane.xlu0 %767
        %769 = vadd.xlane.f32.xlu0 %v755
        %v770 = vpop.xlane.xlu0 %769
        %771 = vadd.xlane.f32.xlu0 %v756
        %v772 = vpop.xlane.xlu0 %771
        %773 = vadd.xlane.f32.xlu0 %v757
        %v774 = vpop.xlane.xlu0 %773
        %775 = vadd.xlane.f32.xlu0 %v758
        %v776 = vpop.xlane.xlu0 %775
        %v777 = vrcp.pop 128.0
        %v778 = vmul.f32 %v762, %v777
        %v779 = vmul.f32 %v764, %v777
        %v780 = vmul.f32 %v766, %v777
        %v781 = vmul.f32 %v768, %v777
        %v782 = vmul.f32 %v770, %v777
        %v783 = vmul.f32 %v772, %v777
        %v784 = vmul.f32 %v774, %v777
        %v785 = vmul.f32 %v776, %v777
        %v786 = vsub.f32 %v751, %v778
        %v787 = vsub.f32 %v752, %v779
        %v788 = vsub.f32 %v753, %v780
        %v789 = vsub.f32 %v754, %v781
        %v790 = vsub.f32 %v755, %v782
        %v791 = vsub.f32 %v756, %v783
        %v792 = vsub.f32 %v757, %v784
        %v793 = vsub.f32 %v758, %v785
        %v794 = vmul.f32 %v786, %v786
        %v795 = vmul.f32 %v787, %v787
        %v796 = vmul.f32 %v788, %v788
        %v797 = vmul.f32 %v789, %v789
        %v798 = vmul.f32 %v790, %v790
        %v799 = vmul.f32 %v791, %v791
        %v800 = vmul.f32 %v792, %v792
        %v801 = vmul.f32 %v793, %v793
        %802 = vadd.xlane.f32.xlu0 %v794
        %v803 = vpop.xlane.xlu0 %802
        %804 = vadd.xlane.f32.xlu0 %v795
        %v805 = vpop.xlane.xlu0 %804
        %806 = vadd.xlane.f32.xlu0 %v796
        %v807 = vpop.xlane.xlu0 %806
        %808 = vadd.xlane.f32.xlu0 %v797
        %v809 = vpop.xlane.xlu0 %808
        %810 = vadd.xlane.f32.xlu0 %v798
        %v811 = vpop.xlane.xlu0 %810
        %812 = vadd.xlane.f32.xlu0 %v799
        %v813 = vpop.xlane.xlu0 %812
        %814 = vadd.xlane.f32.xlu0 %v800
        %v815 = vpop.xlane.xlu0 %814
        %816 = vadd.xlane.f32.xlu0 %v801
        %v817 = vpop.xlane.xlu0 %816
        %v818 = vmul.f32 %v803, %v777
        %v819 = vmul.f32 %v805, %v777
        %v820 = vmul.f32 %v807, %v777
        %v821 = vmul.f32 %v809, %v777
        %v822 = vmul.f32 %v811, %v777
        %v823 = vmul.f32 %v813, %v777
        %v824 = vmul.f32 %v815, %v777
        %v825 = vmul.f32 %v817, %v777
        %v826 = vadd.f32 %v818, 1e-05
        %v827 = vadd.f32 %v819, 1e-05
        %v828 = vadd.f32 %v820, 1e-05
        %v829 = vadd.f32 %v821, 1e-05
        %v830 = vadd.f32 %v822, 1e-05
        %v831 = vadd.f32 %v823, 1e-05
        %v832 = vadd.f32 %v824, 1e-05
        %v833 = vadd.f32 %v825, 1e-05
        %v834 = vrsqrt.pop %v826
        %v835 = vrsqrt.pop %v827
        %v836 = vrsqrt.pop %v828
        %v837 = vrsqrt.pop %v829
        %v838 = vrsqrt.pop %v830
        %v839 = vrsqrt.pop %v831
        %v840 = vrsqrt.pop %v832
        %v841 = vrsqrt.pop %v833
        %v842 = vmul.f32 %v786, %v834
        %v843 = vmul.f32 %v787, %v835
        %v844 = vmul.f32 %v788, %v836
        %v845 = vmul.f32 %v789, %v837
        %v846 = vmul.f32 %v790, %v838
        %v847 = vmul.f32 %v791, %v839
        %v848 = vmul.f32 %v792, %v840
        %v849 = vmul.f32 %v793, %v841
        %v851 = vlaneseq
        %v852 = vshrl.u32 %v851, 7
        %v853 = vsub.s32 0, %v852
        %v854 = vrot.slane %v759, %v853
        %v856 = vmul.f32 %v842, %v854
        %v857 = vmul.f32 %v843, %v854
        %v858 = vmul.f32 %v844, %v854
        %v859 = vmul.f32 %v845, %v854
        %v860 = vmul.f32 %v846, %v854
        %v861 = vmul.f32 %v847, %v854
        %v862 = vmul.f32 %v848, %v854
        %v863 = vmul.f32 %v849, %v854
        %v865 = vlaneseq
        %v866 = vshrl.u32 %v865, 7
        %v867 = vsub.s32 0, %v866
        %v868 = vrot.slane %v760, %v867
        %v870 = vadd.f32 %v856, %v868
        %v871 = vadd.f32 %v857, %v868
        %v872 = vadd.f32 %v858, %v868
        %v873 = vadd.f32 %v859, %v868
        %v874 = vadd.f32 %v860, %v868
        %v875 = vadd.f32 %v861, %v868
        %v876 = vadd.f32 %v862, %v868
        %v877 = vadd.f32 %v863, %v868
        %v878 = vld [vmem:[%s684] sm:$0xff]
        %v879 = vld [vmem:[%s684 + $0x8] sm:$0xf]
        %v880 = vld [vmem:[%s684 + $0xc] sm:$0xff]
        %v881 = vld [vmem:[%s684 + $0x14] sm:$0xf]
        %v882 = vld [vmem:[%s684 + $0x18] sm:$0xff]
        %v883 = vld [vmem:[%s684 + $0x20] sm:$0xf]
        %v884 = vld [vmem:[%s684 + $0x24] sm:$0xff]
        %v885 = vld [vmem:[%s684 + $0x2c] sm:$0xf]
        %v886 = vld [vmem:[%s684 + $0x30] sm:$0xff]
        %v887 = vld [vmem:[%s684 + $0x38] sm:$0xf]
        %v888 = vld [vmem:[%s684 + $0x3c] sm:$0xff]
        %v889 = vld [vmem:[%s684 + $0x44] sm:$0xf]
        %v890 = vld [vmem:[%s684 + $0x48] sm:$0xff]
        %v891 = vld [vmem:[%s684 + $0x50] sm:$0xf]
        %v892 = vld [vmem:[%s684 + $0x54] sm:$0xff]
        %v893 = vld [vmem:[%s684 + $0x5c] sm:$0xf]
        %v894 = vld [vmem:[%s684 + $0x60] sm:$0xff]
        %v895 = vld [vmem:[%s684 + $0x68] sm:$0xf]
        %v896 = vld [vmem:[%s684 + $0x6c] sm:$0xff]
        %v897 = vld [vmem:[%s684 + $0x74] sm:$0xf]
        %v898 = vld [vmem:[%s684 + $0x78] sm:$0xff]
        %v899 = vld [vmem:[%s684 + $0x80] sm:$0xf]
        %v900 = vld [vmem:[%s684 + $0x84] sm:$0xff]
        %v901 = vld [vmem:[%s684 + $0x8c] sm:$0xf]
        %v902 = vld [vmem:[%s684 + $0x90] sm:$0xff]
        %v903 = vld [vmem:[%s684 + $0x98] sm:$0xf]
        %v904 = vld [vmem:[%s684 + $0x9c] sm:$0xff]
        %v905 = vld [vmem:[%s684 + $0xa4] sm:$0xf]
        %v906 = vld [vmem:[%s684 + $0xa8] sm:$0xff]
        %v907 = vld [vmem:[%s684 + $0xb0] sm:$0xf]
        %v908 = vld [vmem:[%s684 + $0xb4] sm:$0xff]
        %v909 = vld [vmem:[%s684 + $0xbc] sm:$0xf]
        %v910 = vpack.c.bf16 %v871, %v870
        %v911 = vpack.c.bf16 %v873, %v872
        %v912 = vpack.c.bf16 %v875, %v874
        %v913 = vpack.c.bf16 %v877, %v876
        %v914 = vld [vmem:[%s688] sm:$0x7]
        %v916 = vlaneseq
        %v917 = vshrl.u32 %v916, 7
        %v918 = vsub.s32 0, %v917
        %v919 = vrot.slane %v914, %v918
        %v920 = vlaneseq
        %v921 = vshrl.u32 %v920, 7
        %v922 = vsub.s32 1, %v921
        %v923 = vrot.slane %v914, %v922
        %v924 = vlaneseq
        %v925 = vshrl.u32 %v924, 7
        %v926 = vsub.s32 2, %v925
        %v927 = vrot.slane %v914, %v926
        %v963 = vunpack.c.l.b16 %v878
        %v964 = vunpack.c.h.b16 %v878
        %v965 = vunpack.c.l.b16 %v879
        %v966 = vunpack.c.l.b16 %v880
        %v967 = vunpack.c.h.b16 %v880
        %v968 = vunpack.c.l.b16 %v881
        %v969 = vunpack.c.l.b16 %v882
        %v970 = vunpack.c.h.b16 %v882
        %v971 = vunpack.c.l.b16 %v883
        %v972 = vunpack.c.l.b16 %v884
        %v973 = vunpack.c.h.b16 %v884
        %v974 = vunpack.c.l.b16 %v885
        %v975 = vunpack.c.l.b16 %v886
        %v976 = vunpack.c.h.b16 %v886
        %v977 = vunpack.c.l.b16 %v887
        %v978 = vunpack.c.l.b16 %v888
        %v979 = vunpack.c.h.b16 %v888
        %v980 = vunpack.c.l.b16 %v889
        %v981 = vunpack.c.l.b16 %v890
        %v982 = vunpack.c.h.b16 %v890
        %v983 = vunpack.c.l.b16 %v891
        %v984 = vunpack.c.l.b16 %v892
        %v985 = vunpack.c.h.b16 %v892
        %v986 = vunpack.c.l.b16 %v893
        %v987 = vunpack.c.l.b16 %v894
        %v988 = vunpack.c.h.b16 %v894
        %v989 = vunpack.c.l.b16 %v895
        %v990 = vunpack.c.l.b16 %v896
        %v991 = vunpack.c.h.b16 %v896
        %v992 = vunpack.c.l.b16 %v897
        %v993 = vunpack.c.l.b16 %v898
        %v994 = vunpack.c.h.b16 %v898
        %v995 = vunpack.c.l.b16 %v899
        %v996 = vunpack.c.l.b16 %v900
        %v997 = vunpack.c.h.b16 %v900
        %v998 = vunpack.c.l.b16 %v901
        %v999 = vunpack.c.l.b16 %v902
        %v1000 = vunpack.c.h.b16 %v902
        %v1001 = vunpack.c.l.b16 %v903
        %v1002 = vunpack.c.l.b16 %v904
        %v1003 = vunpack.c.h.b16 %v904
        %v1004 = vunpack.c.l.b16 %v905
        %v1005 = vunpack.c.l.b16 %v906
        %v1006 = vunpack.c.h.b16 %v906
        %v1007 = vunpack.c.l.b16 %v907
        %v1008 = vunpack.c.l.b16 %v908
        %v1009 = vunpack.c.h.b16 %v908
        %v1010 = vunpack.c.l.b16 %v909
        %v1011 = vpack.c.b16 %v966, %v963
        %v1012 = vpack.c.b16 %v967, %v964
        %v1013 = vpack.c.b16 %v968, %v965
        %v1014 = vpack.c.b16 %v972, %v969
        %v1015 = vpack.c.b16 %v973, %v970
        %v1016 = vpack.c.b16 %v974, %v971
        %v1017 = vpack.c.b16 %v978, %v975
        %v1018 = vpack.c.b16 %v979, %v976
        %v1019 = vpack.c.b16 %v980, %v977
        %v1020 = vpack.c.b16 %v984, %v981
        %v1021 = vpack.c.b16 %v985, %v982
        %v1022 = vpack.c.b16 %v986, %v983
        %v1023 = vpack.c.b16 %v990, %v987
        %v1024 = vpack.c.b16 %v991, %v988
        %v1025 = vpack.c.b16 %v992, %v989
        %v1026 = vpack.c.b16 %v996, %v993
        %v1027 = vpack.c.b16 %v997, %v994
        %v1028 = vpack.c.b16 %v998, %v995
        %v1029 = vpack.c.b16 %v1002, %v999
        %v1030 = vpack.c.b16 %v1003, %v1000
        %v1031 = vpack.c.b16 %v1004, %v1001
        %v1032 = vpack.c.b16 %v1008, %v1005
        %v1033 = vpack.c.b16 %v1009, %v1006
        %v1034 = vpack.c.b16 %v1010, %v1007
        %1059 = vmatprep.subr.bf16.mxu0 %v1012
        %1060 = vmatpush1.bf16.msra.mxu0 %v1011
        %1061 = vmatprep.subr.bf16.mxu0 %v1015
        %1062 = vmatpush1.bf16.msra.mxu0 %v1014
        %1063 = vmatprep.subr.bf16.mxu0 %v1018
        %1064 = vmatpush1.bf16.msra.mxu0 %v1017
        %1065 = vmatprep.subr.bf16.mxu0 %v1021
        %1066 = vmatpush1.bf16.msra.mxu0 %v1020
        %1067 = vmatprep.subr.bf16.mxu0 %v1024
        %1068 = vmatpush1.bf16.msra.mxu0 %v1023
        %1069 = vmatprep.subr.bf16.mxu0 %v1027
        %1070 = vmatpush1.bf16.msra.mxu0 %v1026
        %1071 = vmatprep.subr.bf16.mxu0 %v1030
        %1072 = vmatpush1.bf16.msra.mxu0 %v1029
        %1073 = vmatprep.subr.bf16.mxu0 %v1033
        %1074 = vmatpush1.bf16.msra.mxu0 %v1032
        %1075 = vmatprep.subr.bf16.mxu0 0
        %1076 = vmatpush1.bf16.msra.mxu0 0
        %1077 = vmatprep.subr.bf16.mxu0 0
        %1078 = vmatpush1.bf16.msra.mxu0 0
        %1079 = vmatprep.subr.bf16.mxu0 0
        %1080 = vmatpush1.bf16.msra.mxu0 0
        %1081 = vmatprep.subr.bf16.mxu0 0
        %1082 = vmatpush1.bf16.msra.mxu0 0
        %1083 = vmatprep.subr.bf16.mxu0 0
        %1084 = vmatpush1.bf16.msra.mxu0 0
        %1085 = vmatprep.subr.bf16.mxu0 0
        %1086 = vmatpush1.bf16.msra.mxu0 0
        %1087 = vmatprep.subr.bf16.mxu0 0
        %1088 = vmatpush1.bf16.msra.mxu0 0
        %1089 = vmatprep.subr.bf16.mxu0 0
        %1090 = vmatpush1.bf16.msra.mxu0 0
        %1091 = vmatprep.mubr.bf16.mxu0 0
        %1092 = vmatmul.mubr.bf16.gmra.mrb[0].mxu0 %v910
        %v1093 = vpop.f32.mrb[0].mxu0
        %v1094 = vadd.f32 %v919, %v1093
        %v1095 = vpop.f32.mrb[0].mxu0
        %v1096 = vadd.f32 %v923, %v1095
        %v1097 = vpop.f32.mrb[0].mxu0
        %v1098 = vadd.f32 %v919, %v1097
        %v1099 = vpop.f32.mrb[0].mxu0
        %v1100 = vadd.f32 %v923, %v1099
        %1101 = vmatprep.mubr.bf16.mxu0 0
        %1102 = vmatmul.mubr.bf16.gmra.mrb[0].mxu0 %v911
        %v1103 = vpop.f32.mrb[0].mxu0
        %v1104 = vadd.f32 %v919, %v1103
        %v1105 = vpop.f32.mrb[0].mxu0
        %v1106 = vadd.f32 %v923, %v1105
        %v1107 = vpop.f32.mrb[0].mxu0
        %v1108 = vadd.f32 %v919, %v1107
        %v1109 = vpop.f32.mrb[0].mxu0
        %v1110 = vadd.f32 %v923, %v1109
        %1111 = vmatprep.mubr.bf16.mxu0 0
        %1112 = vmatmul.mubr.bf16.gmra.mrb[0].mxu0 %v912
        %v1113 = vpop.f32.mrb[0].mxu0
        %v1114 = vadd.f32 %v919, %v1113
        %v1115 = vpop.f32.mrb[0].mxu0
        %v1116 = vadd.f32 %v923, %v1115
        %v1117 = vpop.f32.mrb[0].mxu0
        %v1118 = vadd.f32 %v919, %v1117
        %v1119 = vpop.f32.mrb[0].mxu0
        %v1120 = vadd.f32 %v923, %v1119
        %1121 = vmatprep.mubr.bf16.mxu0 0
        %1122 = vmatmul.mubr.bf16.gmra.mrb[0].mxu0 %v913
        %v1123 = vpop.f32.mrb[0].mxu0
        %v1124 = vadd.f32 %v919, %v1123
        %v1125 = vpop.f32.mrb[0].mxu0
        %v1126 = vadd.f32 %v923, %v1125
        %v1127 = vpop.f32.mrb[0].mxu0
        %v1128 = vadd.f32 %v919, %v1127
        %v1129 = vpop.f32.mrb[0].mxu0
        %v1130 = vadd.f32 %v923, %v1129
        %1131 = vdwg.mxu0
        %1132 = vmatprep.subr.bf16.mxu0 0
        %1133 = vmatpush1.bf16.msra.mxu0 %v1013
        %1134 = vmatprep.subr.bf16.mxu0 0
        %1135 = vmatpush1.bf16.msra.mxu0 %v1016
        %1136 = vmatprep.subr.bf16.mxu0 0
        %1137 = vmatpush1.bf16.msra.mxu0 %v1019
        %1138 = vmatprep.subr.bf16.mxu0 0
        %1139 = vmatpush1.bf16.msra.mxu0 %v1022
        %1140 = vmatprep.subr.bf16.mxu0 0
        %1141 = vmatpush1.bf16.msra.mxu0 %v1025
        %1142 = vmatprep.subr.bf16.mxu0 0
        %1143 = vmatpush1.bf16.msra.mxu0 %v1028
        %1144 = vmatprep.subr.bf16.mxu0 0
        %1145 = vmatpush1.bf16.msra.mxu0 %v1031
        %1146 = vmatprep.subr.bf16.mxu0 0
        %1147 = vmatpush1.bf16.msra.mxu0 %v1034
        %1148 = vmatprep.subr.bf16.mxu0 0
        %1149 = vmatpush1.bf16.msra.mxu0 0
        %1150 = vmatprep.subr.bf16.mxu0 0
        %1151 = vmatpush1.bf16.msra.mxu0 0
        %1152 = vmatprep.subr.bf16.mxu0 0
        %1153 = vmatpush1.bf16.msra.mxu0 0
        %1154 = vmatprep.subr.bf16.mxu0 0
        %1155 = vmatpush1.bf16.msra.mxu0 0
        %1156 = vmatprep.subr.bf16.mxu0 0
        %1157 = vmatpush1.bf16.msra.mxu0 0
        %1158 = vmatprep.subr.bf16.mxu0 0
        %1159 = vmatpush1.bf16.msra.mxu0 0
        %1160 = vmatprep.subr.bf16.mxu0 0
        %1161 = vmatpush1.bf16.msra.mxu0 0
        %1162 = vmatprep.subr.bf16.mxu0 0
        %1163 = vmatpush1.bf16.msra.mxu0 0
        %1164 = vmatprep.mubr.bf16.mxu0 0
        %1165 = vmatmul.mubr.bf16.gmra.mrb[0].mxu0 %v910
        %v1166 = vpop.f32.mrb[0].mxu0
        %v1167 = vadd.f32 %v927, %v1166
        %v1168 = vpop.f32.mrb[0].mxu0
        %v1169 = vpop.f32.mrb[0].mxu0
        %v1170 = vadd.f32 %v927, %v1169
        %v1171 = vpop.f32.mrb[0].mxu0
        %1172 = vmatprep.mubr.bf16.mxu0 0
        %1173 = vmatmul.mubr.bf16.gmra.mrb[0].mxu0 %v911
        %v1174 = vpop.f32.mrb[0].mxu0
        %v1175 = vadd.f32 %v927, %v1174
        %v1176 = vpop.f32.mrb[0].mxu0
        %v1177 = vpop.f32.mrb[0].mxu0
        %v1178 = vadd.f32 %v927, %v1177
        %v1179 = vpop.f32.mrb[0].mxu0
        %1180 = vmatprep.mubr.bf16.mxu0 0
        %1181 = vmatmul.mubr.bf16.gmra.mrb[0].mxu0 %v912
        %v1182 = vpop.f32.mrb[0].mxu0
        %v1183 = vadd.f32 %v927, %v1182
        %v1184 = vpop.f32.mrb[0].mxu0
        %v1185 = vpop.f32.mrb[0].mxu0
        %v1186 = vadd.f32 %v927, %v1185
        %v1187 = vpop.f32.mrb[0].mxu0
        %1188 = vmatprep.mubr.bf16.mxu0 0
        %1189 = vmatmul.mubr.bf16.gmra.mrb[0].mxu0 %v913
        %v1190 = vpop.f32.mrb[0].mxu0
        %v1191 = vadd.f32 %v927, %v1190
        %v1192 = vpop.f32.mrb[0].mxu0
        %v1193 = vpop.f32.mrb[0].mxu0
        %v1194 = vadd.f32 %v927, %v1193
        %v1195 = vpop.f32.mrb[0].mxu0
        %1196 = vdwg.mxu0
        %v1197 = vlaneseq
        %v1198 = vand.u32 %v1197, 127
        %v1199 = vlaneseq
        %v1200 = vshrl.u32 %v1199, 7
        %v1201 = vadd.s32 %v1200, 8
        %vm1202 = vcmp.le.s32.totalorder %v1198, %v1200
        %vm1203 = vcmp.le.s32.totalorder %v1198, %v1201
        %v1204 = vpack.c.bf16 %v1098, %v1094
        %v1205 = vpack.c.bf16 %v1108, %v1104
        %v1206 = vpack.c.bf16 %v1118, %v1114
        %v1207 = vpack.c.bf16 %v1128, %v1124
        %v1208 = vpack.c.bf16 %v1100, %v1096
        %v1209 = vpack.c.bf16 %v1110, %v1106
        %v1210 = vpack.c.bf16 %v1120, %v1116
        %v1211 = vpack.c.bf16 %v1130, %v1126
        %v1212 = vpack.c.bf16 %v1170, %v1167
        %v1213 = vpack.c.bf16 %v1178, %v1175
        %v1214 = vpack.c.bf16 %v1186, %v1183
        %v1215 = vpack.c.bf16 %v1194, %v1191
        %vm1216 = vcmask 261120
        %v1218 = vsel %vm1216, %v1204, 0
        %v1221 = vsel %vm1216, %v1208, 0
        %1223 = vmatprep.subr.bf16.mxu0 0
        %1224 = vmatpush1.bf16.xpose.msra.mxu0 %v1221
        %1225 = vmatprep.subr.bf16.mxu0 0
        %1226 = vmatpush1.bf16.xpose.msra.mxu0 0
        %1227 = vmatprep.subr.bf16.mxu0 0
        %1228 = vmatpush1.bf16.xpose.msra.mxu0 0
        %1229 = vmatprep.subr.bf16.mxu0 0
        %1230 = vmatpush1.bf16.xpose.msra.mxu0 0
        %1231 = vmatprep.subr.bf16.mxu0 0
        %1232 = vmatpush1.bf16.xpose.msra.mxu0 0
        %1233 = vmatprep.subr.bf16.mxu0 0
        %1234 = vmatpush1.bf16.xpose.msra.mxu0 0
        %1235 = vmatprep.subr.bf16.mxu0 0
        %1236 = vmatpush1.bf16.xpose.msra.mxu0 0
        %1237 = vmatprep.subr.bf16.mxu0 0
        %1238 = vmatpush1.bf16.xpose.msra.mxu0 0
        %1239 = vmatprep.subr.bf16.mxu0 0
        %1240 = vmatpush1.bf16.xpose.msra.mxu0 0
        %1241 = vmatprep.subr.bf16.mxu0 0
        %1242 = vmatpush1.bf16.xpose.msra.mxu0 0
        %1243 = vmatprep.subr.bf16.mxu0 0
        %1244 = vmatpush1.bf16.xpose.msra.mxu0 0
        %1245 = vmatprep.subr.bf16.mxu0 0
        %1246 = vmatpush1.bf16.xpose.msra.mxu0 0
        %1247 = vmatprep.subr.bf16.mxu0 0
        %1248 = vmatpush1.bf16.xpose.msra.mxu0 0
        %1249 = vmatprep.subr.bf16.mxu0 0
        %1250 = vmatpush1.bf16.xpose.msra.mxu0 0
        %1251 = vmatprep.subr.bf16.mxu0 0
        %1252 = vmatpush1.bf16.xpose.msra.mxu0 0
        %1253 = vmatprep.subr.bf16.mxu0 0
        %1254 = vmatpush1.bf16.xpose.msra.mxu0 0
        %1255 = vmatprep.mubr.bf16.mxu0 0
        %1256 = vmatmul.mubr.bf16.gmra.mrb[0].mxu0 %v1218
        %v1257 = vpop.f32.mrb[0].mxu0
        %v1258 = vadd.f32 0.0, %v1257
        %v1259 = vpop.f32.mrb[0].mxu0
        %v1260 = vpop.f32.mrb[0].mxu0
        %v1261 = vadd.f32 0.0, %v1260
        %v1262 = vpop.f32.mrb[0].mxu0
        %1263 = vdwg.mxu0
        %v1265 = vsel %vm1216, %v1205, 0
        %v1268 = vsel %vm1216, %v1209, 0
        %1270 = vmatprep.subr.bf16.mxu0 0
        %1271 = vmatpush1.bf16.xpose.msra.mxu0 %v1268
        %1272 = vmatprep.subr.bf16.mxu0 0
        %1273 = vmatpush1.bf16.xpose.msra.mxu0 0
        %1274 = vmatprep.subr.bf16.mxu0 0
        %1275 = vmatpush1.bf16.xpose.msra.mxu0 0
        %1276 = vmatprep.subr.bf16.mxu0 0
        %1277 = vmatpush1.bf16.xpose.msra.mxu0 0
        %1278 = vmatprep.subr.bf16.mxu0 0
        %1279 = vmatpush1.bf16.xpose.msra.mxu0 0
        %1280 = vmatprep.subr.bf16.mxu0 0
        %1281 = vmatpush1.bf16.xpose.msra.mxu0 0
        %1282 = vmatprep.subr.bf16.mxu0 0
        %1283 = vmatpush1.bf16.xpose.msra.mxu0 0
        %1284 = vmatprep.subr.bf16.mxu0 0
        %1285 = vmatpush1.bf16.xpose.msra.mxu0 0
        %1286 = vmatprep.subr.bf16.mxu0 0
        %1287 = vmatpush1.bf16.xpose.msra.mxu0 0
        %1288 = vmatprep.subr.bf16.mxu0 0
        %1289 = vmatpush1.bf16.xpose.msra.mxu0 0
        %1290 = vmatprep.subr.bf16.mxu0 0
        %1291 = vmatpush1.bf16.xpose.msra.mxu0 0
        %1292 = vmatprep.subr.bf16.mxu0 0
        %1293 = vmatpush1.bf16.xpose.msra.mxu0 0
        %1294 = vmatprep.subr.bf16.mxu0 0
        %1295 = vmatpush1.bf16.xpose.msra.mxu0 0
        %1296 = vmatprep.subr.bf16.mxu0 0
        %1297 = vmatpush1.bf16.xpose.msra.mxu0 0
        %1298 = vmatprep.subr.bf16.mxu0 0
        %1299 = vmatpush1.bf16.xpose.msra.mxu0 0
        %1300 = vmatprep.subr.bf16.mxu0 0
        %1301 = vmatpush1.bf16.xpose.msra.mxu0 0
        %1302 = vmatprep.mubr.bf16.mxu0 0
        %1303 = vmatmul.mubr.bf16.gmra.mrb[0].mxu0 %v1265
        %v1304 = vpop.f32.mrb[0].mxu0
        %v1305 = vadd.f32 0.0, %v1304
        %v1306 = vpop.f32.mrb[0].mxu0
        %v1307 = vpop.f32.mrb[0].mxu0
        %v1308 = vadd.f32 0.0, %v1307
        %v1309 = vpop.f32.mrb[0].mxu0
        %1310 = vdwg.mxu0
        %v1312 = vsel %vm1216, %v1206, 0
        %v1315 = vsel %vm1216, %v1210, 0
        %1317 = vmatprep.subr.bf16.mxu0 0
        %1318 = vmatpush1.bf16.xpose.msra.mxu0 %v1315
        %1319 = vmatprep.subr.bf16.mxu0 0
        %1320 = vmatpush1.bf16.xpose.msra.mxu0 0
        %1321 = vmatprep.subr.bf16.mxu0 0
        %1322 = vmatpush1.bf16.xpose.msra.mxu0 0
        %1323 = vmatprep.subr.bf16.mxu0 0
        %1324 = vmatpush1.bf16.xpose.msra.mxu0 0
        %1325 = vmatprep.subr.bf16.mxu0 0
        %1326 = vmatpush1.bf16.xpose.msra.mxu0 0
        %1327 = vmatprep.subr.bf16.mxu0 0
        %1328 = vmatpush1.bf16.xpose.msra.mxu0 0
        %1329 = vmatprep.subr.bf16.mxu0 0
        %1330 = vmatpush1.bf16.xpose.msra.mxu0 0
        %1331 = vmatprep.subr.bf16.mxu0 0
        %1332 = vmatpush1.bf16.xpose.msra.mxu0 0
        %1333 = vmatprep.subr.bf16.mxu0 0
        %1334 = vmatpush1.bf16.xpose.msra.mxu0 0
        %1335 = vmatprep.subr.bf16.mxu0 0
        %1336 = vmatpush1.bf16.xpose.msra.mxu0 0
        %1337 = vmatprep.subr.bf16.mxu0 0
        %1338 = vmatpush1.bf16.xpose.msra.mxu0 0
        %1339 = vmatprep.subr.bf16.mxu0 0
        %1340 = vmatpush1.bf16.xpose.msra.mxu0 0
        %1341 = vmatprep.subr.bf16.mxu0 0
        %1342 = vmatpush1.bf16.xpose.msra.mxu0 0
        %1343 = vmatprep.subr.bf16.mxu0 0
        %1344 = vmatpush1.bf16.xpose.msra.mxu0 0
        %1345 = vmatprep.subr.bf16.mxu0 0
        %1346 = vmatpush1.bf16.xpose.msra.mxu0 0
        %1347 = vmatprep.subr.bf16.mxu0 0
        %1348 = vmatpush1.bf16.xpose.msra.mxu0 0
        %1349 = vmatprep.mubr.bf16.mxu0 0
        %1350 = vmatmul.mubr.bf16.gmra.mrb[0].mxu0 %v1312
        %v1351 = vpop.f32.mrb[0].mxu0
        %v1352 = vadd.f32 0.0, %v1351
        %v1353 = vpop.f32.mrb[0].mxu0
        %v1354 = vpop.f32.mrb[0].mxu0
        %v1355 = vadd.f32 0.0, %v1354
        %v1356 = vpop.f32.mrb[0].mxu0
        %1357 = vdwg.mxu0
        %v1359 = vsel %vm1216, %v1207, 0
        %v1362 = vsel %vm1216, %v1211, 0
        %1364 = vmatprep.subr.bf16.mxu0 0
        %1365 = vmatpush1.bf16.xpose.msra.mxu0 %v1362
        %1366 = vmatprep.subr.bf16.mxu0 0
        %1367 = vmatpush1.bf16.xpose.msra.mxu0 0
        %1368 = vmatprep.subr.bf16.mxu0 0
        %1369 = vmatpush1.bf16.xpose.msra.mxu0 0
        %1370 = vmatprep.subr.bf16.mxu0 0
        %1371 = vmatpush1.bf16.xpose.msra.mxu0 0
        %1372 = vmatprep.subr.bf16.mxu0 0
        %1373 = vmatpush1.bf16.xpose.msra.mxu0 0
        %1374 = vmatprep.subr.bf16.mxu0 0
        %1375 = vmatpush1.bf16.xpose.msra.mxu0 0
        %1376 = vmatprep.subr.bf16.mxu0 0
        %1377 = vmatpush1.bf16.xpose.msra.mxu0 0
        %1378 = vmatprep.subr.bf16.mxu0 0
        %1379 = vmatpush1.bf16.xpose.msra.mxu0 0
        %1380 = vmatprep.subr.bf16.mxu0 0
        %1381 = vmatpush1.bf16.xpose.msra.mxu0 0
        %1382 = vmatprep.subr.bf16.mxu0 0
        %1383 = vmatpush1.bf16.xpose.msra.mxu0 0
        %1384 = vmatprep.subr.bf16.mxu0 0
        %1385 = vmatpush1.bf16.xpose.msra.mxu0 0
        %1386 = vmatprep.subr.bf16.mxu0 0
        %1387 = vmatpush1.bf16.xpose.msra.mxu0 0
        %1388 = vmatprep.subr.bf16.mxu0 0
        %1389 = vmatpush1.bf16.xpose.msra.mxu0 0
        %1390 = vmatprep.subr.bf16.mxu0 0
        %1391 = vmatpush1.bf16.xpose.msra.mxu0 0
        %1392 = vmatprep.subr.bf16.mxu0 0
        %1393 = vmatpush1.bf16.xpose.msra.mxu0 0
        %1394 = vmatprep.subr.bf16.mxu0 0
        %1395 = vmatpush1.bf16.xpose.msra.mxu0 0
        %1396 = vmatprep.mubr.bf16.mxu0 0
        %1397 = vmatmul.mubr.bf16.gmra.mrb[0].mxu0 %v1359
        %v1398 = vpop.f32.mrb[0].mxu0
        %v1399 = vadd.f32 0.0, %v1398
        %v1400 = vpop.f32.mrb[0].mxu0
        %v1401 = vpop.f32.mrb[0].mxu0
        %v1402 = vadd.f32 0.0, %v1401
        %v1403 = vpop.f32.mrb[0].mxu0
        %1404 = vdwg.mxu0
        %v1405 = vsel %vm1202, 1, 0
        %v1406 = vsel %vm1203, 1, 0
        %vm1407 = vcmp.eq.s32.totalorder %v1405, 1
        %vm1408 = vcmp.eq.s32.totalorder %v1406, 1
        %v1409 = vsel %vm1407, %v1258, -1e+30
        %v1410 = vsel %vm1408, %v1261, -1e+30
        %v1411 = vsel %vm1407, %v1305, -1e+30
        %v1412 = vsel %vm1408, %v1308, -1e+30
        %v1413 = vsel %vm1407, %v1352, -1e+30
        %v1414 = vsel %vm1408, %v1355, -1e+30
        %v1415 = vsel %vm1407, %v1399, -1e+30
        %v1416 = vsel %vm1408, %v1402, -1e+30
        %vm1417 = vcmask 130048
        %v1418 = vsel %vm1417, %v1409, -inf
        %1419 = vmax.xlane.f32.xlu0 %v1418
        %v1420 = vpop.xlane.xlu0 %1419
        %v1421 = vsel %vm1417, %v1410, -inf
        %1422 = vmax.xlane.f32.xlu0 %v1421
        %v1423 = vpop.xlane.xlu0 %1422
        %v1424 = vsel %vm1417, %v1411, -inf
        %1425 = vmax.xlane.f32.xlu0 %v1424
        %v1426 = vpop.xlane.xlu0 %1425
        %v1427 = vsel %vm1417, %v1412, -inf
        %1428 = vmax.xlane.f32.xlu0 %v1427
        %v1429 = vpop.xlane.xlu0 %1428
        %v1430 = vsel %vm1417, %v1413, -inf
        %1431 = vmax.xlane.f32.xlu0 %v1430
        %v1432 = vpop.xlane.xlu0 %1431
        %v1433 = vsel %vm1417, %v1414, -inf
        %1434 = vmax.xlane.f32.xlu0 %v1433
        %v1435 = vpop.xlane.xlu0 %1434
        %v1436 = vsel %vm1417, %v1415, -inf
        %1437 = vmax.xlane.f32.xlu0 %v1436
        %v1438 = vpop.xlane.xlu0 %1437
        %v1439 = vsel %vm1417, %v1416, -inf
        %1440 = vmax.xlane.f32.xlu0 %v1439
        %v1441 = vpop.xlane.xlu0 %1440
        %v1442 = vsub.f32 %v1409, %v1420
        %v1443 = vsub.f32 %v1410, %v1423
        %v1444 = vsub.f32 %v1411, %v1426
        %v1445 = vsub.f32 %v1412, %v1429
        %v1446 = vsub.f32 %v1413, %v1432
        %v1447 = vsub.f32 %v1414, %v1435
        %v1448 = vsub.f32 %v1415, %v1438
        %v1449 = vsub.f32 %v1416, %v1441
        %v1450 = vmul.f32 %v1442, 1.442695
        %v1451 = vpow.pop %v1450
        %v1452 = vmul.f32 %v1443, 1.442695
        %v1453 = vpow.pop %v1452
        %v1454 = vmul.f32 %v1444, 1.442695
        %v1455 = vpow.pop %v1454
        %v1456 = vmul.f32 %v1445, 1.442695
        %v1457 = vpow.pop %v1456
        %v1458 = vmul.f32 %v1446, 1.442695
        %v1459 = vpow.pop %v1458
        %v1460 = vmul.f32 %v1447, 1.442695
        %v1461 = vpow.pop %v1460
        %v1462 = vmul.f32 %v1448, 1.442695
        %v1463 = vpow.pop %v1462
        %v1464 = vmul.f32 %v1449, 1.442695
        %v1465 = vpow.pop %v1464
        %v1466 = vsel %vm1417, %v1451, 0.0
        %1467 = vadd.xlane.f32.xlu0 %v1466
        %v1468 = vpop.xlane.xlu0 %1467
        %v1469 = vsel %vm1417, %v1453, 0.0
        %1470 = vadd.xlane.f32.xlu0 %v1469
        %v1471 = vpop.xlane.xlu0 %1470
        %v1472 = vsel %vm1417, %v1455, 0.0
        %1473 = vadd.xlane.f32.xlu0 %v1472
        %v1474 = vpop.xlane.xlu0 %1473
        %v1475 = vsel %vm1417, %v1457, 0.0
        %1476 = vadd.xlane.f32.xlu0 %v1475
        %v1477 = vpop.xlane.xlu0 %1476
        %v1478 = vsel %vm1417, %v1459, 0.0
        %1479 = vadd.xlane.f32.xlu0 %v1478
        %v1480 = vpop.xlane.xlu0 %1479
        %v1481 = vsel %vm1417, %v1461, 0.0
        %1482 = vadd.xlane.f32.xlu0 %v1481
        %v1483 = vpop.xlane.xlu0 %1482
        %v1484 = vsel %vm1417, %v1463, 0.0
        %1485 = vadd.xlane.f32.xlu0 %v1484
        %v1486 = vpop.xlane.xlu0 %1485
        %v1487 = vsel %vm1417, %v1465, 0.0
        %1488 = vadd.xlane.f32.xlu0 %v1487
        %v1489 = vpop.xlane.xlu0 %1488
        %v1490 = vrcp.pop %v1468
        %v1491 = vrcp.pop %v1471
        %v1492 = vrcp.pop %v1474
        %v1493 = vrcp.pop %v1477
        %v1494 = vrcp.pop %v1480
        %v1495 = vrcp.pop %v1483
        %v1496 = vrcp.pop %v1486
        %v1497 = vrcp.pop %v1489
        %v1498 = vmul.f32 %v1451, %v1490
        %v1499 = vmul.f32 %v1453, %v1491
        %v1500 = vmul.f32 %v1455, %v1492
        %v1501 = vmul.f32 %v1457, %v1493
        %v1502 = vmul.f32 %v1459, %v1494
        %v1503 = vmul.f32 %v1461, %v1495
        %v1504 = vmul.f32 %v1463, %v1496
        %v1505 = vmul.f32 %v1465, %v1497
        %v1506 = vpack.c.bf16 %v1499, %v1498
        %v1507 = vpack.c.bf16 %v1501, %v1500
        %v1508 = vpack.c.bf16 %v1503, %v1502
        %v1509 = vpack.c.bf16 %v1505, %v1504
        %v1511 = vsel %vm1417, %v1506, 0
        %1513 = vmatprep.subr.bf16.mxu0 0
        %1514 = vmatpush1.bf16.msra.mxu0 %v1212
        %1515 = vmatprep.subr.bf16.mxu0 0
        %1516 = vmatpush1.bf16.msra.mxu0 0
        %1517 = vmatprep.subr.bf16.mxu0 0
        %1518 = vmatpush1.bf16.msra.mxu0 0
        %1519 = vmatprep.subr.bf16.mxu0 0
        %1520 = vmatpush1.bf16.msra.mxu0 0
        %1521 = vmatprep.subr.bf16.mxu0 0
        %1522 = vmatpush1.bf16.msra.mxu0 0
        %1523 = vmatprep.subr.bf16.mxu0 0
        %1524 = vmatpush1.bf16.msra.mxu0 0
        %1525 = vmatprep.subr.bf16.mxu0 0
        %1526 = vmatpush1.bf16.msra.mxu0 0
        %1527 = vmatprep.subr.bf16.mxu0 0
        %1528 = vmatpush1.bf16.msra.mxu0 0
        %1529 = vmatprep.subr.bf16.mxu0 0
        %1530 = vmatpush1.bf16.msra.mxu0 0
        %1531 = vmatprep.subr.bf16.mxu0 0
        %1532 = vmatpush1.bf16.msra.mxu0 0
        %1533 = vmatprep.subr.bf16.mxu0 0
        %1534 = vmatpush1.bf16.msra.mxu0 0
        %1535 = vmatprep.subr.bf16.mxu0 0
        %1536 = vmatpush1.bf16.msra.mxu0 0
        %1537 = vmatprep.subr.bf16.mxu0 0
        %1538 = vmatpush1.bf16.msra.mxu0 0
        %1539 = vmatprep.subr.bf16.mxu0 0
        %1540 = vmatpush1.bf16.msra.mxu0 0
        %1541 = vmatprep.subr.bf16.mxu0 0
        %1542 = vmatpush1.bf16.msra.mxu0 0
        %1543 = vmatprep.subr.bf16.mxu0 0
        %1544 = vmatpush1.bf16.msra.mxu0 0
        %1545 = vmatprep.mubr.bf16.mxu0 0
        %1546 = vmatmul.mubr.bf16.gmra.mrb[0].mxu0 %v1511
        %v1547 = vpop.f32.mrb[0].mxu0
        %v1548 = vadd.f32 0.0, %v1547
        %v1549 = vpop.f32.mrb[0].mxu0
        %v1550 = vpop.f32.mrb[0].mxu0
        %v1551 = vadd.f32 0.0, %v1550
        %v1552 = vpop.f32.mrb[0].mxu0
        %1553 = vdwg.mxu0
        %v1555 = vsel %vm1417, %v1507, 0
        %1557 = vmatprep.subr.bf16.mxu0 0
        %1558 = vmatpush1.bf16.msra.mxu0 %v1213
        %1559 = vmatprep.subr.bf16.mxu0 0
        %1560 = vmatpush1.bf16.msra.mxu0 0
        %1561 = vmatprep.subr.bf16.mxu0 0
        %1562 = vmatpush1.bf16.msra.mxu0 0
        %1563 = vmatprep.subr.bf16.mxu0 0
        %1564 = vmatpush1.bf16.msra.mxu0 0
        %1565 = vmatprep.subr.bf16.mxu0 0
        %1566 = vmatpush1.bf16.msra.mxu0 0
        %1567 = vmatprep.subr.bf16.mxu0 0
        %1568 = vmatpush1.bf16.msra.mxu0 0
        %1569 = vmatprep.subr.bf16.mxu0 0
        %1570 = vmatpush1.bf16.msra.mxu0 0
        %1571 = vmatprep.subr.bf16.mxu0 0
        %1572 = vmatpush1.bf16.msra.mxu0 0
        %1573 = vmatprep.subr.bf16.mxu0 0
        %1574 = vmatpush1.bf16.msra.mxu0 0
        %1575 = vmatprep.subr.bf16.mxu0 0
        %1576 = vmatpush1.bf16.msra.mxu0 0
        %1577 = vmatprep.subr.bf16.mxu0 0
        %1578 = vmatpush1.bf16.msra.mxu0 0
        %1579 = vmatprep.subr.bf16.mxu0 0
        %1580 = vmatpush1.bf16.msra.mxu0 0
        %1581 = vmatprep.subr.bf16.mxu0 0
        %1582 = vmatpush1.bf16.msra.mxu0 0
        %1583 = vmatprep.subr.bf16.mxu0 0
        %1584 = vmatpush1.bf16.msra.mxu0 0
        %1585 = vmatprep.subr.bf16.mxu0 0
        %1586 = vmatpush1.bf16.msra.mxu0 0
        %1587 = vmatprep.subr.bf16.mxu0 0
        %1588 = vmatpush1.bf16.msra.mxu0 0
        %1589 = vmatprep.mubr.bf16.mxu0 0
        %1590 = vmatmul.mubr.bf16.gmra.mrb[0].mxu0 %v1555
        %v1591 = vpop.f32.mrb[0].mxu0
        %v1592 = vadd.f32 0.0, %v1591
        %v1593 = vpop.f32.mrb[0].mxu0
        %v1594 = vpop.f32.mrb[0].mxu0
        %v1595 = vadd.f32 0.0, %v1594
        %v1596 = vpop.f32.mrb[0].mxu0
        %1597 = vdwg.mxu0
        %v1599 = vsel %vm1417, %v1508, 0
        %1601 = vmatprep.subr.bf16.mxu0 0
        %1602 = vmatpush1.bf16.msra.mxu0 %v1214
        %1603 = vmatprep.subr.bf16.mxu0 0
        %1604 = vmatpush1.bf16.msra.mxu0 0
        %1605 = vmatprep.subr.bf16.mxu0 0
        %1606 = vmatpush1.bf16.msra.mxu0 0
        %1607 = vmatprep.subr.bf16.mxu0 0
        %1608 = vmatpush1.bf16.msra.mxu0 0
        %1609 = vmatprep.subr.bf16.mxu0 0
        %1610 = vmatpush1.bf16.msra.mxu0 0
        %1611 = vmatprep.subr.bf16.mxu0 0
        %1612 = vmatpush1.bf16.msra.mxu0 0
        %1613 = vmatprep.subr.bf16.mxu0 0
        %1614 = vmatpush1.bf16.msra.mxu0 0
        %1615 = vmatprep.subr.bf16.mxu0 0
        %1616 = vmatpush1.bf16.msra.mxu0 0
        %1617 = vmatprep.subr.bf16.mxu0 0
        %1618 = vmatpush1.bf16.msra.mxu0 0
        %1619 = vmatprep.subr.bf16.mxu0 0
        %1620 = vmatpush1.bf16.msra.mxu0 0
        %1621 = vmatprep.subr.bf16.mxu0 0
        %1622 = vmatpush1.bf16.msra.mxu0 0
        %1623 = vmatprep.subr.bf16.mxu0 0
        %1624 = vmatpush1.bf16.msra.mxu0 0
        %1625 = vmatprep.subr.bf16.mxu0 0
        %1626 = vmatpush1.bf16.msra.mxu0 0
        %1627 = vmatprep.subr.bf16.mxu0 0
        %1628 = vmatpush1.bf16.msra.mxu0 0
        %1629 = vmatprep.subr.bf16.mxu0 0
        %1630 = vmatpush1.bf16.msra.mxu0 0
        %1631 = vmatprep.subr.bf16.mxu0 0
        %1632 = vmatpush1.bf16.msra.mxu0 0
        %1633 = vmatprep.mubr.bf16.mxu0 0
        %1634 = vmatmul.mubr.bf16.gmra.mrb[0].mxu0 %v1599
        %v1635 = vpop.f32.mrb[0].mxu0
        %v1636 = vadd.f32 0.0, %v1635
        %v1637 = vpop.f32.mrb[0].mxu0
        %v1638 = vpop.f32.mrb[0].mxu0
        %v1639 = vadd.f32 0.0, %v1638
        %v1640 = vpop.f32.mrb[0].mxu0
        %1641 = vdwg.mxu0
        %v1643 = vsel %vm1417, %v1509, 0
        %1645 = vmatprep.subr.bf16.mxu0 0
        %1646 = vmatpush1.bf16.msra.mxu0 %v1215
        %1647 = vmatprep.subr.bf16.mxu0 0
        %1648 = vmatpush1.bf16.msra.mxu0 0
        %1649 = vmatprep.subr.bf16.mxu0 0
        %1650 = vmatpush1.bf16.msra.mxu0 0
        %1651 = vmatprep.subr.bf16.mxu0 0
        %1652 = vmatpush1.bf16.msra.mxu0 0
        %1653 = vmatprep.subr.bf16.mxu0 0
        %1654 = vmatpush1.bf16.msra.mxu0 0
        %1655 = vmatprep.subr.bf16.mxu0 0
        %1656 = vmatpush1.bf16.msra.mxu0 0
        %1657 = vmatprep.subr.bf16.mxu0 0
        %1658 = vmatpush1.bf16.msra.mxu0 0
        %1659 = vmatprep.subr.bf16.mxu0 0
        %1660 = vmatpush1.bf16.msra.mxu0 0
        %1661 = vmatprep.subr.bf16.mxu0 0
        %1662 = vmatpush1.bf16.msra.mxu0 0
        %1663 = vmatprep.subr.bf16.mxu0 0
        %1664 = vmatpush1.bf16.msra.mxu0 0
        %1665 = vmatprep.subr.bf16.mxu0 0
        %1666 = vmatpush1.bf16.msra.mxu0 0
        %1667 = vmatprep.subr.bf16.mxu0 0
        %1668 = vmatpush1.bf16.msra.mxu0 0
        %1669 = vmatprep.subr.bf16.mxu0 0
        %1670 = vmatpush1.bf16.msra.mxu0 0
        %1671 = vmatprep.subr.bf16.mxu0 0
        %1672 = vmatpush1.bf16.msra.mxu0 0
        %1673 = vmatprep.subr.bf16.mxu0 0
        %1674 = vmatpush1.bf16.msra.mxu0 0
        %1675 = vmatprep.subr.bf16.mxu0 0
        %1676 = vmatpush1.bf16.msra.mxu0 0
        %1677 = vmatprep.mubr.bf16.mxu0 0
        %1678 = vmatmul.mubr.bf16.gmra.mrb[0].mxu0 %v1643
        %v1679 = vpop.f32.mrb[0].mxu0
        %v1680 = vadd.f32 0.0, %v1679
        %v1681 = vpop.f32.mrb[0].mxu0
        %v1682 = vpop.f32.mrb[0].mxu0
        %v1683 = vadd.f32 0.0, %v1682
        %v1684 = vpop.f32.mrb[0].mxu0
        %1685 = vdwg.mxu0
        %1687 = vrot.lane.b32.xlu0 %v1204, 96
        %v1688 = vpop.permute.xlu0 %1687
        %1690 = vrot.lane.b32.xlu0 %v1208, 96
        %v1691 = vpop.permute.xlu0 %1690
        %v1693 = vsel %vm1216, %v1688, 0
        %v1696 = vsel %vm1216, %v1691, 0
        %1698 = vmatprep.subr.bf16.mxu0 0
        %1699 = vmatpush1.bf16.xpose.msra.mxu0 %v1696
        %1700 = vmatprep.subr.bf16.mxu0 0
        %1701 = vmatpush1.bf16.xpose.msra.mxu0 0
        %1702 = vmatprep.subr.bf16.mxu0 0
        %1703 = vmatpush1.bf16.xpose.msra.mxu0 0
        %1704 = vmatprep.subr.bf16.mxu0 0
        %1705 = vmatpush1.bf16.xpose.msra.mxu0 0
        %1706 = vmatprep.subr.bf16.mxu0 0
        %1707 = vmatpush1.bf16.xpose.msra.mxu0 0
        %1708 = vmatprep.subr.bf16.mxu0 0
        %1709 = vmatpush1.bf16.xpose.msra.mxu0 0
        %1710 = vmatprep.subr.bf16.mxu0 0
        %1711 = vmatpush1.bf16.xpose.msra.mxu0 0
        %1712 = vmatprep.subr.bf16.mxu0 0
        %1713 = vmatpush1.bf16.xpose.msra.mxu0 0
        %1714 = vmatprep.subr.bf16.mxu0 0
        %1715 = vmatpush1.bf16.xpose.msra.mxu0 0
        %1716 = vmatprep.subr.bf16.mxu0 0
        %1717 = vmatpush1.bf16.xpose.msra.mxu0 0
        %1718 = vmatprep.subr.bf16.mxu0 0
        %1719 = vmatpush1.bf16.xpose.msra.mxu0 0
        %1720 = vmatprep.subr.bf16.mxu0 0
        %1721 = vmatpush1.bf16.xpose.msra.mxu0 0
        %1722 = vmatprep.subr.bf16.mxu0 0
        %1723 = vmatpush1.bf16.xpose.msra.mxu0 0
        %1724 = vmatprep.subr.bf16.mxu0 0
        %1725 = vmatpush1.bf16.xpose.msra.mxu0 0
        %1726 = vmatprep.subr.bf16.mxu0 0
        %1727 = vmatpush1.bf16.xpose.msra.mxu0 0
        %1728 = vmatprep.subr.bf16.mxu0 0
        %1729 = vmatpush1.bf16.xpose.msra.mxu0 0
        %1730 = vmatprep.mubr.bf16.mxu0 0
        %1731 = vmatmul.mubr.bf16.gmra.mrb[0].mxu0 %v1693
        %v1732 = vpop.f32.mrb[0].mxu0
        %v1733 = vadd.f32 0.0, %v1732
        %v1734 = vpop.f32.mrb[0].mxu0
        %v1735 = vpop.f32.mrb[0].mxu0
        %v1736 = vadd.f32 0.0, %v1735
        %v1737 = vpop.f32.mrb[0].mxu0
        %1738 = vdwg.mxu0
        %1740 = vrot.lane.b32.xlu0 %v1205, 96
        %v1741 = vpop.permute.xlu0 %1740
        %1743 = vrot.lane.b32.xlu0 %v1209, 96
        %v1744 = vpop.permute.xlu0 %1743
        %v1746 = vsel %vm1216, %v1741, 0
        %v1749 = vsel %vm1216, %v1744, 0
        %1751 = vmatprep.subr.bf16.mxu0 0
        %1752 = vmatpush1.bf16.xpose.msra.mxu0 %v1749
        %1753 = vmatprep.subr.bf16.mxu0 0
        %1754 = vmatpush1.bf16.xpose.msra.mxu0 0
        %1755 = vmatprep.subr.bf16.mxu0 0
        %1756 = vmatpush1.bf16.xpose.msra.mxu0 0
        %1757 = vmatprep.subr.bf16.mxu0 0
        %1758 = vmatpush1.bf16.xpose.msra.mxu0 0
        %1759 = vmatprep.subr.bf16.mxu0 0
        %1760 = vmatpush1.bf16.xpose.msra.mxu0 0
        %1761 = vmatprep.subr.bf16.mxu0 0
        %1762 = vmatpush1.bf16.xpose.msra.mxu0 0
        %1763 = vmatprep.subr.bf16.mxu0 0
        %1764 = vmatpush1.bf16.xpose.msra.mxu0 0
        %1765 = vmatprep.subr.bf16.mxu0 0
        %1766 = vmatpush1.bf16.xpose.msra.mxu0 0
        %1767 = vmatprep.subr.bf16.mxu0 0
        %1768 = vmatpush1.bf16.xpose.msra.mxu0 0
        %1769 = vmatprep.subr.bf16.mxu0 0
        %1770 = vmatpush1.bf16.xpose.msra.mxu0 0
        %1771 = vmatprep.subr.bf16.mxu0 0
        %1772 = vmatpush1.bf16.xpose.msra.mxu0 0
        %1773 = vmatprep.subr.bf16.mxu0 0
        %1774 = vmatpush1.bf16.xpose.msra.mxu0 0
        %1775 = vmatprep.subr.bf16.mxu0 0
        %1776 = vmatpush1.bf16.xpose.msra.mxu0 0
        %1777 = vmatprep.subr.bf16.mxu0 0
        %1778 = vmatpush1.bf16.xpose.msra.mxu0 0
        %1779 = vmatprep.subr.bf16.mxu0 0
        %1780 = vmatpush1.bf16.xpose.msra.mxu0 0
        %1781 = vmatprep.subr.bf16.mxu0 0
        %1782 = vmatpush1.bf16.xpose.msra.mxu0 0
        %1783 = vmatprep.mubr.bf16.mxu0 0
        %1784 = vmatmul.mubr.bf16.gmra.mrb[0].mxu0 %v1746
        %v1785 = vpop.f32.mrb[0].mxu0
        %v1786 = vadd.f32 0.0, %v1785
        %v1787 = vpop.f32.mrb[0].mxu0
        %v1788 = vpop.f32.mrb[0].mxu0
        %v1789 = vadd.f32 0.0, %v1788
        %v1790 = vpop.f32.mrb[0].mxu0
        %1791 = vdwg.mxu0
        %1793 = vrot.lane.b32.xlu0 %v1206, 96
        %v1794 = vpop.permute.xlu0 %1793
        %1796 = vrot.lane.b32.xlu0 %v1210, 96
        %v1797 = vpop.permute.xlu0 %1796
        %v1799 = vsel %vm1216, %v1794, 0
        %v1802 = vsel %vm1216, %v1797, 0
        %1804 = vmatprep.subr.bf16.mxu0 0
        %1805 = vmatpush1.bf16.xpose.msra.mxu0 %v1802
        %1806 = vmatprep.subr.bf16.mxu0 0
        %1807 = vmatpush1.bf16.xpose.msra.mxu0 0
        %1808 = vmatprep.subr.bf16.mxu0 0
        %1809 = vmatpush1.bf16.xpose.msra.mxu0 0
        %1810 = vmatprep.subr.bf16.mxu0 0
        %1811 = vmatpush1.bf16.xpose.msra.mxu0 0
        %1812 = vmatprep.subr.bf16.mxu0 0
        %1813 = vmatpush1.bf16.xpose.msra.mxu0 0
        %1814 = vmatprep.subr.bf16.mxu0 0
        %1815 = vmatpush1.bf16.xpose.msra.mxu0 0
        %1816 = vmatprep.subr.bf16.mxu0 0
        %1817 = vmatpush1.bf16.xpose.msra.mxu0 0
        %1818 = vmatprep.subr.bf16.mxu0 0
        %1819 = vmatpush1.bf16.xpose.msra.mxu0 0
        %1820 = vmatprep.subr.bf16.mxu0 0
        %1821 = vmatpush1.bf16.xpose.msra.mxu0 0
        %1822 = vmatprep.subr.bf16.mxu0 0
        %1823 = vmatpush1.bf16.xpose.msra.mxu0 0
        %1824 = vmatprep.subr.bf16.mxu0 0
        %1825 = vmatpush1.bf16.xpose.msra.mxu0 0
        %1826 = vmatprep.subr.bf16.mxu0 0
        %1827 = vmatpush1.bf16.xpose.msra.mxu0 0
        %1828 = vmatprep.subr.bf16.mxu0 0
        %1829 = vmatpush1.bf16.xpose.msra.mxu0 0
        %1830 = vmatprep.subr.bf16.mxu0 0
        %1831 = vmatpush1.bf16.xpose.msra.mxu0 0
        %1832 = vmatprep.subr.bf16.mxu0 0
        %1833 = vmatpush1.bf16.xpose.msra.mxu0 0
        %1834 = vmatprep.subr.bf16.mxu0 0
        %1835 = vmatpush1.bf16.xpose.msra.mxu0 0
        %1836 = vmatprep.mubr.bf16.mxu0 0
        %1837 = vmatmul.mubr.bf16.gmra.mrb[0].mxu0 %v1799
        %v1838 = vpop.f32.mrb[0].mxu0
        %v1839 = vadd.f32 0.0, %v1838
        %v1840 = vpop.f32.mrb[0].mxu0
        %v1841 = vpop.f32.mrb[0].mxu0
        %v1842 = vadd.f32 0.0, %v1841
        %v1843 = vpop.f32.mrb[0].mxu0
        %1844 = vdwg.mxu0
        %1846 = vrot.lane.b32.xlu0 %v1207, 96
        %v1847 = vpop.permute.xlu0 %1846
        %1849 = vrot.lane.b32.xlu0 %v1211, 96
        %v1850 = vpop.permute.xlu0 %1849
        %v1852 = vsel %vm1216, %v1847, 0
        %v1855 = vsel %vm1216, %v1850, 0
        %1857 = vmatprep.subr.bf16.mxu0 0
        %1858 = vmatpush1.bf16.xpose.msra.mxu0 %v1855
        %1859 = vmatprep.subr.bf16.mxu0 0
        %1860 = vmatpush1.bf16.xpose.msra.mxu0 0
        %1861 = vmatprep.subr.bf16.mxu0 0
        %1862 = vmatpush1.bf16.xpose.msra.mxu0 0
        %1863 = vmatprep.subr.bf16.mxu0 0
        %1864 = vmatpush1.bf16.xpose.msra.mxu0 0
        %1865 = vmatprep.subr.bf16.mxu0 0
        %1866 = vmatpush1.bf16.xpose.msra.mxu0 0
        %1867 = vmatprep.subr.bf16.mxu0 0
        %1868 = vmatpush1.bf16.xpose.msra.mxu0 0
        %1869 = vmatprep.subr.bf16.mxu0 0
        %1870 = vmatpush1.bf16.xpose.msra.mxu0 0
        %1871 = vmatprep.subr.bf16.mxu0 0
        %1872 = vmatpush1.bf16.xpose.msra.mxu0 0
        %1873 = vmatprep.subr.bf16.mxu0 0
        %1874 = vmatpush1.bf16.xpose.msra.mxu0 0
        %1875 = vmatprep.subr.bf16.mxu0 0
        %1876 = vmatpush1.bf16.xpose.msra.mxu0 0
        %1877 = vmatprep.subr.bf16.mxu0 0
        %1878 = vmatpush1.bf16.xpose.msra.mxu0 0
        %1879 = vmatprep.subr.bf16.mxu0 0
        %1880 = vmatpush1.bf16.xpose.msra.mxu0 0
        %1881 = vmatprep.subr.bf16.mxu0 0
        %1882 = vmatpush1.bf16.xpose.msra.mxu0 0
        %1883 = vmatprep.subr.bf16.mxu0 0
        %1884 = vmatpush1.bf16.xpose.msra.mxu0 0
        %1885 = vmatprep.subr.bf16.mxu0 0
        %1886 = vmatpush1.bf16.xpose.msra.mxu0 0
        %1887 = vmatprep.subr.bf16.mxu0 0
        %1888 = vmatpush1.bf16.xpose.msra.mxu0 0
        %1889 = vmatprep.mubr.bf16.mxu0 0
        %1890 = vmatmul.mubr.bf16.gmra.mrb[0].mxu0 %v1852
        %v1891 = vpop.f32.mrb[0].mxu0
        %v1892 = vadd.f32 0.0, %v1891
        %v1893 = vpop.f32.mrb[0].mxu0
        %v1894 = vpop.f32.mrb[0].mxu0
        %v1895 = vadd.f32 0.0, %v1894
        %v1896 = vpop.f32.mrb[0].mxu0
        %1897 = vdwg.mxu0
        %v1898 = vsel %vm1407, %v1733, -1e+30
        %v1899 = vsel %vm1408, %v1736, -1e+30
        %v1900 = vsel %vm1407, %v1786, -1e+30
        %v1901 = vsel %vm1408, %v1789, -1e+30
        %v1902 = vsel %vm1407, %v1839, -1e+30
        %v1903 = vsel %vm1408, %v1842, -1e+30
        %v1904 = vsel %vm1407, %v1892, -1e+30
        %v1905 = vsel %vm1408, %v1895, -1e+30
        %v1906 = vsel %vm1417, %v1898, -inf
        %1907 = vmax.xlane.f32.xlu0 %v1906
        %v1908 = vpop.xlane.xlu0 %1907
        %v1909 = vsel %vm1417, %v1899, -inf
        %1910 = vmax.xlane.f32.xlu0 %v1909
        %v1911 = vpop.xlane.xlu0 %1910
        %v1912 = vsel %vm1417, %v1900, -inf
        %1913 = vmax.xlane.f32.xlu0 %v1912
        %v1914 = vpop.xlane.xlu0 %1913
        %v1915 = vsel %vm1417, %v1901, -inf
        %1916 = vmax.xlane.f32.xlu0 %v1915
        %v1917 = vpop.xlane.xlu0 %1916
        %v1918 = vsel %vm1417, %v1902, -inf
        %1919 = vmax.xlane.f32.xlu0 %v1918
        %v1920 = vpop.xlane.xlu0 %1919
        %v1921 = vsel %vm1417, %v1903, -inf
        %1922 = vmax.xlane.f32.xlu0 %v1921
        %v1923 = vpop.xlane.xlu0 %1922
        %v1924 = vsel %vm1417, %v1904, -inf
        %1925 = vmax.xlane.f32.xlu0 %v1924
        %v1926 = vpop.xlane.xlu0 %1925
        %v1927 = vsel %vm1417, %v1905, -inf
        %1928 = vmax.xlane.f32.xlu0 %v1927
        %v1929 = vpop.xlane.xlu0 %1928
        %v1930 = vsub.f32 %v1898, %v1908
        %v1931 = vsub.f32 %v1899, %v1911
        %v1932 = vsub.f32 %v1900, %v1914
        %v1933 = vsub.f32 %v1901, %v1917
        %v1934 = vsub.f32 %v1902, %v1920
        %v1935 = vsub.f32 %v1903, %v1923
        %v1936 = vsub.f32 %v1904, %v1926
        %v1937 = vsub.f32 %v1905, %v1929
        %v1938 = vmul.f32 %v1930, 1.442695
        %v1939 = vpow.pop %v1938
        %v1940 = vmul.f32 %v1931, 1.442695
        %v1941 = vpow.pop %v1940
        %v1942 = vmul.f32 %v1932, 1.442695
        %v1943 = vpow.pop %v1942
        %v1944 = vmul.f32 %v1933, 1.442695
        %v1945 = vpow.pop %v1944
        %v1946 = vmul.f32 %v1934, 1.442695
        %v1947 = vpow.pop %v1946
        %v1948 = vmul.f32 %v1935, 1.442695
        %v1949 = vpow.pop %v1948
        %v1950 = vmul.f32 %v1936, 1.442695
        %v1951 = vpow.pop %v1950
        %v1952 = vmul.f32 %v1937, 1.442695
        %v1953 = vpow.pop %v1952
        %v1954 = vsel %vm1417, %v1939, 0.0
        %1955 = vadd.xlane.f32.xlu0 %v1954
        %v1956 = vpop.xlane.xlu0 %1955
        %v1957 = vsel %vm1417, %v1941, 0.0
        %1958 = vadd.xlane.f32.xlu0 %v1957
        %v1959 = vpop.xlane.xlu0 %1958
        %v1960 = vsel %vm1417, %v1943, 0.0
        %1961 = vadd.xlane.f32.xlu0 %v1960
        %v1962 = vpop.xlane.xlu0 %1961
        %v1963 = vsel %vm1417, %v1945, 0.0
        %1964 = vadd.xlane.f32.xlu0 %v1963
        %v1965 = vpop.xlane.xlu0 %1964
        %v1966 = vsel %vm1417, %v1947, 0.0
        %1967 = vadd.xlane.f32.xlu0 %v1966
        %v1968 = vpop.xlane.xlu0 %1967
        %v1969 = vsel %vm1417, %v1949, 0.0
        %1970 = vadd.xlane.f32.xlu0 %v1969
        %v1971 = vpop.xlane.xlu0 %1970
        %v1972 = vsel %vm1417, %v1951, 0.0
        %1973 = vadd.xlane.f32.xlu0 %v1972
        %v1974 = vpop.xlane.xlu0 %1973
        %v1975 = vsel %vm1417, %v1953, 0.0
        %1976 = vadd.xlane.f32.xlu0 %v1975
        %v1977 = vpop.xlane.xlu0 %1976
        %v1978 = vrcp.pop %v1956
        %v1979 = vrcp.pop %v1959
        %v1980 = vrcp.pop %v1962
        %v1981 = vrcp.pop %v1965
        %v1982 = vrcp.pop %v1968
        %v1983 = vrcp.pop %v1971
        %v1984 = vrcp.pop %v1974
        %v1985 = vrcp.pop %v1977
        %v1986 = vmul.f32 %v1939, %v1978
        %v1987 = vmul.f32 %v1941, %v1979
        %v1988 = vmul.f32 %v1943, %v1980
        %v1989 = vmul.f32 %v1945, %v1981
        %v1990 = vmul.f32 %v1947, %v1982
        %v1991 = vmul.f32 %v1949, %v1983
        %v1992 = vmul.f32 %v1951, %v1984
        %v1993 = vmul.f32 %v1953, %v1985
        %v1994 = vpack.c.bf16 %v1987, %v1986
        %v1995 = vpack.c.bf16 %v1989, %v1988
        %v1996 = vpack.c.bf16 %v1991, %v1990
        %v1997 = vpack.c.bf16 %v1993, %v1992
        %1999 = vrot.lane.b32.xlu0 %v1212, 96
        %v2000 = vpop.permute.xlu0 %1999
        %v2003 = vsel %vm1417, %v1994, 0
        %2005 = vmatprep.subr.bf16.mxu0 0
        %2006 = vmatpush1.bf16.msra.mxu0 %v2000
        %2007 = vmatprep.subr.bf16.mxu0 0
        %2008 = vmatpush1.bf16.msra.mxu0 0
        %2009 = vmatprep.subr.bf16.mxu0 0
        %2010 = vmatpush1.bf16.msra.mxu0 0
        %2011 = vmatprep.subr.bf16.mxu0 0
        %2012 = vmatpush1.bf16.msra.mxu0 0
        %2013 = vmatprep.subr.bf16.mxu0 0
        %2014 = vmatpush1.bf16.msra.mxu0 0
        %2015 = vmatprep.subr.bf16.mxu0 0
        %2016 = vmatpush1.bf16.msra.mxu0 0
        %2017 = vmatprep.subr.bf16.mxu0 0
        %2018 = vmatpush1.bf16.msra.mxu0 0
        %2019 = vmatprep.subr.bf16.mxu0 0
        %2020 = vmatpush1.bf16.msra.mxu0 0
        %2021 = vmatprep.subr.bf16.mxu0 0
        %2022 = vmatpush1.bf16.msra.mxu0 0
        %2023 = vmatprep.subr.bf16.mxu0 0
        %2024 = vmatpush1.bf16.msra.mxu0 0
        %2025 = vmatprep.subr.bf16.mxu0 0
        %2026 = vmatpush1.bf16.msra.mxu0 0
        %2027 = vmatprep.subr.bf16.mxu0 0
        %2028 = vmatpush1.bf16.msra.mxu0 0
        %2029 = vmatprep.subr.bf16.mxu0 0
        %2030 = vmatpush1.bf16.msra.mxu0 0
        %2031 = vmatprep.subr.bf16.mxu0 0
        %2032 = vmatpush1.bf16.msra.mxu0 0
        %2033 = vmatprep.subr.bf16.mxu0 0
        %2034 = vmatpush1.bf16.msra.mxu0 0
        %2035 = vmatprep.subr.bf16.mxu0 0
        %2036 = vmatpush1.bf16.msra.mxu0 0
        %2037 = vmatprep.mubr.bf16.mxu0 0
        %2038 = vmatmul.mubr.bf16.gmra.mrb[0].mxu0 %v2003
        %v2039 = vpop.f32.mrb[0].mxu0
        %v2040 = vadd.f32 0.0, %v2039
        %v2041 = vpop.f32.mrb[0].mxu0
        %v2042 = vpop.f32.mrb[0].mxu0
        %v2043 = vadd.f32 0.0, %v2042
        %v2044 = vpop.f32.mrb[0].mxu0
        %2045 = vdwg.mxu0
        %2047 = vrot.lane.b32.xlu0 %v1213, 96
        %v2048 = vpop.permute.xlu0 %2047
        %v2051 = vsel %vm1417, %v1995, 0
        %2053 = vmatprep.subr.bf16.mxu0 0
        %2054 = vmatpush1.bf16.msra.mxu0 %v2048
        %2055 = vmatprep.subr.bf16.mxu0 0
        %2056 = vmatpush1.bf16.msra.mxu0 0
        %2057 = vmatprep.subr.bf16.mxu0 0
        %2058 = vmatpush1.bf16.msra.mxu0 0
        %2059 = vmatprep.subr.bf16.mxu0 0
        %2060 = vmatpush1.bf16.msra.mxu0 0
        %2061 = vmatprep.subr.bf16.mxu0 0
        %2062 = vmatpush1.bf16.msra.mxu0 0
        %2063 = vmatprep.subr.bf16.mxu0 0
        %2064 = vmatpush1.bf16.msra.mxu0 0
        %2065 = vmatprep.subr.bf16.mxu0 0
        %2066 = vmatpush1.bf16.msra.mxu0 0
        %2067 = vmatprep.subr.bf16.mxu0 0
        %2068 = vmatpush1.bf16.msra.mxu0 0
        %2069 = vmatprep.subr.bf16.mxu0 0
        %2070 = vmatpush1.bf16.msra.mxu0 0
        %2071 = vmatprep.subr.bf16.mxu0 0
        %2072 = vmatpush1.bf16.msra.mxu0 0
        %2073 = vmatprep.subr.bf16.mxu0 0
        %2074 = vmatpush1.bf16.msra.mxu0 0
        %2075 = vmatprep.subr.bf16.mxu0 0
        %2076 = vmatpush1.bf16.msra.mxu0 0
        %2077 = vmatprep.subr.bf16.mxu0 0
        %2078 = vmatpush1.bf16.msra.mxu0 0
        %2079 = vmatprep.subr.bf16.mxu0 0
        %2080 = vmatpush1.bf16.msra.mxu0 0
        %2081 = vmatprep.subr.bf16.mxu0 0
        %2082 = vmatpush1.bf16.msra.mxu0 0
        %2083 = vmatprep.subr.bf16.mxu0 0
        %2084 = vmatpush1.bf16.msra.mxu0 0
        %2085 = vmatprep.mubr.bf16.mxu0 0
        %2086 = vmatmul.mubr.bf16.gmra.mrb[0].mxu0 %v2051
        %v2087 = vpop.f32.mrb[0].mxu0
        %v2088 = vadd.f32 0.0, %v2087
        %v2089 = vpop.f32.mrb[0].mxu0
        %v2090 = vpop.f32.mrb[0].mxu0
        %v2091 = vadd.f32 0.0, %v2090
        %v2092 = vpop.f32.mrb[0].mxu0
        %2093 = vdwg.mxu0
        %2095 = vrot.lane.b32.xlu0 %v1214, 96
        %v2096 = vpop.permute.xlu0 %2095
        %v2099 = vsel %vm1417, %v1996, 0
        %2101 = vmatprep.subr.bf16.mxu0 0
        %2102 = vmatpush1.bf16.msra.mxu0 %v2096
        %2103 = vmatprep.subr.bf16.mxu0 0
        %2104 = vmatpush1.bf16.msra.mxu0 0
        %2105 = vmatprep.subr.bf16.mxu0 0
        %2106 = vmatpush1.bf16.msra.mxu0 0
        %2107 = vmatprep.subr.bf16.mxu0 0
        %2108 = vmatpush1.bf16.msra.mxu0 0
        %2109 = vmatprep.subr.bf16.mxu0 0
        %2110 = vmatpush1.bf16.msra.mxu0 0
        %2111 = vmatprep.subr.bf16.mxu0 0
        %2112 = vmatpush1.bf16.msra.mxu0 0
        %2113 = vmatprep.subr.bf16.mxu0 0
        %2114 = vmatpush1.bf16.msra.mxu0 0
        %2115 = vmatprep.subr.bf16.mxu0 0
        %2116 = vmatpush1.bf16.msra.mxu0 0
        %2117 = vmatprep.subr.bf16.mxu0 0
        %2118 = vmatpush1.bf16.msra.mxu0 0
        %2119 = vmatprep.subr.bf16.mxu0 0
        %2120 = vmatpush1.bf16.msra.mxu0 0
        %2121 = vmatprep.subr.bf16.mxu0 0
        %2122 = vmatpush1.bf16.msra.mxu0 0
        %2123 = vmatprep.subr.bf16.mxu0 0
        %2124 = vmatpush1.bf16.msra.mxu0 0
        %2125 = vmatprep.subr.bf16.mxu0 0
        %2126 = vmatpush1.bf16.msra.mxu0 0
        %2127 = vmatprep.subr.bf16.mxu0 0
        %2128 = vmatpush1.bf16.msra.mxu0 0
        %2129 = vmatprep.subr.bf16.mxu0 0
        %2130 = vmatpush1.bf16.msra.mxu0 0
        %2131 = vmatprep.subr.bf16.mxu0 0
        %2132 = vmatpush1.bf16.msra.mxu0 0
        %2133 = vmatprep.mubr.bf16.mxu0 0
        %2134 = vmatmul.mubr.bf16.gmra.mrb[0].mxu0 %v2099
        %v2135 = vpop.f32.mrb[0].mxu0
        %v2136 = vadd.f32 0.0, %v2135
        %v2137 = vpop.f32.mrb[0].mxu0
        %v2138 = vpop.f32.mrb[0].mxu0
        %v2139 = vadd.f32 0.0, %v2138
        %v2140 = vpop.f32.mrb[0].mxu0
        %2141 = vdwg.mxu0
        %2143 = vrot.lane.b32.xlu0 %v1215, 96
        %v2144 = vpop.permute.xlu0 %2143
        %v2147 = vsel %vm1417, %v1997, 0
        %2149 = vmatprep.subr.bf16.mxu0 0
        %2150 = vmatpush1.bf16.msra.mxu0 %v2144
        %2151 = vmatprep.subr.bf16.mxu0 0
        %2152 = vmatpush1.bf16.msra.mxu0 0
        %2153 = vmatprep.subr.bf16.mxu0 0
        %2154 = vmatpush1.bf16.msra.mxu0 0
        %2155 = vmatprep.subr.bf16.mxu0 0
        %2156 = vmatpush1.bf16.msra.mxu0 0
        %2157 = vmatprep.subr.bf16.mxu0 0
        %2158 = vmatpush1.bf16.msra.mxu0 0
        %2159 = vmatprep.subr.bf16.mxu0 0
        %2160 = vmatpush1.bf16.msra.mxu0 0
        %2161 = vmatprep.subr.bf16.mxu0 0
        %2162 = vmatpush1.bf16.msra.mxu0 0
        %2163 = vmatprep.subr.bf16.mxu0 0
        %2164 = vmatpush1.bf16.msra.mxu0 0
        %2165 = vmatprep.subr.bf16.mxu0 0
        %2166 = vmatpush1.bf16.msra.mxu0 0
        %2167 = vmatprep.subr.bf16.mxu0 0
        %2168 = vmatpush1.bf16.msra.mxu0 0
        %2169 = vmatprep.subr.bf16.mxu0 0
        %2170 = vmatpush1.bf16.msra.mxu0 0
        %2171 = vmatprep.subr.bf16.mxu0 0
        %2172 = vmatpush1.bf16.msra.mxu0 0
        %2173 = vmatprep.subr.bf16.mxu0 0
        %2174 = vmatpush1.bf16.msra.mxu0 0
        %2175 = vmatprep.subr.bf16.mxu0 0
        %2176 = vmatpush1.bf16.msra.mxu0 0
        %2177 = vmatprep.subr.bf16.mxu0 0
        %2178 = vmatpush1.bf16.msra.mxu0 0
        %2179 = vmatprep.subr.bf16.mxu0 0
        %2180 = vmatpush1.bf16.msra.mxu0 0
        %2181 = vmatprep.mubr.bf16.mxu0 0
        %2182 = vmatmul.mubr.bf16.gmra.mrb[0].mxu0 %v2147
        %v2183 = vpop.f32.mrb[0].mxu0
        %v2184 = vadd.f32 0.0, %v2183
        %v2185 = vpop.f32.mrb[0].mxu0
        %v2186 = vpop.f32.mrb[0].mxu0
        %v2187 = vadd.f32 0.0, %v2186
        %v2188 = vpop.f32.mrb[0].mxu0
        %2189 = vdwg.mxu0
        %2190 = vrot.lane.b32.xlu0 %v1204, 64
        %v2191 = vpop.permute.xlu0 %2190
        %2192 = vrot.lane.b32.xlu0 %v1208, 64
        %v2193 = vpop.permute.xlu0 %2192
        %v2195 = vsel %vm1216, %v2191, 0
        %v2198 = vsel %vm1216, %v2193, 0
        %2200 = vmatprep.subr.bf16.mxu0 0
        %2201 = vmatpush1.bf16.xpose.msra.mxu0 %v2198
        %2202 = vmatprep.subr.bf16.mxu0 0
        %2203 = vmatpush1.bf16.xpose.msra.mxu0 0
        %2204 = vmatprep.subr.bf16.mxu0 0
        %2205 = vmatpush1.bf16.xpose.msra.mxu0 0
        %2206 = vmatprep.subr.bf16.mxu0 0
        %2207 = vmatpush1.bf16.xpose.msra.mxu0 0
        %2208 = vmatprep.subr.bf16.mxu0 0
        %2209 = vmatpush1.bf16.xpose.msra.mxu0 0
        %2210 = vmatprep.subr.bf16.mxu0 0
        %2211 = vmatpush1.bf16.xpose.msra.mxu0 0
        %2212 = vmatprep.subr.bf16.mxu0 0
        %2213 = vmatpush1.bf16.xpose.msra.mxu0 0
        %2214 = vmatprep.subr.bf16.mxu0 0
        %2215 = vmatpush1.bf16.xpose.msra.mxu0 0
        %2216 = vmatprep.subr.bf16.mxu0 0
        %2217 = vmatpush1.bf16.xpose.msra.mxu0 0
        %2218 = vmatprep.subr.bf16.mxu0 0
        %2219 = vmatpush1.bf16.xpose.msra.mxu0 0
        %2220 = vmatprep.subr.bf16.mxu0 0
        %2221 = vmatpush1.bf16.xpose.msra.mxu0 0
        %2222 = vmatprep.subr.bf16.mxu0 0
        %2223 = vmatpush1.bf16.xpose.msra.mxu0 0
        %2224 = vmatprep.subr.bf16.mxu0 0
        %2225 = vmatpush1.bf16.xpose.msra.mxu0 0
        %2226 = vmatprep.subr.bf16.mxu0 0
        %2227 = vmatpush1.bf16.xpose.msra.mxu0 0
        %2228 = vmatprep.subr.bf16.mxu0 0
        %2229 = vmatpush1.bf16.xpose.msra.mxu0 0
        %2230 = vmatprep.subr.bf16.mxu0 0
        %2231 = vmatpush1.bf16.xpose.msra.mxu0 0
        %2232 = vmatprep.mubr.bf16.mxu0 0
        %2233 = vmatmul.mubr.bf16.gmra.mrb[0].mxu0 %v2195
        %v2234 = vpop.f32.mrb[0].mxu0
        %v2235 = vadd.f32 0.0, %v2234
        %v2236 = vpop.f32.mrb[0].mxu0
        %v2237 = vpop.f32.mrb[0].mxu0
        %v2238 = vadd.f32 0.0, %v2237
        %v2239 = vpop.f32.mrb[0].mxu0
        %2240 = vdwg.mxu0
        %2241 = vrot.lane.b32.xlu0 %v1205, 64
        %v2242 = vpop.permute.xlu0 %2241
        %2243 = vrot.lane.b32.xlu0 %v1209, 64
        %v2244 = vpop.permute.xlu0 %2243
        %v2246 = vsel %vm1216, %v2242, 0
        %v2249 = vsel %vm1216, %v2244, 0
        %2251 = vmatprep.subr.bf16.mxu0 0
        %2252 = vmatpush1.bf16.xpose.msra.mxu0 %v2249
        %2253 = vmatprep.subr.bf16.mxu0 0
        %2254 = vmatpush1.bf16.xpose.msra.mxu0 0
        %2255 = vmatprep.subr.bf16.mxu0 0
        %2256 = vmatpush1.bf16.xpose.msra.mxu0 0
        %2257 = vmatprep.subr.bf16.mxu0 0
        %2258 = vmatpush1.bf16.xpose.msra.mxu0 0
        %2259 = vmatprep.subr.bf16.mxu0 0
        %2260 = vmatpush1.bf16.xpose.msra.mxu0 0
        %2261 = vmatprep.subr.bf16.mxu0 0
        %2262 = vmatpush1.bf16.xpose.msra.mxu0 0
        %2263 = vmatprep.subr.bf16.mxu0 0
        %2264 = vmatpush1.bf16.xpose.msra.mxu0 0
        %2265 = vmatprep.subr.bf16.mxu0 0
        %2266 = vmatpush1.bf16.xpose.msra.mxu0 0
        %2267 = vmatprep.subr.bf16.mxu0 0
        %2268 = vmatpush1.bf16.xpose.msra.mxu0 0
        %2269 = vmatprep.subr.bf16.mxu0 0
        %2270 = vmatpush1.bf16.xpose.msra.mxu0 0
        %2271 = vmatprep.subr.bf16.mxu0 0
        %2272 = vmatpush1.bf16.xpose.msra.mxu0 0
        %2273 = vmatprep.subr.bf16.mxu0 0
        %2274 = vmatpush1.bf16.xpose.msra.mxu0 0
        %2275 = vmatprep.subr.bf16.mxu0 0
        %2276 = vmatpush1.bf16.xpose.msra.mxu0 0
        %2277 = vmatprep.subr.bf16.mxu0 0
        %2278 = vmatpush1.bf16.xpose.msra.mxu0 0
        %2279 = vmatprep.subr.bf16.mxu0 0
        %2280 = vmatpush1.bf16.xpose.msra.mxu0 0
        %2281 = vmatprep.subr.bf16.mxu0 0
        %2282 = vmatpush1.bf16.xpose.msra.mxu0 0
        %2283 = vmatprep.mubr.bf16.mxu0 0
        %2284 = vmatmul.mubr.bf16.gmra.mrb[0].mxu0 %v2246
        %v2285 = vpop.f32.mrb[0].mxu0
        %v2286 = vadd.f32 0.0, %v2285
        %v2287 = vpop.f32.mrb[0].mxu0
        %v2288 = vpop.f32.mrb[0].mxu0
        %v2289 = vadd.f32 0.0, %v2288
        %v2290 = vpop.f32.mrb[0].mxu0
        %2291 = vdwg.mxu0
        %2292 = vrot.lane.b32.xlu0 %v1206, 64
        %v2293 = vpop.permute.xlu0 %2292
        %2294 = vrot.lane.b32.xlu0 %v1210, 64
        %v2295 = vpop.permute.xlu0 %2294
        %v2297 = vsel %vm1216, %v2293, 0
        %v2300 = vsel %vm1216, %v2295, 0
        %2302 = vmatprep.subr.bf16.mxu0 0
        %2303 = vmatpush1.bf16.xpose.msra.mxu0 %v2300
        %2304 = vmatprep.subr.bf16.mxu0 0
        %2305 = vmatpush1.bf16.xpose.msra.mxu0 0
        %2306 = vmatprep.subr.bf16.mxu0 0
        %2307 = vmatpush1.bf16.xpose.msra.mxu0 0
        %2308 = vmatprep.subr.bf16.mxu0 0
        %2309 = vmatpush1.bf16.xpose.msra.mxu0 0
        %2310 = vmatprep.subr.bf16.mxu0 0
        %2311 = vmatpush1.bf16.xpose.msra.mxu0 0
        %2312 = vmatprep.subr.bf16.mxu0 0
        %2313 = vmatpush1.bf16.xpose.msra.mxu0 0
        %2314 = vmatprep.subr.bf16.mxu0 0
        %2315 = vmatpush1.bf16.xpose.msra.mxu0 0
        %2316 = vmatprep.subr.bf16.mxu0 0
        %2317 = vmatpush1.bf16.xpose.msra.mxu0 0
        %2318 = vmatprep.subr.bf16.mxu0 0
        %2319 = vmatpush1.bf16.xpose.msra.mxu0 0
        %2320 = vmatprep.subr.bf16.mxu0 0
        %2321 = vmatpush1.bf16.xpose.msra.mxu0 0
        %2322 = vmatprep.subr.bf16.mxu0 0
        %2323 = vmatpush1.bf16.xpose.msra.mxu0 0
        %2324 = vmatprep.subr.bf16.mxu0 0
        %2325 = vmatpush1.bf16.xpose.msra.mxu0 0
        %2326 = vmatprep.subr.bf16.mxu0 0
        %2327 = vmatpush1.bf16.xpose.msra.mxu0 0
        %2328 = vmatprep.subr.bf16.mxu0 0
        %2329 = vmatpush1.bf16.xpose.msra.mxu0 0
        %2330 = vmatprep.subr.bf16.mxu0 0
        %2331 = vmatpush1.bf16.xpose.msra.mxu0 0
        %2332 = vmatprep.subr.bf16.mxu0 0
        %2333 = vmatpush1.bf16.xpose.msra.mxu0 0
        %2334 = vmatprep.mubr.bf16.mxu0 0
        %2335 = vmatmul.mubr.bf16.gmra.mrb[0].mxu0 %v2297
        %v2336 = vpop.f32.mrb[0].mxu0
        %v2337 = vadd.f32 0.0, %v2336
        %v2338 = vpop.f32.mrb[0].mxu0
        %v2339 = vpop.f32.mrb[0].mxu0
        %v2340 = vadd.f32 0.0, %v2339
        %v2341 = vpop.f32.mrb[0].mxu0
        %2342 = vdwg.mxu0
        %2343 = vrot.lane.b32.xlu0 %v1207, 64
        %v2344 = vpop.permute.xlu0 %2343
        %2345 = vrot.lane.b32.xlu0 %v1211, 64
        %v2346 = vpop.permute.xlu0 %2345
        %v2348 = vsel %vm1216, %v2344, 0
        %v2351 = vsel %vm1216, %v2346, 0
        %2353 = vmatprep.subr.bf16.mxu0 0
        %2354 = vmatpush1.bf16.xpose.msra.mxu0 %v2351
        %2355 = vmatprep.subr.bf16.mxu0 0
        %2356 = vmatpush1.bf16.xpose.msra.mxu0 0
        %2357 = vmatprep.subr.bf16.mxu0 0
        %2358 = vmatpush1.bf16.xpose.msra.mxu0 0
        %2359 = vmatprep.subr.bf16.mxu0 0
        %2360 = vmatpush1.bf16.xpose.msra.mxu0 0
        %2361 = vmatprep.subr.bf16.mxu0 0
        %2362 = vmatpush1.bf16.xpose.msra.mxu0 0
        %2363 = vmatprep.subr.bf16.mxu0 0
        %2364 = vmatpush1.bf16.xpose.msra.mxu0 0
        %2365 = vmatprep.subr.bf16.mxu0 0
        %2366 = vmatpush1.bf16.xpose.msra.mxu0 0
        %2367 = vmatprep.subr.bf16.mxu0 0
        %2368 = vmatpush1.bf16.xpose.msra.mxu0 0
        %2369 = vmatprep.subr.bf16.mxu0 0
        %2370 = vmatpush1.bf16.xpose.msra.mxu0 0
        %2371 = vmatprep.subr.bf16.mxu0 0
        %2372 = vmatpush1.bf16.xpose.msra.mxu0 0
        %2373 = vmatprep.subr.bf16.mxu0 0
        %2374 = vmatpush1.bf16.xpose.msra.mxu0 0
        %2375 = vmatprep.subr.bf16.mxu0 0
        %2376 = vmatpush1.bf16.xpose.msra.mxu0 0
        %2377 = vmatprep.subr.bf16.mxu0 0
        %2378 = vmatpush1.bf16.xpose.msra.mxu0 0
        %2379 = vmatprep.subr.bf16.mxu0 0
        %2380 = vmatpush1.bf16.xpose.msra.mxu0 0
        %2381 = vmatprep.subr.bf16.mxu0 0
        %2382 = vmatpush1.bf16.xpose.msra.mxu0 0
        %2383 = vmatprep.subr.bf16.mxu0 0
        %2384 = vmatpush1.bf16.xpose.msra.mxu0 0
        %2385 = vmatprep.mubr.bf16.mxu0 0
        %2386 = vmatmul.mubr.bf16.gmra.mrb[0].mxu0 %v2348
        %v2387 = vpop.f32.mrb[0].mxu0
        %v2388 = vadd.f32 0.0, %v2387
        %v2389 = vpop.f32.mrb[0].mxu0
        %v2390 = vpop.f32.mrb[0].mxu0
        %v2391 = vadd.f32 0.0, %v2390
        %v2392 = vpop.f32.mrb[0].mxu0
        %2393 = vdwg.mxu0
        %v2394 = vsel %vm1407, %v2235, -1e+30
        %v2395 = vsel %vm1408, %v2238, -1e+30
        %v2396 = vsel %vm1407, %v2286, -1e+30
        %v2397 = vsel %vm1408, %v2289, -1e+30
        %v2398 = vsel %vm1407, %v2337, -1e+30
        %v2399 = vsel %vm1408, %v2340, -1e+30
        %v2400 = vsel %vm1407, %v2388, -1e+30
        %v2401 = vsel %vm1408, %v2391, -1e+30
        %v2402 = vsel %vm1417, %v2394, -inf
        %2403 = vmax.xlane.f32.xlu0 %v2402
        %v2404 = vpop.xlane.xlu0 %2403
        %v2405 = vsel %vm1417, %v2395, -inf
        %2406 = vmax.xlane.f32.xlu0 %v2405
        %v2407 = vpop.xlane.xlu0 %2406
        %v2408 = vsel %vm1417, %v2396, -inf
        %2409 = vmax.xlane.f32.xlu0 %v2408
        %v2410 = vpop.xlane.xlu0 %2409
        %v2411 = vsel %vm1417, %v2397, -inf
        %2412 = vmax.xlane.f32.xlu0 %v2411
        %v2413 = vpop.xlane.xlu0 %2412
        %v2414 = vsel %vm1417, %v2398, -inf
        %2415 = vmax.xlane.f32.xlu0 %v2414
        %v2416 = vpop.xlane.xlu0 %2415
        %v2417 = vsel %vm1417, %v2399, -inf
        %2418 = vmax.xlane.f32.xlu0 %v2417
        %v2419 = vpop.xlane.xlu0 %2418
        %v2420 = vsel %vm1417, %v2400, -inf
        %2421 = vmax.xlane.f32.xlu0 %v2420
        %v2422 = vpop.xlane.xlu0 %2421
        %v2423 = vsel %vm1417, %v2401, -inf
        %2424 = vmax.xlane.f32.xlu0 %v2423
        %v2425 = vpop.xlane.xlu0 %2424
        %v2426 = vsub.f32 %v2394, %v2404
        %v2427 = vsub.f32 %v2395, %v2407
        %v2428 = vsub.f32 %v2396, %v2410
        %v2429 = vsub.f32 %v2397, %v2413
        %v2430 = vsub.f32 %v2398, %v2416
        %v2431 = vsub.f32 %v2399, %v2419
        %v2432 = vsub.f32 %v2400, %v2422
        %v2433 = vsub.f32 %v2401, %v2425
        %v2434 = vmul.f32 %v2426, 1.442695
        %v2435 = vpow.pop %v2434
        %v2436 = vmul.f32 %v2427, 1.442695
        %v2437 = vpow.pop %v2436
        %v2438 = vmul.f32 %v2428, 1.442695
        %v2439 = vpow.pop %v2438
        %v2440 = vmul.f32 %v2429, 1.442695
        %v2441 = vpow.pop %v2440
        %v2442 = vmul.f32 %v2430, 1.442695
        %v2443 = vpow.pop %v2442
        %v2444 = vmul.f32 %v2431, 1.442695
        %v2445 = vpow.pop %v2444
        %v2446 = vmul.f32 %v2432, 1.442695
        %v2447 = vpow.pop %v2446
        %v2448 = vmul.f32 %v2433, 1.442695
        %v2449 = vpow.pop %v2448
        %v2450 = vsel %vm1417, %v2435, 0.0
        %2451 = vadd.xlane.f32.xlu0 %v2450
        %v2452 = vpop.xlane.xlu0 %2451
        %v2453 = vsel %vm1417, %v2437, 0.0
        %2454 = vadd.xlane.f32.xlu0 %v2453
        %v2455 = vpop.xlane.xlu0 %2454
        %v2456 = vsel %vm1417, %v2439, 0.0
        %2457 = vadd.xlane.f32.xlu0 %v2456
        %v2458 = vpop.xlane.xlu0 %2457
        %v2459 = vsel %vm1417, %v2441, 0.0
        %2460 = vadd.xlane.f32.xlu0 %v2459
        %v2461 = vpop.xlane.xlu0 %2460
        %v2462 = vsel %vm1417, %v2443, 0.0
        %2463 = vadd.xlane.f32.xlu0 %v2462
        %v2464 = vpop.xlane.xlu0 %2463
        %v2465 = vsel %vm1417, %v2445, 0.0
        %2466 = vadd.xlane.f32.xlu0 %v2465
        %v2467 = vpop.xlane.xlu0 %2466
        %v2468 = vsel %vm1417, %v2447, 0.0
        %2469 = vadd.xlane.f32.xlu0 %v2468
        %v2470 = vpop.xlane.xlu0 %2469
        %v2471 = vsel %vm1417, %v2449, 0.0
        %2472 = vadd.xlane.f32.xlu0 %v2471
        %v2473 = vpop.xlane.xlu0 %2472
        %v2474 = vrcp.pop %v2452
        %v2475 = vrcp.pop %v2455
        %v2476 = vrcp.pop %v2458
        %v2477 = vrcp.pop %v2461
        %v2478 = vrcp.pop %v2464
        %v2479 = vrcp.pop %v2467
        %v2480 = vrcp.pop %v2470
        %v2481 = vrcp.pop %v2473
        %v2482 = vmul.f32 %v2435, %v2474
        %v2483 = vmul.f32 %v2437, %v2475
        %v2484 = vmul.f32 %v2439, %v2476
        %v2485 = vmul.f32 %v2441, %v2477
        %v2486 = vmul.f32 %v2443, %v2478
        %v2487 = vmul.f32 %v2445, %v2479
        %v2488 = vmul.f32 %v2447, %v2480
        %v2489 = vmul.f32 %v2449, %v2481
        %v2490 = vpack.c.bf16 %v2483, %v2482
        %v2491 = vpack.c.bf16 %v2485, %v2484
        %v2492 = vpack.c.bf16 %v2487, %v2486
        %v2493 = vpack.c.bf16 %v2489, %v2488
        %2494 = vrot.lane.b32.xlu0 %v1212, 64
        %v2495 = vpop.permute.xlu0 %2494
        %v2498 = vsel %vm1417, %v2490, 0
        %2500 = vmatprep.subr.bf16.mxu0 0
        %2501 = vmatpush1.bf16.msra.mxu0 %v2495
        %2502 = vmatprep.subr.bf16.mxu0 0
        %2503 = vmatpush1.bf16.msra.mxu0 0
        %2504 = vmatprep.subr.bf16.mxu0 0
        %2505 = vmatpush1.bf16.msra.mxu0 0
        %2506 = vmatprep.subr.bf16.mxu0 0
        %2507 = vmatpush1.bf16.msra.mxu0 0
        %2508 = vmatprep.subr.bf16.mxu0 0
        %2509 = vmatpush1.bf16.msra.mxu0 0
        %2510 = vmatprep.subr.bf16.mxu0 0
        %2511 = vmatpush1.bf16.msra.mxu0 0
        %2512 = vmatprep.subr.bf16.mxu0 0
        %2513 = vmatpush1.bf16.msra.mxu0 0
        %2514 = vmatprep.subr.bf16.mxu0 0
        %2515 = vmatpush1.bf16.msra.mxu0 0
        %2516 = vmatprep.subr.bf16.mxu0 0
        %2517 = vmatpush1.bf16.msra.mxu0 0
        %2518 = vmatprep.subr.bf16.mxu0 0
        %2519 = vmatpush1.bf16.msra.mxu0 0
        %2520 = vmatprep.subr.bf16.mxu0 0
        %2521 = vmatpush1.bf16.msra.mxu0 0
        %2522 = vmatprep.subr.bf16.mxu0 0
        %2523 = vmatpush1.bf16.msra.mxu0 0
        %2524 = vmatprep.subr.bf16.mxu0 0
        %2525 = vmatpush1.bf16.msra.mxu0 0
        %2526 = vmatprep.subr.bf16.mxu0 0
        %2527 = vmatpush1.bf16.msra.mxu0 0
        %2528 = vmatprep.subr.bf16.mxu0 0
        %2529 = vmatpush1.bf16.msra.mxu0 0
        %2530 = vmatprep.subr.bf16.mxu0 0
        %2531 = vmatpush1.bf16.msra.mxu0 0
        %2532 = vmatprep.mubr.bf16.mxu0 0
        %2533 = vmatmul.mubr.bf16.gmra.mrb[0].mxu0 %v2498
        %v2534 = vpop.f32.mrb[0].mxu0
        %v2535 = vadd.f32 0.0, %v2534
        %v2536 = vpop.f32.mrb[0].mxu0
        %v2537 = vpop.f32.mrb[0].mxu0
        %v2538 = vadd.f32 0.0, %v2537
        %v2539 = vpop.f32.mrb[0].mxu0
        %2540 = vdwg.mxu0
        %2541 = vrot.lane.b32.xlu0 %v1213, 64
        %v2542 = vpop.permute.xlu0 %2541
        %v2545 = vsel %vm1417, %v2491, 0
        %2547 = vmatprep.subr.bf16.mxu0 0
        %2548 = vmatpush1.bf16.msra.mxu0 %v2542
        %2549 = vmatprep.subr.bf16.mxu0 0
        %2550 = vmatpush1.bf16.msra.mxu0 0
        %2551 = vmatprep.subr.bf16.mxu0 0
        %2552 = vmatpush1.bf16.msra.mxu0 0
        %2553 = vmatprep.subr.bf16.mxu0 0
        %2554 = vmatpush1.bf16.msra.mxu0 0
        %2555 = vmatprep.subr.bf16.mxu0 0
        %2556 = vmatpush1.bf16.msra.mxu0 0
        %2557 = vmatprep.subr.bf16.mxu0 0
        %2558 = vmatpush1.bf16.msra.mxu0 0
        %2559 = vmatprep.subr.bf16.mxu0 0
        %2560 = vmatpush1.bf16.msra.mxu0 0
        %2561 = vmatprep.subr.bf16.mxu0 0
        %2562 = vmatpush1.bf16.msra.mxu0 0
        %2563 = vmatprep.subr.bf16.mxu0 0
        %2564 = vmatpush1.bf16.msra.mxu0 0
        %2565 = vmatprep.subr.bf16.mxu0 0
        %2566 = vmatpush1.bf16.msra.mxu0 0
        %2567 = vmatprep.subr.bf16.mxu0 0
        %2568 = vmatpush1.bf16.msra.mxu0 0
        %2569 = vmatprep.subr.bf16.mxu0 0
        %2570 = vmatpush1.bf16.msra.mxu0 0
        %2571 = vmatprep.subr.bf16.mxu0 0
        %2572 = vmatpush1.bf16.msra.mxu0 0
        %2573 = vmatprep.subr.bf16.mxu0 0
        %2574 = vmatpush1.bf16.msra.mxu0 0
        %2575 = vmatprep.subr.bf16.mxu0 0
        %2576 = vmatpush1.bf16.msra.mxu0 0
        %2577 = vmatprep.subr.bf16.mxu0 0
        %2578 = vmatpush1.bf16.msra.mxu0 0
        %2579 = vmatprep.mubr.bf16.mxu0 0
        %2580 = vmatmul.mubr.bf16.gmra.mrb[0].mxu0 %v2545
        %v2581 = vpop.f32.mrb[0].mxu0
        %v2582 = vadd.f32 0.0, %v2581
        %v2583 = vpop.f32.mrb[0].mxu0
        %v2584 = vpop.f32.mrb[0].mxu0
        %v2585 = vadd.f32 0.0, %v2584
        %v2586 = vpop.f32.mrb[0].mxu0
        %2587 = vdwg.mxu0
        %2588 = vrot.lane.b32.xlu0 %v1214, 64
        %v2589 = vpop.permute.xlu0 %2588
        %v2592 = vsel %vm1417, %v2492, 0
        %2594 = vmatprep.subr.bf16.mxu0 0
        %2595 = vmatpush1.bf16.msra.mxu0 %v2589
        %2596 = vmatprep.subr.bf16.mxu0 0
        %2597 = vmatpush1.bf16.msra.mxu0 0
        %2598 = vmatprep.subr.bf16.mxu0 0
        %2599 = vmatpush1.bf16.msra.mxu0 0
        %2600 = vmatprep.subr.bf16.mxu0 0
        %2601 = vmatpush1.bf16.msra.mxu0 0
        %2602 = vmatprep.subr.bf16.mxu0 0
        %2603 = vmatpush1.bf16.msra.mxu0 0
        %2604 = vmatprep.subr.bf16.mxu0 0
        %2605 = vmatpush1.bf16.msra.mxu0 0
        %2606 = vmatprep.subr.bf16.mxu0 0
        %2607 = vmatpush1.bf16.msra.mxu0 0
        %2608 = vmatprep.subr.bf16.mxu0 0
        %2609 = vmatpush1.bf16.msra.mxu0 0
        %2610 = vmatprep.subr.bf16.mxu0 0
        %2611 = vmatpush1.bf16.msra.mxu0 0
        %2612 = vmatprep.subr.bf16.mxu0 0
        %2613 = vmatpush1.bf16.msra.mxu0 0
        %2614 = vmatprep.subr.bf16.mxu0 0
        %2615 = vmatpush1.bf16.msra.mxu0 0
        %2616 = vmatprep.subr.bf16.mxu0 0
        %2617 = vmatpush1.bf16.msra.mxu0 0
        %2618 = vmatprep.subr.bf16.mxu0 0
        %2619 = vmatpush1.bf16.msra.mxu0 0
        %2620 = vmatprep.subr.bf16.mxu0 0
        %2621 = vmatpush1.bf16.msra.mxu0 0
        %2622 = vmatprep.subr.bf16.mxu0 0
        %2623 = vmatpush1.bf16.msra.mxu0 0
        %2624 = vmatprep.subr.bf16.mxu0 0
        %2625 = vmatpush1.bf16.msra.mxu0 0
        %2626 = vmatprep.mubr.bf16.mxu0 0
        %2627 = vmatmul.mubr.bf16.gmra.mrb[0].mxu0 %v2592
        %v2628 = vpop.f32.mrb[0].mxu0
        %v2629 = vadd.f32 0.0, %v2628
        %v2630 = vpop.f32.mrb[0].mxu0
        %v2631 = vpop.f32.mrb[0].mxu0
        %v2632 = vadd.f32 0.0, %v2631
        %v2633 = vpop.f32.mrb[0].mxu0
        %2634 = vdwg.mxu0
        %2635 = vrot.lane.b32.xlu0 %v1215, 64
        %v2636 = vpop.permute.xlu0 %2635
        %v2639 = vsel %vm1417, %v2493, 0
        %2641 = vmatprep.subr.bf16.mxu0 0
        %2642 = vmatpush1.bf16.msra.mxu0 %v2636
        %2643 = vmatprep.subr.bf16.mxu0 0
        %2644 = vmatpush1.bf16.msra.mxu0 0
        %2645 = vmatprep.subr.bf16.mxu0 0
        %2646 = vmatpush1.bf16.msra.mxu0 0
        %2647 = vmatprep.subr.bf16.mxu0 0
        %2648 = vmatpush1.bf16.msra.mxu0 0
        %2649 = vmatprep.subr.bf16.mxu0 0
        %2650 = vmatpush1.bf16.msra.mxu0 0
        %2651 = vmatprep.subr.bf16.mxu0 0
        %2652 = vmatpush1.bf16.msra.mxu0 0
        %2653 = vmatprep.subr.bf16.mxu0 0
        %2654 = vmatpush1.bf16.msra.mxu0 0
        %2655 = vmatprep.subr.bf16.mxu0 0
        %2656 = vmatpush1.bf16.msra.mxu0 0
        %2657 = vmatprep.subr.bf16.mxu0 0
        %2658 = vmatpush1.bf16.msra.mxu0 0
        %2659 = vmatprep.subr.bf16.mxu0 0
        %2660 = vmatpush1.bf16.msra.mxu0 0
        %2661 = vmatprep.subr.bf16.mxu0 0
        %2662 = vmatpush1.bf16.msra.mxu0 0
        %2663 = vmatprep.subr.bf16.mxu0 0
        %2664 = vmatpush1.bf16.msra.mxu0 0
        %2665 = vmatprep.subr.bf16.mxu0 0
        %2666 = vmatpush1.bf16.msra.mxu0 0
        %2667 = vmatprep.subr.bf16.mxu0 0
        %2668 = vmatpush1.bf16.msra.mxu0 0
        %2669 = vmatprep.subr.bf16.mxu0 0
        %2670 = vmatpush1.bf16.msra.mxu0 0
        %2671 = vmatprep.subr.bf16.mxu0 0
        %2672 = vmatpush1.bf16.msra.mxu0 0
        %2673 = vmatprep.mubr.bf16.mxu0 0
        %2674 = vmatmul.mubr.bf16.gmra.mrb[0].mxu0 %v2639
        %v2675 = vpop.f32.mrb[0].mxu0
        %v2676 = vadd.f32 0.0, %v2675
        %v2677 = vpop.f32.mrb[0].mxu0
        %v2678 = vpop.f32.mrb[0].mxu0
        %v2679 = vadd.f32 0.0, %v2678
        %v2680 = vpop.f32.mrb[0].mxu0
        %2681 = vdwg.mxu0
        %2682 = vrot.lane.b32.xlu0 %v1204, 32
        %v2683 = vpop.permute.xlu0 %2682
        %2684 = vrot.lane.b32.xlu0 %v1208, 32
        %v2685 = vpop.permute.xlu0 %2684
        %v2687 = vsel %vm1216, %v2683, 0
        %v2690 = vsel %vm1216, %v2685, 0
        %2692 = vmatprep.subr.bf16.mxu0 0
        %2693 = vmatpush1.bf16.xpose.msra.mxu0 %v2690
        %2694 = vmatprep.subr.bf16.mxu0 0
        %2695 = vmatpush1.bf16.xpose.msra.mxu0 0
        %2696 = vmatprep.subr.bf16.mxu0 0
        %2697 = vmatpush1.bf16.xpose.msra.mxu0 0
        %2698 = vmatprep.subr.bf16.mxu0 0
        %2699 = vmatpush1.bf16.xpose.msra.mxu0 0
        %2700 = vmatprep.subr.bf16.mxu0 0
        %2701 = vmatpush1.bf16.xpose.msra.mxu0 0
        %2702 = vmatprep.subr.bf16.mxu0 0
        %2703 = vmatpush1.bf16.xpose.msra.mxu0 0
        %2704 = vmatprep.subr.bf16.mxu0 0
        %2705 = vmatpush1.bf16.xpose.msra.mxu0 0
        %2706 = vmatprep.subr.bf16.mxu0 0
        %2707 = vmatpush1.bf16.xpose.msra.mxu0 0
        %2708 = vmatprep.subr.bf16.mxu0 0
        %2709 = vmatpush1.bf16.xpose.msra.mxu0 0
        %2710 = vmatprep.subr.bf16.mxu0 0
        %2711 = vmatpush1.bf16.xpose.msra.mxu0 0
        %2712 = vmatprep.subr.bf16.mxu0 0
        %2713 = vmatpush1.bf16.xpose.msra.mxu0 0
        %2714 = vmatprep.subr.bf16.mxu0 0
        %2715 = vmatpush1.bf16.xpose.msra.mxu0 0
        %2716 = vmatprep.subr.bf16.mxu0 0
        %2717 = vmatpush1.bf16.xpose.msra.mxu0 0
        %2718 = vmatprep.subr.bf16.mxu0 0
        %2719 = vmatpush1.bf16.xpose.msra.mxu0 0
        %2720 = vmatprep.subr.bf16.mxu0 0
        %2721 = vmatpush1.bf16.xpose.msra.mxu0 0
        %2722 = vmatprep.subr.bf16.mxu0 0
        %2723 = vmatpush1.bf16.xpose.msra.mxu0 0
        %2724 = vmatprep.mubr.bf16.mxu0 0
        %2725 = vmatmul.mubr.bf16.gmra.mrb[0].mxu0 %v2687
        %v2726 = vpop.f32.mrb[0].mxu0
        %v2727 = vadd.f32 0.0, %v2726
        %v2728 = vpop.f32.mrb[0].mxu0
        %v2729 = vpop.f32.mrb[0].mxu0
        %v2730 = vadd.f32 0.0, %v2729
        %v2731 = vpop.f32.mrb[0].mxu0
        %2732 = vdwg.mxu0
        %2733 = vrot.lane.b32.xlu0 %v1205, 32
        %v2734 = vpop.permute.xlu0 %2733
        %2735 = vrot.lane.b32.xlu0 %v1209, 32
        %v2736 = vpop.permute.xlu0 %2735
        %v2738 = vsel %vm1216, %v2734, 0
        %v2741 = vsel %vm1216, %v2736, 0
        %2743 = vmatprep.subr.bf16.mxu0 0
        %2744 = vmatpush1.bf16.xpose.msra.mxu0 %v2741
        %2745 = vmatprep.subr.bf16.mxu0 0
        %2746 = vmatpush1.bf16.xpose.msra.mxu0 0
        %2747 = vmatprep.subr.bf16.mxu0 0
        %2748 = vmatpush1.bf16.xpose.msra.mxu0 0
        %2749 = vmatprep.subr.bf16.mxu0 0
        %2750 = vmatpush1.bf16.xpose.msra.mxu0 0
        %2751 = vmatprep.subr.bf16.mxu0 0
        %2752 = vmatpush1.bf16.xpose.msra.mxu0 0
        %2753 = vmatprep.subr.bf16.mxu0 0
        %2754 = vmatpush1.bf16.xpose.msra.mxu0 0
        %2755 = vmatprep.subr.bf16.mxu0 0
        %2756 = vmatpush1.bf16.xpose.msra.mxu0 0
        %2757 = vmatprep.subr.bf16.mxu0 0
        %2758 = vmatpush1.bf16.xpose.msra.mxu0 0
        %2759 = vmatprep.subr.bf16.mxu0 0
        %2760 = vmatpush1.bf16.xpose.msra.mxu0 0
        %2761 = vmatprep.subr.bf16.mxu0 0
        %2762 = vmatpush1.bf16.xpose.msra.mxu0 0
        %2763 = vmatprep.subr.bf16.mxu0 0
        %2764 = vmatpush1.bf16.xpose.msra.mxu0 0
        %2765 = vmatprep.subr.bf16.mxu0 0
        %2766 = vmatpush1.bf16.xpose.msra.mxu0 0
        %2767 = vmatprep.subr.bf16.mxu0 0
        %2768 = vmatpush1.bf16.xpose.msra.mxu0 0
        %2769 = vmatprep.subr.bf16.mxu0 0
        %2770 = vmatpush1.bf16.xpose.msra.mxu0 0
        %2771 = vmatprep.subr.bf16.mxu0 0
        %2772 = vmatpush1.bf16.xpose.msra.mxu0 0
        %2773 = vmatprep.subr.bf16.mxu0 0
        %2774 = vmatpush1.bf16.xpose.msra.mxu0 0
        %2775 = vmatprep.mubr.bf16.mxu0 0
        %2776 = vmatmul.mubr.bf16.gmra.mrb[0].mxu0 %v2738
        %v2777 = vpop.f32.mrb[0].mxu0
        %v2778 = vadd.f32 0.0, %v2777
        %v2779 = vpop.f32.mrb[0].mxu0
        %v2780 = vpop.f32.mrb[0].mxu0
        %v2781 = vadd.f32 0.0, %v2780
        %v2782 = vpop.f32.mrb[0].mxu0
        %2783 = vdwg.mxu0
        %2784 = vrot.lane.b32.xlu0 %v1206, 32
        %v2785 = vpop.permute.xlu0 %2784
        %2786 = vrot.lane.b32.xlu0 %v1210, 32
        %v2787 = vpop.permute.xlu0 %2786
        %v2789 = vsel %vm1216, %v2785, 0
        %v2792 = vsel %vm1216, %v2787, 0
        %2794 = vmatprep.subr.bf16.mxu0 0
        %2795 = vmatpush1.bf16.xpose.msra.mxu0 %v2792
        %2796 = vmatprep.subr.bf16.mxu0 0
        %2797 = vmatpush1.bf16.xpose.msra.mxu0 0
        %2798 = vmatprep.subr.bf16.mxu0 0
        %2799 = vmatpush1.bf16.xpose.msra.mxu0 0
        %2800 = vmatprep.subr.bf16.mxu0 0
        %2801 = vmatpush1.bf16.xpose.msra.mxu0 0
        %2802 = vmatprep.subr.bf16.mxu0 0
        %2803 = vmatpush1.bf16.xpose.msra.mxu0 0
        %2804 = vmatprep.subr.bf16.mxu0 0
        %2805 = vmatpush1.bf16.xpose.msra.mxu0 0
        %2806 = vmatprep.subr.bf16.mxu0 0
        %2807 = vmatpush1.bf16.xpose.msra.mxu0 0
        %2808 = vmatprep.subr.bf16.mxu0 0
        %2809 = vmatpush1.bf16.xpose.msra.mxu0 0
        %2810 = vmatprep.subr.bf16.mxu0 0
        %2811 = vmatpush1.bf16.xpose.msra.mxu0 0
        %2812 = vmatprep.subr.bf16.mxu0 0
        %2813 = vmatpush1.bf16.xpose.msra.mxu0 0
        %2814 = vmatprep.subr.bf16.mxu0 0
        %2815 = vmatpush1.bf16.xpose.msra.mxu0 0
        %2816 = vmatprep.subr.bf16.mxu0 0
        %2817 = vmatpush1.bf16.xpose.msra.mxu0 0
        %2818 = vmatprep.subr.bf16.mxu0 0
        %2819 = vmatpush1.bf16.xpose.msra.mxu0 0
        %2820 = vmatprep.subr.bf16.mxu0 0
        %2821 = vmatpush1.bf16.xpose.msra.mxu0 0
        %2822 = vmatprep.subr.bf16.mxu0 0
        %2823 = vmatpush1.bf16.xpose.msra.mxu0 0
        %2824 = vmatprep.subr.bf16.mxu0 0
        %2825 = vmatpush1.bf16.xpose.msra.mxu0 0
        %2826 = vmatprep.mubr.bf16.mxu0 0
        %2827 = vmatmul.mubr.bf16.gmra.mrb[0].mxu0 %v2789
        %v2828 = vpop.f32.mrb[0].mxu0
        %v2829 = vadd.f32 0.0, %v2828
        %v2830 = vpop.f32.mrb[0].mxu0
        %v2831 = vpop.f32.mrb[0].mxu0
        %v2832 = vadd.f32 0.0, %v2831
        %v2833 = vpop.f32.mrb[0].mxu0
        %2834 = vdwg.mxu0
        %2835 = vrot.lane.b32.xlu0 %v1207, 32
        %v2836 = vpop.permute.xlu0 %2835
        %2837 = vrot.lane.b32.xlu0 %v1211, 32
        %v2838 = vpop.permute.xlu0 %2837
        %v2840 = vsel %vm1216, %v2836, 0
        %v2843 = vsel %vm1216, %v2838, 0
        %2845 = vmatprep.subr.bf16.mxu0 0
        %2846 = vmatpush1.bf16.xpose.msra.mxu0 %v2843
        %2847 = vmatprep.subr.bf16.mxu0 0
        %2848 = vmatpush1.bf16.xpose.msra.mxu0 0
        %2849 = vmatprep.subr.bf16.mxu0 0
        %2850 = vmatpush1.bf16.xpose.msra.mxu0 0
        %2851 = vmatprep.subr.bf16.mxu0 0
        %2852 = vmatpush1.bf16.xpose.msra.mxu0 0
        %2853 = vmatprep.subr.bf16.mxu0 0
        %2854 = vmatpush1.bf16.xpose.msra.mxu0 0
        %2855 = vmatprep.subr.bf16.mxu0 0
        %2856 = vmatpush1.bf16.xpose.msra.mxu0 0
        %2857 = vmatprep.subr.bf16.mxu0 0
        %2858 = vmatpush1.bf16.xpose.msra.mxu0 0
        %2859 = vmatprep.subr.bf16.mxu0 0
        %2860 = vmatpush1.bf16.xpose.msra.mxu0 0
        %2861 = vmatprep.subr.bf16.mxu0 0
        %2862 = vmatpush1.bf16.xpose.msra.mxu0 0
        %2863 = vmatprep.subr.bf16.mxu0 0
        %2864 = vmatpush1.bf16.xpose.msra.mxu0 0
        %2865 = vmatprep.subr.bf16.mxu0 0
        %2866 = vmatpush1.bf16.xpose.msra.mxu0 0
        %2867 = vmatprep.subr.bf16.mxu0 0
        %2868 = vmatpush1.bf16.xpose.msra.mxu0 0
        %2869 = vmatprep.subr.bf16.mxu0 0
        %2870 = vmatpush1.bf16.xpose.msra.mxu0 0
        %2871 = vmatprep.subr.bf16.mxu0 0
        %2872 = vmatpush1.bf16.xpose.msra.mxu0 0
        %2873 = vmatprep.subr.bf16.mxu0 0
        %2874 = vmatpush1.bf16.xpose.msra.mxu0 0
        %2875 = vmatprep.subr.bf16.mxu0 0
        %2876 = vmatpush1.bf16.xpose.msra.mxu0 0
        %2877 = vmatprep.mubr.bf16.mxu0 0
        %2878 = vmatmul.mubr.bf16.gmra.mrb[0].mxu0 %v2840
        %v2879 = vpop.f32.mrb[0].mxu0
        %v2880 = vadd.f32 0.0, %v2879
        %v2881 = vpop.f32.mrb[0].mxu0
        %v2882 = vpop.f32.mrb[0].mxu0
        %v2883 = vadd.f32 0.0, %v2882
        %v2884 = vpop.f32.mrb[0].mxu0
        %2885 = vdwg.mxu0
        %v2886 = vsel %vm1407, %v2727, -1e+30
        %v2887 = vsel %vm1408, %v2730, -1e+30
        %v2888 = vsel %vm1407, %v2778, -1e+30
        %v2889 = vsel %vm1408, %v2781, -1e+30
        %v2890 = vsel %vm1407, %v2829, -1e+30
        %v2891 = vsel %vm1408, %v2832, -1e+30
        %v2892 = vsel %vm1407, %v2880, -1e+30
        %v2893 = vsel %vm1408, %v2883, -1e+30
        %v2894 = vsel %vm1417, %v2886, -inf
        %2895 = vmax.xlane.f32.xlu0 %v2894
        %v2896 = vpop.xlane.xlu0 %2895
        %v2897 = vsel %vm1417, %v2887, -inf
        %2898 = vmax.xlane.f32.xlu0 %v2897
        %v2899 = vpop.xlane.xlu0 %2898
        %v2900 = vsel %vm1417, %v2888, -inf
        %2901 = vmax.xlane.f32.xlu0 %v2900
        %v2902 = vpop.xlane.xlu0 %2901
        %v2903 = vsel %vm1417, %v2889, -inf
        %2904 = vmax.xlane.f32.xlu0 %v2903
        %v2905 = vpop.xlane.xlu0 %2904
        %v2906 = vsel %vm1417, %v2890, -inf
        %2907 = vmax.xlane.f32.xlu0 %v2906
        %v2908 = vpop.xlane.xlu0 %2907
        %v2909 = vsel %vm1417, %v2891, -inf
        %2910 = vmax.xlane.f32.xlu0 %v2909
        %v2911 = vpop.xlane.xlu0 %2910
        %v2912 = vsel %vm1417, %v2892, -inf
        %2913 = vmax.xlane.f32.xlu0 %v2912
        %v2914 = vpop.xlane.xlu0 %2913
        %v2915 = vsel %vm1417, %v2893, -inf
        %2916 = vmax.xlane.f32.xlu0 %v2915
        %v2917 = vpop.xlane.xlu0 %2916
        %v2918 = vsub.f32 %v2886, %v2896
        %v2919 = vsub.f32 %v2887, %v2899
        %v2920 = vsub.f32 %v2888, %v2902
        %v2921 = vsub.f32 %v2889, %v2905
        %v2922 = vsub.f32 %v2890, %v2908
        %v2923 = vsub.f32 %v2891, %v2911
        %v2924 = vsub.f32 %v2892, %v2914
        %v2925 = vsub.f32 %v2893, %v2917
        %v2926 = vmul.f32 %v2918, 1.442695
        %v2927 = vpow.pop %v2926
        %v2928 = vmul.f32 %v2919, 1.442695
        %v2929 = vpow.pop %v2928
        %v2930 = vmul.f32 %v2920, 1.442695
        %v2931 = vpow.pop %v2930
        %v2932 = vmul.f32 %v2921, 1.442695
        %v2933 = vpow.pop %v2932
        %v2934 = vmul.f32 %v2922, 1.442695
        %v2935 = vpow.pop %v2934
        %v2936 = vmul.f32 %v2923, 1.442695
        %v2937 = vpow.pop %v2936
        %v2938 = vmul.f32 %v2924, 1.442695
        %v2939 = vpow.pop %v2938
        %v2940 = vmul.f32 %v2925, 1.442695
        %v2941 = vpow.pop %v2940
        %v2942 = vsel %vm1417, %v2927, 0.0
        %2943 = vadd.xlane.f32.xlu0 %v2942
        %v2944 = vpop.xlane.xlu0 %2943
        %v2945 = vsel %vm1417, %v2929, 0.0
        %2946 = vadd.xlane.f32.xlu0 %v2945
        %v2947 = vpop.xlane.xlu0 %2946
        %v2948 = vsel %vm1417, %v2931, 0.0
        %2949 = vadd.xlane.f32.xlu0 %v2948
        %v2950 = vpop.xlane.xlu0 %2949
        %v2951 = vsel %vm1417, %v2933, 0.0
        %2952 = vadd.xlane.f32.xlu0 %v2951
        %v2953 = vpop.xlane.xlu0 %2952
        %v2954 = vsel %vm1417, %v2935, 0.0
        %2955 = vadd.xlane.f32.xlu0 %v2954
        %v2956 = vpop.xlane.xlu0 %2955
        %v2957 = vsel %vm1417, %v2937, 0.0
        %2958 = vadd.xlane.f32.xlu0 %v2957
        %v2959 = vpop.xlane.xlu0 %2958
        %v2960 = vsel %vm1417, %v2939, 0.0
        %2961 = vadd.xlane.f32.xlu0 %v2960
        %v2962 = vpop.xlane.xlu0 %2961
        %v2963 = vsel %vm1417, %v2941, 0.0
        %2964 = vadd.xlane.f32.xlu0 %v2963
        %v2965 = vpop.xlane.xlu0 %2964
        %v2966 = vrcp.pop %v2944
        %v2967 = vrcp.pop %v2947
        %v2968 = vrcp.pop %v2950
        %v2969 = vrcp.pop %v2953
        %v2970 = vrcp.pop %v2956
        %v2971 = vrcp.pop %v2959
        %v2972 = vrcp.pop %v2962
        %v2973 = vrcp.pop %v2965
        %v2974 = vmul.f32 %v2927, %v2966
        %v2975 = vmul.f32 %v2929, %v2967
        %v2976 = vmul.f32 %v2931, %v2968
        %v2977 = vmul.f32 %v2933, %v2969
        %v2978 = vmul.f32 %v2935, %v2970
        %v2979 = vmul.f32 %v2937, %v2971
        %v2980 = vmul.f32 %v2939, %v2972
        %v2981 = vmul.f32 %v2941, %v2973
        %v2982 = vpack.c.bf16 %v2975, %v2974
        %v2983 = vpack.c.bf16 %v2977, %v2976
        %v2984 = vpack.c.bf16 %v2979, %v2978
        %v2985 = vpack.c.bf16 %v2981, %v2980
        %2986 = vrot.lane.b32.xlu0 %v1212, 32
        %v2987 = vpop.permute.xlu0 %2986
        %v2990 = vsel %vm1417, %v2982, 0
        %2992 = vmatprep.subr.bf16.mxu0 0
        %2993 = vmatpush1.bf16.msra.mxu0 %v2987
        %2994 = vmatprep.subr.bf16.mxu0 0
        %2995 = vmatpush1.bf16.msra.mxu0 0
        %2996 = vmatprep.subr.bf16.mxu0 0
        %2997 = vmatpush1.bf16.msra.mxu0 0
        %2998 = vmatprep.subr.bf16.mxu0 0
        %2999 = vmatpush1.bf16.msra.mxu0 0
        %3000 = vmatprep.subr.bf16.mxu0 0
        %3001 = vmatpush1.bf16.msra.mxu0 0
        %3002 = vmatprep.subr.bf16.mxu0 0
        %3003 = vmatpush1.bf16.msra.mxu0 0
        %3004 = vmatprep.subr.bf16.mxu0 0
        %3005 = vmatpush1.bf16.msra.mxu0 0
        %3006 = vmatprep.subr.bf16.mxu0 0
        %3007 = vmatpush1.bf16.msra.mxu0 0
        %3008 = vmatprep.subr.bf16.mxu0 0
        %3009 = vmatpush1.bf16.msra.mxu0 0
        %3010 = vmatprep.subr.bf16.mxu0 0
        %3011 = vmatpush1.bf16.msra.mxu0 0
        %3012 = vmatprep.subr.bf16.mxu0 0
        %3013 = vmatpush1.bf16.msra.mxu0 0
        %3014 = vmatprep.subr.bf16.mxu0 0
        %3015 = vmatpush1.bf16.msra.mxu0 0
        %3016 = vmatprep.subr.bf16.mxu0 0
        %3017 = vmatpush1.bf16.msra.mxu0 0
        %3018 = vmatprep.subr.bf16.mxu0 0
        %3019 = vmatpush1.bf16.msra.mxu0 0
        %3020 = vmatprep.subr.bf16.mxu0 0
        %3021 = vmatpush1.bf16.msra.mxu0 0
        %3022 = vmatprep.subr.bf16.mxu0 0
        %3023 = vmatpush1.bf16.msra.mxu0 0
        %3024 = vmatprep.mubr.bf16.mxu0 0
        %3025 = vmatmul.mubr.bf16.gmra.mrb[0].mxu0 %v2990
        %v3026 = vpop.f32.mrb[0].mxu0
        %v3027 = vadd.f32 0.0, %v3026
        %v3028 = vpop.f32.mrb[0].mxu0
        %v3029 = vpop.f32.mrb[0].mxu0
        %v3030 = vadd.f32 0.0, %v3029
        %v3031 = vpop.f32.mrb[0].mxu0
        %3032 = vdwg.mxu0
        %3033 = vrot.lane.b32.xlu0 %v1213, 32
        %v3034 = vpop.permute.xlu0 %3033
        %v3037 = vsel %vm1417, %v2983, 0
        %3039 = vmatprep.subr.bf16.mxu0 0
        %3040 = vmatpush1.bf16.msra.mxu0 %v3034
        %3041 = vmatprep.subr.bf16.mxu0 0
        %3042 = vmatpush1.bf16.msra.mxu0 0
        %3043 = vmatprep.subr.bf16.mxu0 0
        %3044 = vmatpush1.bf16.msra.mxu0 0
        %3045 = vmatprep.subr.bf16.mxu0 0
        %3046 = vmatpush1.bf16.msra.mxu0 0
        %3047 = vmatprep.subr.bf16.mxu0 0
        %3048 = vmatpush1.bf16.msra.mxu0 0
        %3049 = vmatprep.subr.bf16.mxu0 0
        %3050 = vmatpush1.bf16.msra.mxu0 0
        %3051 = vmatprep.subr.bf16.mxu0 0
        %3052 = vmatpush1.bf16.msra.mxu0 0
        %3053 = vmatprep.subr.bf16.mxu0 0
        %3054 = vmatpush1.bf16.msra.mxu0 0
        %3055 = vmatprep.subr.bf16.mxu0 0
        %3056 = vmatpush1.bf16.msra.mxu0 0
        %3057 = vmatprep.subr.bf16.mxu0 0
        %3058 = vmatpush1.bf16.msra.mxu0 0
        %3059 = vmatprep.subr.bf16.mxu0 0
        %3060 = vmatpush1.bf16.msra.mxu0 0
        %3061 = vmatprep.subr.bf16.mxu0 0
        %3062 = vmatpush1.bf16.msra.mxu0 0
        %3063 = vmatprep.subr.bf16.mxu0 0
        %3064 = vmatpush1.bf16.msra.mxu0 0
        %3065 = vmatprep.subr.bf16.mxu0 0
        %3066 = vmatpush1.bf16.msra.mxu0 0
        %3067 = vmatprep.subr.bf16.mxu0 0
        %3068 = vmatpush1.bf16.msra.mxu0 0
        %3069 = vmatprep.subr.bf16.mxu0 0
        %3070 = vmatpush1.bf16.msra.mxu0 0
        %3071 = vmatprep.mubr.bf16.mxu0 0
        %3072 = vmatmul.mubr.bf16.gmra.mrb[0].mxu0 %v3037
        %v3073 = vpop.f32.mrb[0].mxu0
        %v3074 = vadd.f32 0.0, %v3073
        %v3075 = vpop.f32.mrb[0].mxu0
        %v3076 = vpop.f32.mrb[0].mxu0
        %v3077 = vadd.f32 0.0, %v3076
        %v3078 = vpop.f32.mrb[0].mxu0
        %3079 = vdwg.mxu0
        %3080 = vrot.lane.b32.xlu0 %v1214, 32
        %v3081 = vpop.permute.xlu0 %3080
        %v3084 = vsel %vm1417, %v2984, 0
        %3086 = vmatprep.subr.bf16.mxu0 0
        %3087 = vmatpush1.bf16.msra.mxu0 %v3081
        %3088 = vmatprep.subr.bf16.mxu0 0
        %3089 = vmatpush1.bf16.msra.mxu0 0
        %3090 = vmatprep.subr.bf16.mxu0 0
        %3091 = vmatpush1.bf16.msra.mxu0 0
        %3092 = vmatprep.subr.bf16.mxu0 0
        %3093 = vmatpush1.bf16.msra.mxu0 0
        %3094 = vmatprep.subr.bf16.mxu0 0
        %3095 = vmatpush1.bf16.msra.mxu0 0
        %3096 = vmatprep.subr.bf16.mxu0 0
        %3097 = vmatpush1.bf16.msra.mxu0 0
        %3098 = vmatprep.subr.bf16.mxu0 0
        %3099 = vmatpush1.bf16.msra.mxu0 0
        %3100 = vmatprep.subr.bf16.mxu0 0
        %3101 = vmatpush1.bf16.msra.mxu0 0
        %3102 = vmatprep.subr.bf16.mxu0 0
        %3103 = vmatpush1.bf16.msra.mxu0 0
        %3104 = vmatprep.subr.bf16.mxu0 0
        %3105 = vmatpush1.bf16.msra.mxu0 0
        %3106 = vmatprep.subr.bf16.mxu0 0
        %3107 = vmatpush1.bf16.msra.mxu0 0
        %3108 = vmatprep.subr.bf16.mxu0 0
        %3109 = vmatpush1.bf16.msra.mxu0 0
        %3110 = vmatprep.subr.bf16.mxu0 0
        %3111 = vmatpush1.bf16.msra.mxu0 0
        %3112 = vmatprep.subr.bf16.mxu0 0
        %3113 = vmatpush1.bf16.msra.mxu0 0
        %3114 = vmatprep.subr.bf16.mxu0 0
        %3115 = vmatpush1.bf16.msra.mxu0 0
        %3116 = vmatprep.subr.bf16.mxu0 0
        %3117 = vmatpush1.bf16.msra.mxu0 0
        %3118 = vmatprep.mubr.bf16.mxu0 0
        %3119 = vmatmul.mubr.bf16.gmra.mrb[0].mxu0 %v3084
        %v3120 = vpop.f32.mrb[0].mxu0
        %v3121 = vadd.f32 0.0, %v3120
        %v3122 = vpop.f32.mrb[0].mxu0
        %v3123 = vpop.f32.mrb[0].mxu0
        %v3124 = vadd.f32 0.0, %v3123
        %v3125 = vpop.f32.mrb[0].mxu0
        %3126 = vdwg.mxu0
        %3127 = vrot.lane.b32.xlu0 %v1215, 32
        %v3128 = vpop.permute.xlu0 %3127
        %v3131 = vsel %vm1417, %v2985, 0
        %3133 = vmatprep.subr.bf16.mxu0 0
        %3134 = vmatpush1.bf16.msra.mxu0 %v3128
        %3135 = vmatprep.subr.bf16.mxu0 0
        %3136 = vmatpush1.bf16.msra.mxu0 0
        %3137 = vmatprep.subr.bf16.mxu0 0
        %3138 = vmatpush1.bf16.msra.mxu0 0
        %3139 = vmatprep.subr.bf16.mxu0 0
        %3140 = vmatpush1.bf16.msra.mxu0 0
        %3141 = vmatprep.subr.bf16.mxu0 0
        %3142 = vmatpush1.bf16.msra.mxu0 0
        %3143 = vmatprep.subr.bf16.mxu0 0
        %3144 = vmatpush1.bf16.msra.mxu0 0
        %3145 = vmatprep.subr.bf16.mxu0 0
        %3146 = vmatpush1.bf16.msra.mxu0 0
        %3147 = vmatprep.subr.bf16.mxu0 0
        %3148 = vmatpush1.bf16.msra.mxu0 0
        %3149 = vmatprep.subr.bf16.mxu0 0
        %3150 = vmatpush1.bf16.msra.mxu0 0
        %3151 = vmatprep.subr.bf16.mxu0 0
        %3152 = vmatpush1.bf16.msra.mxu0 0
        %3153 = vmatprep.subr.bf16.mxu0 0
        %3154 = vmatpush1.bf16.msra.mxu0 0
        %3155 = vmatprep.subr.bf16.mxu0 0
        %3156 = vmatpush1.bf16.msra.mxu0 0
        %3157 = vmatprep.subr.bf16.mxu0 0
        %3158 = vmatpush1.bf16.msra.mxu0 0
        %3159 = vmatprep.subr.bf16.mxu0 0
        %3160 = vmatpush1.bf16.msra.mxu0 0
        %3161 = vmatprep.subr.bf16.mxu0 0
        %3162 = vmatpush1.bf16.msra.mxu0 0
        %3163 = vmatprep.subr.bf16.mxu0 0
        %3164 = vmatpush1.bf16.msra.mxu0 0
        %3165 = vmatprep.mubr.bf16.mxu0 0
        %3166 = vmatmul.mubr.bf16.gmra.mrb[0].mxu0 %v3131
        %v3167 = vpop.f32.mrb[0].mxu0
        %v3168 = vadd.f32 0.0, %v3167
        %v3169 = vpop.f32.mrb[0].mxu0
        %v3170 = vpop.f32.mrb[0].mxu0
        %v3171 = vadd.f32 0.0, %v3170
        %v3172 = vpop.f32.mrb[0].mxu0
        %3173 = vdwg.mxu0
        %3182 = vrot.lane.b32.xlu0 %v2040, 32
        %v3183 = vpop.permute.xlu0 %3182
        %3184 = vrot.lane.b32.xlu0 %v2043, 32
        %v3185 = vpop.permute.xlu0 %3184
        %3186 = vrot.lane.b32.xlu0 %v2088, 32
        %v3187 = vpop.permute.xlu0 %3186
        %3188 = vrot.lane.b32.xlu0 %v2091, 32
        %v3189 = vpop.permute.xlu0 %3188
        %3190 = vrot.lane.b32.xlu0 %v2136, 32
        %v3191 = vpop.permute.xlu0 %3190
        %3192 = vrot.lane.b32.xlu0 %v2139, 32
        %v3193 = vpop.permute.xlu0 %3192
        %3194 = vrot.lane.b32.xlu0 %v2184, 32
        %v3195 = vpop.permute.xlu0 %3194
        %3196 = vrot.lane.b32.xlu0 %v2187, 32
        %v3197 = vpop.permute.xlu0 %3196
        %3214 = vrot.lane.b32.xlu0 %v2535, 64
        %v3215 = vpop.permute.xlu0 %3214
        %3216 = vrot.lane.b32.xlu0 %v2538, 64
        %v3217 = vpop.permute.xlu0 %3216
        %3218 = vrot.lane.b32.xlu0 %v2582, 64
        %v3219 = vpop.permute.xlu0 %3218
        %3220 = vrot.lane.b32.xlu0 %v2585, 64
        %v3221 = vpop.permute.xlu0 %3220
        %3222 = vrot.lane.b32.xlu0 %v2629, 64
        %v3223 = vpop.permute.xlu0 %3222
        %3224 = vrot.lane.b32.xlu0 %v2632, 64
        %v3225 = vpop.permute.xlu0 %3224
        %3226 = vrot.lane.b32.xlu0 %v2676, 64
        %v3227 = vpop.permute.xlu0 %3226
        %3228 = vrot.lane.b32.xlu0 %v2679, 64
        %v3229 = vpop.permute.xlu0 %3228
        %3246 = vrot.lane.b32.xlu0 %v3027, 96
        %v3247 = vpop.permute.xlu0 %3246
        %3248 = vrot.lane.b32.xlu0 %v3030, 96
        %v3249 = vpop.permute.xlu0 %3248
        %3250 = vrot.lane.b32.xlu0 %v3074, 96
        %v3251 = vpop.permute.xlu0 %3250
        %3252 = vrot.lane.b32.xlu0 %v3077, 96
        %v3253 = vpop.permute.xlu0 %3252
        %3254 = vrot.lane.b32.xlu0 %v3121, 96
        %v3255 = vpop.permute.xlu0 %3254
        %3256 = vrot.lane.b32.xlu0 %v3124, 96
        %v3257 = vpop.permute.xlu0 %3256
        %3258 = vrot.lane.b32.xlu0 %v3168, 96
        %v3259 = vpop.permute.xlu0 %3258
        %3260 = vrot.lane.b32.xlu0 %v3171, 96
        %v3261 = vpop.permute.xlu0 %3260
        %v3270 = vsel %vm1216, %v1548, %v3183
        %v3271 = vsel %vm1216, %v1551, %v3185
        %v3272 = vsel %vm1216, %v1592, %v3187
        %v3273 = vsel %vm1216, %v1595, %v3189
        %v3274 = vsel %vm1216, %v1636, %v3191
        %v3275 = vsel %vm1216, %v1639, %v3193
        %v3276 = vsel %vm1216, %v1680, %v3195
        %v3277 = vsel %vm1216, %v1683, %v3197
        %vm3278 = vcmask 523264
        %v3279 = vsel %vm3278, %v3270, %v3215
        %v3280 = vsel %vm3278, %v3271, %v3217
        %v3281 = vsel %vm3278, %v3272, %v3219
        %v3282 = vsel %vm3278, %v3273, %v3221
        %v3283 = vsel %vm3278, %v3274, %v3223
        %v3284 = vsel %vm3278, %v3275, %v3225
        %v3285 = vsel %vm3278, %v3276, %v3227
        %v3286 = vsel %vm3278, %v3277, %v3229
        %vm3287 = vcmask 785408
        %v3288 = vsel %vm3287, %v3279, %v3247
        %v3289 = vsel %vm3287, %v3280, %v3249
        %v3290 = vsel %vm3287, %v3281, %v3251
        %v3291 = vsel %vm3287, %v3282, %v3253
        %v3292 = vsel %vm3287, %v3283, %v3255
        %v3293 = vsel %vm3287, %v3284, %v3257
        %v3294 = vsel %vm3287, %v3285, %v3259
        %v3295 = vsel %vm3287, %v3286, %v3261
        %v3296 = vld [vmem:[%s693] sm:$0xf]
        %v3297 = vld [vmem:[%s693 + $0x4] sm:$0xf]
        %v3298 = vld [vmem:[%s693 + $0x8] sm:$0xf]
        %v3299 = vld [vmem:[%s693 + $0xc] sm:$0xf]
        %v3300 = vld [vmem:[%s693 + $0x10] sm:$0xf]
        %v3301 = vld [vmem:[%s693 + $0x14] sm:$0xf]
        %v3302 = vld [vmem:[%s693 + $0x18] sm:$0xf]
        %v3303 = vld [vmem:[%s693 + $0x1c] sm:$0xf]
        %v3304 = vld [vmem:[%s693 + $0x20] sm:$0xf]
        %v3305 = vld [vmem:[%s693 + $0x24] sm:$0xf]
        %v3306 = vld [vmem:[%s693 + $0x28] sm:$0xf]
        %v3307 = vld [vmem:[%s693 + $0x2c] sm:$0xf]
        %v3308 = vld [vmem:[%s693 + $0x30] sm:$0xf]
        %v3309 = vld [vmem:[%s693 + $0x34] sm:$0xf]
        %v3310 = vld [vmem:[%s693 + $0x38] sm:$0xf]
        %v3311 = vld [vmem:[%s693 + $0x3c] sm:$0xf]
        %v3312 = vpack.c.bf16 %v3289, %v3288
        %v3313 = vpack.c.bf16 %v3291, %v3290
        %v3314 = vpack.c.bf16 %v3293, %v3292
        %v3315 = vpack.c.bf16 %v3295, %v3294
        %v3316 = vld [vmem:[%s696] sm:$0x1]
        %v3318 = vlaneseq
        %v3319 = vshrl.u32 %v3318, 7
        %v3320 = vsub.s32 0, %v3319
        %v3321 = vrot.slane %v3316, %v3320
        %v3339 = vunpack.c.l.b16 %v3296
        %v3340 = vunpack.c.l.b16 %v3297
        %v3341 = vunpack.c.l.b16 %v3298
        %v3342 = vunpack.c.l.b16 %v3299
        %v3343 = vunpack.c.l.b16 %v3300
        %v3344 = vunpack.c.l.b16 %v3301
        %v3345 = vunpack.c.l.b16 %v3302
        %v3346 = vunpack.c.l.b16 %v3303
        %v3347 = vunpack.c.l.b16 %v3304
        %v3348 = vunpack.c.l.b16 %v3305
        %v3349 = vunpack.c.l.b16 %v3306
        %v3350 = vunpack.c.l.b16 %v3307
        %v3351 = vunpack.c.l.b16 %v3308
        %v3352 = vunpack.c.l.b16 %v3309
        %v3353 = vunpack.c.l.b16 %v3310
        %v3354 = vunpack.c.l.b16 %v3311
        %v3355 = vpack.c.b16 %v3340, %v3339
        %v3356 = vpack.c.b16 %v3342, %v3341
        %v3357 = vpack.c.b16 %v3344, %v3343
        %v3358 = vpack.c.b16 %v3346, %v3345
        %v3359 = vpack.c.b16 %v3348, %v3347
        %v3360 = vpack.c.b16 %v3350, %v3349
        %v3361 = vpack.c.b16 %v3352, %v3351
        %v3362 = vpack.c.b16 %v3354, %v3353
        %3371 = vmatprep.subr.bf16.mxu0 0
        %3372 = vmatpush1.bf16.msra.mxu0 %v3355
        %3373 = vmatprep.subr.bf16.mxu0 0
        %3374 = vmatpush1.bf16.msra.mxu0 %v3356
        %3375 = vmatprep.subr.bf16.mxu0 0
        %3376 = vmatpush1.bf16.msra.mxu0 %v3357
        %3377 = vmatprep.subr.bf16.mxu0 0
        %3378 = vmatpush1.bf16.msra.mxu0 %v3358
        %3379 = vmatprep.subr.bf16.mxu0 0
        %3380 = vmatpush1.bf16.msra.mxu0 %v3359
        %3381 = vmatprep.subr.bf16.mxu0 0
        %3382 = vmatpush1.bf16.msra.mxu0 %v3360
        %3383 = vmatprep.subr.bf16.mxu0 0
        %3384 = vmatpush1.bf16.msra.mxu0 %v3361
        %3385 = vmatprep.subr.bf16.mxu0 0
        %3386 = vmatpush1.bf16.msra.mxu0 %v3362
        %3387 = vmatprep.subr.bf16.mxu0 0
        %3388 = vmatpush1.bf16.msra.mxu0 0
        %3389 = vmatprep.subr.bf16.mxu0 0
        %3390 = vmatpush1.bf16.msra.mxu0 0
        %3391 = vmatprep.subr.bf16.mxu0 0
        %3392 = vmatpush1.bf16.msra.mxu0 0
        %3393 = vmatprep.subr.bf16.mxu0 0
        %3394 = vmatpush1.bf16.msra.mxu0 0
        %3395 = vmatprep.subr.bf16.mxu0 0
        %3396 = vmatpush1.bf16.msra.mxu0 0
        %3397 = vmatprep.subr.bf16.mxu0 0
        %3398 = vmatpush1.bf16.msra.mxu0 0
        %3399 = vmatprep.subr.bf16.mxu0 0
        %3400 = vmatpush1.bf16.msra.mxu0 0
        %3401 = vmatprep.subr.bf16.mxu0 0
        %3402 = vmatpush1.bf16.msra.mxu0 0
        %3403 = vmatprep.mubr.bf16.mxu0 0
        %3404 = vmatmul.mubr.bf16.gmra.mrb[0].mxu0 %v3312
        %v3405 = vpop.f32.mrb[0].mxu0
        %v3406 = vadd.f32 %v3321, %v3405
        %v3407 = vpop.f32.mrb[0].mxu0
        %v3408 = vpop.f32.mrb[0].mxu0
        %v3409 = vadd.f32 %v3321, %v3408
        %v3410 = vpop.f32.mrb[0].mxu0
        %3411 = vmatprep.mubr.bf16.mxu0 0
        %3412 = vmatmul.mubr.bf16.gmra.mrb[0].mxu0 %v3313
        %v3413 = vpop.f32.mrb[0].mxu0
        %v3414 = vadd.f32 %v3321, %v3413
        %v3415 = vpop.f32.mrb[0].mxu0
        %v3416 = vpop.f32.mrb[0].mxu0
        %v3417 = vadd.f32 %v3321, %v3416
        %v3418 = vpop.f32.mrb[0].mxu0
        %3419 = vmatprep.mubr.bf16.mxu0 0
        %3420 = vmatmul.mubr.bf16.gmra.mrb[0].mxu0 %v3314
        %v3421 = vpop.f32.mrb[0].mxu0
        %v3422 = vadd.f32 %v3321, %v3421
        %v3423 = vpop.f32.mrb[0].mxu0
        %v3424 = vpop.f32.mrb[0].mxu0
        %v3425 = vadd.f32 %v3321, %v3424
        %v3426 = vpop.f32.mrb[0].mxu0
        %3427 = vmatprep.mubr.bf16.mxu0 0
        %3428 = vmatmul.mubr.bf16.gmra.mrb[0].mxu0 %v3315
        %v3429 = vpop.f32.mrb[0].mxu0
        %v3430 = vadd.f32 %v3321, %v3429
        %v3431 = vpop.f32.mrb[0].mxu0
        %v3432 = vpop.f32.mrb[0].mxu0
        %v3433 = vadd.f32 %v3321, %v3432
        %v3434 = vpop.f32.mrb[0].mxu0
        %3435 = vdwg.mxu0
        %v3436 = vadd.f32 %v751, %v3406
        %v3437 = vadd.f32 %v752, %v3409
        %v3438 = vadd.f32 %v753, %v3414
        %v3439 = vadd.f32 %v754, %v3417
        %v3440 = vadd.f32 %v755, %v3422
        %v3441 = vadd.f32 %v756, %v3425
        %v3442 = vadd.f32 %v757, %v3430
        %v3443 = vadd.f32 %v758, %v3433
        %v3444 = vld [vmem:[%s699] sm:$0x1]
        %v3445 = vld [vmem:[%s702] sm:$0x1]
        %3446 = vadd.xlane.f32.xlu0 %v3436
        %v3447 = vpop.xlane.xlu0 %3446
        %3448 = vadd.xlane.f32.xlu0 %v3437
        %v3449 = vpop.xlane.xlu0 %3448
        %3450 = vadd.xlane.f32.xlu0 %v3438
        %v3451 = vpop.xlane.xlu0 %3450
        %3452 = vadd.xlane.f32.xlu0 %v3439
        %v3453 = vpop.xlane.xlu0 %3452
        %3454 = vadd.xlane.f32.xlu0 %v3440
        %v3455 = vpop.xlane.xlu0 %3454
        %3456 = vadd.xlane.f32.xlu0 %v3441
        %v3457 = vpop.xlane.xlu0 %3456
        %3458 = vadd.xlane.f32.xlu0 %v3442
        %v3459 = vpop.xlane.xlu0 %3458
        %3460 = vadd.xlane.f32.xlu0 %v3443
        %v3461 = vpop.xlane.xlu0 %3460
        %v3462 = vmul.f32 %v3447, %v777
        %v3463 = vmul.f32 %v3449, %v777
        %v3464 = vmul.f32 %v3451, %v777
        %v3465 = vmul.f32 %v3453, %v777
        %v3466 = vmul.f32 %v3455, %v777
        %v3467 = vmul.f32 %v3457, %v777
        %v3468 = vmul.f32 %v3459, %v777
        %v3469 = vmul.f32 %v3461, %v777
        %v3470 = vsub.f32 %v3436, %v3462
        %v3471 = vsub.f32 %v3437, %v3463
        %v3472 = vsub.f32 %v3438, %v3464
        %v3473 = vsub.f32 %v3439, %v3465
        %v3474 = vsub.f32 %v3440, %v3466
        %v3475 = vsub.f32 %v3441, %v3467
        %v3476 = vsub.f32 %v3442, %v3468
        %v3477 = vsub.f32 %v3443, %v3469
        %v3478 = vmul.f32 %v3470, %v3470
        %v3479 = vmul.f32 %v3471, %v3471
        %v3480 = vmul.f32 %v3472, %v3472
        %v3481 = vmul.f32 %v3473, %v3473
        %v3482 = vmul.f32 %v3474, %v3474
        %v3483 = vmul.f32 %v3475, %v3475
        %v3484 = vmul.f32 %v3476, %v3476
        %v3485 = vmul.f32 %v3477, %v3477
        %3486 = vadd.xlane.f32.xlu0 %v3478
        %v3487 = vpop.xlane.xlu0 %3486
        %3488 = vadd.xlane.f32.xlu0 %v3479
        %v3489 = vpop.xlane.xlu0 %3488
        %3490 = vadd.xlane.f32.xlu0 %v3480
        %v3491 = vpop.xlane.xlu0 %3490
        %3492 = vadd.xlane.f32.xlu0 %v3481
        %v3493 = vpop.xlane.xlu0 %3492
        %3494 = vadd.xlane.f32.xlu0 %v3482
        %v3495 = vpop.xlane.xlu0 %3494
        %3496 = vadd.xlane.f32.xlu0 %v3483
        %v3497 = vpop.xlane.xlu0 %3496
        %3498 = vadd.xlane.f32.xlu0 %v3484
        %v3499 = vpop.xlane.xlu0 %3498
        %3500 = vadd.xlane.f32.xlu0 %v3485
        %v3501 = vpop.xlane.xlu0 %3500
        %v3502 = vmul.f32 %v3487, %v777
        %v3503 = vmul.f32 %v3489, %v777
        %v3504 = vmul.f32 %v3491, %v777
        %v3505 = vmul.f32 %v3493, %v777
        %v3506 = vmul.f32 %v3495, %v777
        %v3507 = vmul.f32 %v3497, %v777
        %v3508 = vmul.f32 %v3499, %v777
        %v3509 = vmul.f32 %v3501, %v777
        %v3510 = vadd.f32 %v3502, 1e-05
        %v3511 = vadd.f32 %v3503, 1e-05
        %v3512 = vadd.f32 %v3504, 1e-05
        %v3513 = vadd.f32 %v3505, 1e-05
        %v3514 = vadd.f32 %v3506, 1e-05
        %v3515 = vadd.f32 %v3507, 1e-05
        %v3516 = vadd.f32 %v3508, 1e-05
        %v3517 = vadd.f32 %v3509, 1e-05
        %v3518 = vrsqrt.pop %v3510
        %v3519 = vrsqrt.pop %v3511
        %v3520 = vrsqrt.pop %v3512
        %v3521 = vrsqrt.pop %v3513
        %v3522 = vrsqrt.pop %v3514
        %v3523 = vrsqrt.pop %v3515
        %v3524 = vrsqrt.pop %v3516
        %v3525 = vrsqrt.pop %v3517
        %v3526 = vmul.f32 %v3470, %v3518
        %v3527 = vmul.f32 %v3471, %v3519
        %v3528 = vmul.f32 %v3472, %v3520
        %v3529 = vmul.f32 %v3473, %v3521
        %v3530 = vmul.f32 %v3474, %v3522
        %v3531 = vmul.f32 %v3475, %v3523
        %v3532 = vmul.f32 %v3476, %v3524
        %v3533 = vmul.f32 %v3477, %v3525
        %v3535 = vlaneseq
        %v3536 = vshrl.u32 %v3535, 7
        %v3537 = vsub.s32 0, %v3536
        %v3538 = vrot.slane %v3444, %v3537
        %v3540 = vmul.f32 %v3526, %v3538
        %v3541 = vmul.f32 %v3527, %v3538
        %v3542 = vmul.f32 %v3528, %v3538
        %v3543 = vmul.f32 %v3529, %v3538
        %v3544 = vmul.f32 %v3530, %v3538
        %v3545 = vmul.f32 %v3531, %v3538
        %v3546 = vmul.f32 %v3532, %v3538
        %v3547 = vmul.f32 %v3533, %v3538
        %v3549 = vlaneseq
        %v3550 = vshrl.u32 %v3549, 7
        %v3551 = vsub.s32 0, %v3550
        %v3552 = vrot.slane %v3445, %v3551
        %v3554 = vadd.f32 %v3540, %v3552
        %v3555 = vadd.f32 %v3541, %v3552
        %v3556 = vadd.f32 %v3542, %v3552
        %v3557 = vadd.f32 %v3543, %v3552
        %v3558 = vadd.f32 %v3544, %v3552
        %v3559 = vadd.f32 %v3545, %v3552
        %v3560 = vadd.f32 %v3546, %v3552
        %v3561 = vadd.f32 %v3547, %v3552
        %v3562 = vld [vmem:[%s707] sm:$0xff]
        %v3563 = vld [vmem:[%s707 + $0x8] sm:$0xff]
        %v3564 = vld [vmem:[%s707 + $0x10] sm:$0xff]
        %v3565 = vld [vmem:[%s707 + $0x18] sm:$0xff]
        %v3566 = vld [vmem:[%s707 + $0x20] sm:$0xff]
        %v3567 = vld [vmem:[%s707 + $0x28] sm:$0xff]
        %v3568 = vld [vmem:[%s707 + $0x30] sm:$0xff]
        %v3569 = vld [vmem:[%s707 + $0x38] sm:$0xff]
        %v3570 = vld [vmem:[%s707 + $0x40] sm:$0xff]
        %v3571 = vld [vmem:[%s707 + $0x48] sm:$0xff]
        %v3572 = vld [vmem:[%s707 + $0x50] sm:$0xff]
        %v3573 = vld [vmem:[%s707 + $0x58] sm:$0xff]
        %v3574 = vld [vmem:[%s707 + $0x60] sm:$0xff]
        %v3575 = vld [vmem:[%s707 + $0x68] sm:$0xff]
        %v3576 = vld [vmem:[%s707 + $0x70] sm:$0xff]
        %v3577 = vld [vmem:[%s707 + $0x78] sm:$0xff]
        %v3578 = vld [vmem:[%s707 + $0x80] sm:$0xff]
        %v3579 = vld [vmem:[%s707 + $0x88] sm:$0xff]
        %v3580 = vld [vmem:[%s707 + $0x90] sm:$0xff]
        %v3581 = vld [vmem:[%s707 + $0x98] sm:$0xff]
        %v3582 = vld [vmem:[%s707 + $0xa0] sm:$0xff]
        %v3583 = vld [vmem:[%s707 + $0xa8] sm:$0xff]
        %v3584 = vld [vmem:[%s707 + $0xb0] sm:$0xff]
        %v3585 = vld [vmem:[%s707 + $0xb8] sm:$0xff]
        %v3586 = vld [vmem:[%s707 + $0xc0] sm:$0xff]
        %v3587 = vld [vmem:[%s707 + $0xc8] sm:$0xff]
        %v3588 = vld [vmem:[%s707 + $0xd0] sm:$0xff]
        %v3589 = vld [vmem:[%s707 + $0xd8] sm:$0xff]
        %v3590 = vld [vmem:[%s707 + $0xe0] sm:$0xff]
        %v3591 = vld [vmem:[%s707 + $0xe8] sm:$0xff]
        %v3592 = vld [vmem:[%s707 + $0xf0] sm:$0xff]
        %v3593 = vld [vmem:[%s707 + $0xf8] sm:$0xff]
        %v3594 = vpack.c.bf16 %v3555, %v3554
        %v3595 = vpack.c.bf16 %v3557, %v3556
        %v3596 = vpack.c.bf16 %v3559, %v3558
        %v3597 = vpack.c.bf16 %v3561, %v3560
        %v3598 = vld [vmem:[%s711] sm:$0xf]
        %v3600 = vlaneseq
        %v3601 = vshrl.u32 %v3600, 7
        %v3602 = vsub.s32 0, %v3601
        %v3603 = vrot.slane %v3598, %v3602
        %v3604 = vlaneseq
        %v3605 = vshrl.u32 %v3604, 7
        %v3606 = vsub.s32 1, %v3605
        %v3607 = vrot.slane %v3598, %v3606
        %v3608 = vlaneseq
        %v3609 = vshrl.u32 %v3608, 7
        %v3610 = vsub.s32 2, %v3609
        %v3611 = vrot.slane %v3598, %v3610
        %v3612 = vlaneseq
        %v3613 = vshrl.u32 %v3612, 7
        %v3614 = vsub.s32 3, %v3613
        %v3615 = vrot.slane %v3598, %v3614
        %v3652 = vunpack.c.l.b16 %v3562
        %v3653 = vunpack.c.h.b16 %v3562
        %v3654 = vunpack.c.l.b16 %v3563
        %v3655 = vunpack.c.h.b16 %v3563
        %v3656 = vunpack.c.l.b16 %v3564
        %v3657 = vunpack.c.h.b16 %v3564
        %v3658 = vunpack.c.l.b16 %v3565
        %v3659 = vunpack.c.h.b16 %v3565
        %v3660 = vunpack.c.l.b16 %v3566
        %v3661 = vunpack.c.h.b16 %v3566
        %v3662 = vunpack.c.l.b16 %v3567
        %v3663 = vunpack.c.h.b16 %v3567
        %v3664 = vunpack.c.l.b16 %v3568
        %v3665 = vunpack.c.h.b16 %v3568
        %v3666 = vunpack.c.l.b16 %v3569
        %v3667 = vunpack.c.h.b16 %v3569
        %v3668 = vunpack.c.l.b16 %v3570
        %v3669 = vunpack.c.h.b16 %v3570
        %v3670 = vunpack.c.l.b16 %v3571
        %v3671 = vunpack.c.h.b16 %v3571
        %v3672 = vunpack.c.l.b16 %v3572
        %v3673 = vunpack.c.h.b16 %v3572
        %v3674 = vunpack.c.l.b16 %v3573
        %v3675 = vunpack.c.h.b16 %v3573
        %v3676 = vunpack.c.l.b16 %v3574
        %v3677 = vunpack.c.h.b16 %v3574
        %v3678 = vunpack.c.l.b16 %v3575
        %v3679 = vunpack.c.h.b16 %v3575
        %v3680 = vunpack.c.l.b16 %v3576
        %v3681 = vunpack.c.h.b16 %v3576
        %v3682 = vunpack.c.l.b16 %v3577
        %v3683 = vunpack.c.h.b16 %v3577
        %v3684 = vunpack.c.l.b16 %v3578
        %v3685 = vunpack.c.h.b16 %v3578
        %v3686 = vunpack.c.l.b16 %v3579
        %v3687 = vunpack.c.h.b16 %v3579
        %v3688 = vunpack.c.l.b16 %v3580
        %v3689 = vunpack.c.h.b16 %v3580
        %v3690 = vunpack.c.l.b16 %v3581
        %v3691 = vunpack.c.h.b16 %v3581
        %v3692 = vunpack.c.l.b16 %v3582
        %v3693 = vunpack.c.h.b16 %v3582
        %v3694 = vunpack.c.l.b16 %v3583
        %v3695 = vunpack.c.h.b16 %v3583
        %v3696 = vunpack.c.l.b16 %v3584
        %v3697 = vunpack.c.h.b16 %v3584
        %v3698 = vunpack.c.l.b16 %v3585
        %v3699 = vunpack.c.h.b16 %v3585
        %v3700 = vunpack.c.l.b16 %v3586
        %v3701 = vunpack.c.h.b16 %v3586
        %v3702 = vunpack.c.l.b16 %v3587
        %v3703 = vunpack.c.h.b16 %v3587
        %v3704 = vunpack.c.l.b16 %v3588
        %v3705 = vunpack.c.h.b16 %v3588
        %v3706 = vunpack.c.l.b16 %v3589
        %v3707 = vunpack.c.h.b16 %v3589
        %v3708 = vunpack.c.l.b16 %v3590
        %v3709 = vunpack.c.h.b16 %v3590
        %v3710 = vunpack.c.l.b16 %v3591
        %v3711 = vunpack.c.h.b16 %v3591
        %v3712 = vunpack.c.l.b16 %v3592
        %v3713 = vunpack.c.h.b16 %v3592
        %v3714 = vunpack.c.l.b16 %v3593
        %v3715 = vunpack.c.h.b16 %v3593
        %v3716 = vpack.c.b16 %v3656, %v3652
        %v3717 = vpack.c.b16 %v3657, %v3653
        %v3718 = vpack.c.b16 %v3658, %v3654
        %v3719 = vpack.c.b16 %v3659, %v3655
        %v3720 = vpack.c.b16 %v3664, %v3660
        %v3721 = vpack.c.b16 %v3665, %v3661
        %v3722 = vpack.c.b16 %v3666, %v3662
        %v3723 = vpack.c.b16 %v3667, %v3663
        %v3724 = vpack.c.b16 %v3672, %v3668
        %v3725 = vpack.c.b16 %v3673, %v3669
        %v3726 = vpack.c.b16 %v3674, %v3670
        %v3727 = vpack.c.b16 %v3675, %v3671
        %v3728 = vpack.c.b16 %v3680, %v3676
        %v3729 = vpack.c.b16 %v3681, %v3677
        %v3730 = vpack.c.b16 %v3682, %v3678
        %v3731 = vpack.c.b16 %v3683, %v3679
        %v3732 = vpack.c.b16 %v3688, %v3684
        %v3733 = vpack.c.b16 %v3689, %v3685
        %v3734 = vpack.c.b16 %v3690, %v3686
        %v3735 = vpack.c.b16 %v3691, %v3687
        %v3736 = vpack.c.b16 %v3696, %v3692
        %v3737 = vpack.c.b16 %v3697, %v3693
        %v3738 = vpack.c.b16 %v3698, %v3694
        %v3739 = vpack.c.b16 %v3699, %v3695
        %v3740 = vpack.c.b16 %v3704, %v3700
        %v3741 = vpack.c.b16 %v3705, %v3701
        %v3742 = vpack.c.b16 %v3706, %v3702
        %v3743 = vpack.c.b16 %v3707, %v3703
        %v3744 = vpack.c.b16 %v3712, %v3708
        %v3745 = vpack.c.b16 %v3713, %v3709
        %v3746 = vpack.c.b16 %v3714, %v3710
        %v3747 = vpack.c.b16 %v3715, %v3711
        %3780 = vmatprep.subr.bf16.mxu0 %v3717
        %3781 = vmatpush1.bf16.msra.mxu0 %v3716
        %3782 = vmatprep.subr.bf16.mxu0 %v3721
        %3783 = vmatpush1.bf16.msra.mxu0 %v3720
        %3784 = vmatprep.subr.bf16.mxu0 %v3725
        %3785 = vmatpush1.bf16.msra.mxu0 %v3724
        %3786 = vmatprep.subr.bf16.mxu0 %v3729
        %3787 = vmatpush1.bf16.msra.mxu0 %v3728
        %3788 = vmatprep.subr.bf16.mxu0 %v3733
        %3789 = vmatpush1.bf16.msra.mxu0 %v3732
        %3790 = vmatprep.subr.bf16.mxu0 %v3737
        %3791 = vmatpush1.bf16.msra.mxu0 %v3736
        %3792 = vmatprep.subr.bf16.mxu0 %v3741
        %3793 = vmatpush1.bf16.msra.mxu0 %v3740
        %3794 = vmatprep.subr.bf16.mxu0 %v3745
        %3795 = vmatpush1.bf16.msra.mxu0 %v3744
        %3796 = vmatprep.subr.bf16.mxu0 0
        %3797 = vmatpush1.bf16.msra.mxu0 0
        %3798 = vmatprep.subr.bf16.mxu0 0
        %3799 = vmatpush1.bf16.msra.mxu0 0
        %3800 = vmatprep.subr.bf16.mxu0 0
        %3801 = vmatpush1.bf16.msra.mxu0 0
        %3802 = vmatprep.subr.bf16.mxu0 0
        %3803 = vmatpush1.bf16.msra.mxu0 0
        %3804 = vmatprep.subr.bf16.mxu0 0
        %3805 = vmatpush1.bf16.msra.mxu0 0
        %3806 = vmatprep.subr.bf16.mxu0 0
        %3807 = vmatpush1.bf16.msra.mxu0 0
        %3808 = vmatprep.subr.bf16.mxu0 0
        %3809 = vmatpush1.bf16.msra.mxu0 0
        %3810 = vmatprep.subr.bf16.mxu0 0
        %3811 = vmatpush1.bf16.msra.mxu0 0
        %3812 = vmatprep.mubr.bf16.mxu0 0
        %3813 = vmatmul.mubr.bf16.gmra.mrb[0].mxu0 %v3594
        %v3814 = vpop.f32.mrb[0].mxu0
        %v3815 = vadd.f32 %v3603, %v3814
        %v3816 = vpop.f32.mrb[0].mxu0
        %v3817 = vadd.f32 %v3607, %v3816
        %v3818 = vpop.f32.mrb[0].mxu0
        %v3819 = vadd.f32 %v3603, %v3818
        %v3820 = vpop.f32.mrb[0].mxu0
        %v3821 = vadd.f32 %v3607, %v3820
        %3822 = vmatprep.mubr.bf16.mxu0 0
        %3823 = vmatmul.mubr.bf16.gmra.mrb[0].mxu0 %v3595
        %v3824 = vpop.f32.mrb[0].mxu0
        %v3825 = vadd.f32 %v3603, %v3824
        %v3826 = vpop.f32.mrb[0].mxu0
        %v3827 = vadd.f32 %v3607, %v3826
        %v3828 = vpop.f32.mrb[0].mxu0
        %v3829 = vadd.f32 %v3603, %v3828
        %v3830 = vpop.f32.mrb[0].mxu0
        %v3831 = vadd.f32 %v3607, %v3830
        %3832 = vmatprep.mubr.bf16.mxu0 0
        %3833 = vmatmul.mubr.bf16.gmra.mrb[0].mxu0 %v3596
        %v3834 = vpop.f32.mrb[0].mxu0
        %v3835 = vadd.f32 %v3603, %v3834
        %v3836 = vpop.f32.mrb[0].mxu0
        %v3837 = vadd.f32 %v3607, %v3836
        %v3838 = vpop.f32.mrb[0].mxu0
        %v3839 = vadd.f32 %v3603, %v3838
        %v3840 = vpop.f32.mrb[0].mxu0
        %v3841 = vadd.f32 %v3607, %v3840
        %3842 = vmatprep.mubr.bf16.mxu0 0
        %3843 = vmatmul.mubr.bf16.gmra.mrb[0].mxu0 %v3597
        %v3844 = vpop.f32.mrb[0].mxu0
        %v3845 = vadd.f32 %v3603, %v3844
        %v3846 = vpop.f32.mrb[0].mxu0
        %v3847 = vadd.f32 %v3607, %v3846
        %v3848 = vpop.f32.mrb[0].mxu0
        %v3849 = vadd.f32 %v3603, %v3848
        %v3850 = vpop.f32.mrb[0].mxu0
        %v3851 = vadd.f32 %v3607, %v3850
        %3852 = vdwg.mxu0
        %3853 = vmatprep.subr.bf16.mxu0 %v3719
        %3854 = vmatpush1.bf16.msra.mxu0 %v3718
        %3855 = vmatprep.subr.bf16.mxu0 %v3723
        %3856 = vmatpush1.bf16.msra.mxu0 %v3722
        %3857 = vmatprep.subr.bf16.mxu0 %v3727
        %3858 = vmatpush1.bf16.msra.mxu0 %v3726
        %3859 = vmatprep.subr.bf16.mxu0 %v3731
        %3860 = vmatpush1.bf16.msra.mxu0 %v3730
        %3861 = vmatprep.subr.bf16.mxu0 %v3735
        %3862 = vmatpush1.bf16.msra.mxu0 %v3734
        %3863 = vmatprep.subr.bf16.mxu0 %v3739
        %3864 = vmatpush1.bf16.msra.mxu0 %v3738
        %3865 = vmatprep.subr.bf16.mxu0 %v3743
        %3866 = vmatpush1.bf16.msra.mxu0 %v3742
        %3867 = vmatprep.subr.bf16.mxu0 %v3747
        %3868 = vmatpush1.bf16.msra.mxu0 %v3746
        %3869 = vmatprep.subr.bf16.mxu0 0
        %3870 = vmatpush1.bf16.msra.mxu0 0
        %3871 = vmatprep.subr.bf16.mxu0 0
        %3872 = vmatpush1.bf16.msra.mxu0 0
        %3873 = vmatprep.subr.bf16.mxu0 0
        %3874 = vmatpush1.bf16.msra.mxu0 0
        %3875 = vmatprep.subr.bf16.mxu0 0
        %3876 = vmatpush1.bf16.msra.mxu0 0
        %3877 = vmatprep.subr.bf16.mxu0 0
        %3878 = vmatpush1.bf16.msra.mxu0 0
        %3879 = vmatprep.subr.bf16.mxu0 0
        %3880 = vmatpush1.bf16.msra.mxu0 0
        %3881 = vmatprep.subr.bf16.mxu0 0
        %3882 = vmatpush1.bf16.msra.mxu0 0
        %3883 = vmatprep.subr.bf16.mxu0 0
        %3884 = vmatpush1.bf16.msra.mxu0 0
        %3885 = vmatprep.mubr.bf16.mxu0 0
        %3886 = vmatmul.mubr.bf16.gmra.mrb[0].mxu0 %v3594
        %v3887 = vpop.f32.mrb[0].mxu0
        %v3888 = vadd.f32 %v3611, %v3887
        %v3889 = vpop.f32.mrb[0].mxu0
        %v3890 = vadd.f32 %v3615, %v3889
        %v3891 = vpop.f32.mrb[0].mxu0
        %v3892 = vadd.f32 %v3611, %v3891
        %v3893 = vpop.f32.mrb[0].mxu0
        %v3894 = vadd.f32 %v3615, %v3893
        %3895 = vmatprep.mubr.bf16.mxu0 0
        %3896 = vmatmul.mubr.bf16.gmra.mrb[0].mxu0 %v3595
        %v3897 = vpop.f32.mrb[0].mxu0
        %v3898 = vadd.f32 %v3611, %v3897
        %v3899 = vpop.f32.mrb[0].mxu0
        %v3900 = vadd.f32 %v3615, %v3899
        %v3901 = vpop.f32.mrb[0].mxu0
        %v3902 = vadd.f32 %v3611, %v3901
        %v3903 = vpop.f32.mrb[0].mxu0
        %v3904 = vadd.f32 %v3615, %v3903
        %3905 = vmatprep.mubr.bf16.mxu0 0
        %3906 = vmatmul.mubr.bf16.gmra.mrb[0].mxu0 %v3596
        %v3907 = vpop.f32.mrb[0].mxu0
        %v3908 = vadd.f32 %v3611, %v3907
        %v3909 = vpop.f32.mrb[0].mxu0
        %v3910 = vadd.f32 %v3615, %v3909
        %v3911 = vpop.f32.mrb[0].mxu0
        %v3912 = vadd.f32 %v3611, %v3911
        %v3913 = vpop.f32.mrb[0].mxu0
        %v3914 = vadd.f32 %v3615, %v3913
        %3915 = vmatprep.mubr.bf16.mxu0 0
        %3916 = vmatmul.mubr.bf16.gmra.mrb[0].mxu0 %v3597
        %v3917 = vpop.f32.mrb[0].mxu0
        %v3918 = vadd.f32 %v3611, %v3917
        %v3919 = vpop.f32.mrb[0].mxu0
        %v3920 = vadd.f32 %v3615, %v3919
        %v3921 = vpop.f32.mrb[0].mxu0
        %v3922 = vadd.f32 %v3611, %v3921
        %v3923 = vpop.f32.mrb[0].mxu0
        %v3924 = vadd.f32 %v3615, %v3923
        %3925 = vdwg.mxu0
        %v3926 = vmul.f32 %v3815, 1.702
        %v3927 = vmul.f32 %v3817, 1.702
        %v3928 = vmul.f32 %v3888, 1.702
        %v3929 = vmul.f32 %v3890, 1.702
        %v3930 = vmul.f32 %v3819, 1.702
        %v3931 = vmul.f32 %v3821, 1.702
        %v3932 = vmul.f32 %v3892, 1.702
        %v3933 = vmul.f32 %v3894, 1.702
        %v3934 = vmul.f32 %v3825, 1.702
        %v3935 = vmul.f32 %v3827, 1.702
        %v3936 = vmul.f32 %v3898, 1.702
        %v3937 = vmul.f32 %v3900, 1.702
        %v3938 = vmul.f32 %v3829, 1.702
        %v3939 = vmul.f32 %v3831, 1.702
        %v3940 = vmul.f32 %v3902, 1.702
        %v3941 = vmul.f32 %v3904, 1.702
        %v3942 = vmul.f32 %v3835, 1.702
        %v3943 = vmul.f32 %v3837, 1.702
        %v3944 = vmul.f32 %v3908, 1.702
        %v3945 = vmul.f32 %v3910, 1.702
        %v3946 = vmul.f32 %v3839, 1.702
        %v3947 = vmul.f32 %v3841, 1.702
        %v3948 = vmul.f32 %v3912, 1.702
        %v3949 = vmul.f32 %v3914, 1.702
        %v3950 = vmul.f32 %v3845, 1.702
        %v3951 = vmul.f32 %v3847, 1.702
        %v3952 = vmul.f32 %v3918, 1.702
        %v3953 = vmul.f32 %v3920, 1.702
        %v3954 = vmul.f32 %v3849, 1.702
        %v3955 = vmul.f32 %v3851, 1.702
        %v3956 = vmul.f32 %v3922, 1.702
        %v3957 = vmul.f32 %v3924, 1.702
        %v3958 = vxor.u32 %v3926, 2147483648
        %v3959 = vxor.u32 %v3927, 2147483648
        %v3960 = vxor.u32 %v3928, 2147483648
        %v3961 = vxor.u32 %v3929, 2147483648
        %v3962 = vxor.u32 %v3930, 2147483648
        %v3963 = vxor.u32 %v3931, 2147483648
        %v3964 = vxor.u32 %v3932, 2147483648
        %v3965 = vxor.u32 %v3933, 2147483648
        %v3966 = vxor.u32 %v3934, 2147483648
        %v3967 = vxor.u32 %v3935, 2147483648
        %v3968 = vxor.u32 %v3936, 2147483648
        %v3969 = vxor.u32 %v3937, 2147483648
        %v3970 = vxor.u32 %v3938, 2147483648
        %v3971 = vxor.u32 %v3939, 2147483648
        %v3972 = vxor.u32 %v3940, 2147483648
        %v3973 = vxor.u32 %v3941, 2147483648
        %v3974 = vxor.u32 %v3942, 2147483648
        %v3975 = vxor.u32 %v3943, 2147483648
        %v3976 = vxor.u32 %v3944, 2147483648
        %v3977 = vxor.u32 %v3945, 2147483648
        %v3978 = vxor.u32 %v3946, 2147483648
        %v3979 = vxor.u32 %v3947, 2147483648
        %v3980 = vxor.u32 %v3948, 2147483648
        %v3981 = vxor.u32 %v3949, 2147483648
        %v3982 = vxor.u32 %v3950, 2147483648
        %v3983 = vxor.u32 %v3951, 2147483648
        %v3984 = vxor.u32 %v3952, 2147483648
        %v3985 = vxor.u32 %v3953, 2147483648
        %v3986 = vxor.u32 %v3954, 2147483648
        %v3987 = vxor.u32 %v3955, 2147483648
        %v3988 = vxor.u32 %v3956, 2147483648
        %v3989 = vxor.u32 %v3957, 2147483648
        %v3990 = vmul.f32 %v3958, 1.442695
        %v3991 = vpow.pop %v3990
        %v3992 = vmul.f32 %v3959, 1.442695
        %v3993 = vpow.pop %v3992
        %v3994 = vmul.f32 %v3960, 1.442695
        %v3995 = vpow.pop %v3994
        %v3996 = vmul.f32 %v3961, 1.442695
        %v3997 = vpow.pop %v3996
        %v3998 = vmul.f32 %v3962, 1.442695
        %v3999 = vpow.pop %v3998
        %v4000 = vmul.f32 %v3963, 1.442695
        %v4001 = vpow.pop %v4000
        %v4002 = vmul.f32 %v3964, 1.442695
        %v4003 = vpow.pop %v4002
        %v4004 = vmul.f32 %v3965, 1.442695
        %v4005 = vpow.pop %v4004
        %v4006 = vmul.f32 %v3966, 1.442695
        %v4007 = vpow.pop %v4006
        %v4008 = vmul.f32 %v3967, 1.442695
        %v4009 = vpow.pop %v4008
        %v4010 = vmul.f32 %v3968, 1.442695
        %v4011 = vpow.pop %v4010
        %v4012 = vmul.f32 %v3969, 1.442695
        %v4013 = vpow.pop %v4012
        %v4014 = vmul.f32 %v3970, 1.442695
        %v4015 = vpow.pop %v4014
        %v4016 = vmul.f32 %v3971, 1.442695
        %v4017 = vpow.pop %v4016
        %v4018 = vmul.f32 %v3972, 1.442695
        %v4019 = vpow.pop %v4018
        %v4020 = vmul.f32 %v3973, 1.442695
        %v4021 = vpow.pop %v4020
        %v4022 = vmul.f32 %v3974, 1.442695
        %v4023 = vpow.pop %v4022
        %v4024 = vmul.f32 %v3975, 1.442695
        %v4025 = vpow.pop %v4024
        %v4026 = vmul.f32 %v3976, 1.442695
        %v4027 = vpow.pop %v4026
        %v4028 = vmul.f32 %v3977, 1.442695
        %v4029 = vpow.pop %v4028
        %v4030 = vmul.f32 %v3978, 1.442695
        %v4031 = vpow.pop %v4030
        %v4032 = vmul.f32 %v3979, 1.442695
        %v4033 = vpow.pop %v4032
        %v4034 = vmul.f32 %v3980, 1.442695
        %v4035 = vpow.pop %v4034
        %v4036 = vmul.f32 %v3981, 1.442695
        %v4037 = vpow.pop %v4036
        %v4038 = vmul.f32 %v3982, 1.442695
        %v4039 = vpow.pop %v4038
        %v4040 = vmul.f32 %v3983, 1.442695
        %v4041 = vpow.pop %v4040
        %v4042 = vmul.f32 %v3984, 1.442695
        %v4043 = vpow.pop %v4042
        %v4044 = vmul.f32 %v3985, 1.442695
        %v4045 = vpow.pop %v4044
        %v4046 = vmul.f32 %v3986, 1.442695
        %v4047 = vpow.pop %v4046
        %v4048 = vmul.f32 %v3987, 1.442695
        %v4049 = vpow.pop %v4048
        %v4050 = vmul.f32 %v3988, 1.442695
        %v4051 = vpow.pop %v4050
        %v4052 = vmul.f32 %v3989, 1.442695
        %v4053 = vpow.pop %v4052
        %v4054 = vadd.f32 %v3991, 1.0
        %v4055 = vadd.f32 %v3993, 1.0
        %v4056 = vadd.f32 %v3995, 1.0
        %v4057 = vadd.f32 %v3997, 1.0
        %v4058 = vadd.f32 %v3999, 1.0
        %v4059 = vadd.f32 %v4001, 1.0
        %v4060 = vadd.f32 %v4003, 1.0
        %v4061 = vadd.f32 %v4005, 1.0
        %v4062 = vadd.f32 %v4007, 1.0
        %v4063 = vadd.f32 %v4009, 1.0
        %v4064 = vadd.f32 %v4011, 1.0
        %v4065 = vadd.f32 %v4013, 1.0
        %v4066 = vadd.f32 %v4015, 1.0
        %v4067 = vadd.f32 %v4017, 1.0
        %v4068 = vadd.f32 %v4019, 1.0
        %v4069 = vadd.f32 %v4021, 1.0
        %v4070 = vadd.f32 %v4023, 1.0
        %v4071 = vadd.f32 %v4025, 1.0
        %v4072 = vadd.f32 %v4027, 1.0
        %v4073 = vadd.f32 %v4029, 1.0
        %v4074 = vadd.f32 %v4031, 1.0
        %v4075 = vadd.f32 %v4033, 1.0
        %v4076 = vadd.f32 %v4035, 1.0
        %v4077 = vadd.f32 %v4037, 1.0
        %v4078 = vadd.f32 %v4039, 1.0
        %v4079 = vadd.f32 %v4041, 1.0
        %v4080 = vadd.f32 %v4043, 1.0
        %v4081 = vadd.f32 %v4045, 1.0
        %v4082 = vadd.f32 %v4047, 1.0
        %v4083 = vadd.f32 %v4049, 1.0
        %v4084 = vadd.f32 %v4051, 1.0
        %v4085 = vadd.f32 %v4053, 1.0
        %v4086 = vrcp.pop %v4054
        %v4087 = vmul.f32 1.0, %v4086
        %v4088 = vrcp.pop %v4055
        %v4089 = vmul.f32 1.0, %v4088
        %v4090 = vrcp.pop %v4056
        %v4091 = vmul.f32 1.0, %v4090
        %v4092 = vrcp.pop %v4057
        %v4093 = vmul.f32 1.0, %v4092
        %v4094 = vrcp.pop %v4058
        %v4095 = vmul.f32 1.0, %v4094
        %v4096 = vrcp.pop %v4059
        %v4097 = vmul.f32 1.0, %v4096
        %v4098 = vrcp.pop %v4060
        %v4099 = vmul.f32 1.0, %v4098
        %v4100 = vrcp.pop %v4061
        %v4101 = vmul.f32 1.0, %v4100
        %v4102 = vrcp.pop %v4062
        %v4103 = vmul.f32 1.0, %v4102
        %v4104 = vrcp.pop %v4063
        %v4105 = vmul.f32 1.0, %v4104
        %v4106 = vrcp.pop %v4064
        %v4107 = vmul.f32 1.0, %v4106
        %v4108 = vrcp.pop %v4065
        %v4109 = vmul.f32 1.0, %v4108
        %v4110 = vrcp.pop %v4066
        %v4111 = vmul.f32 1.0, %v4110
        %v4112 = vrcp.pop %v4067
        %v4113 = vmul.f32 1.0, %v4112
        %v4114 = vrcp.pop %v4068
        %v4115 = vmul.f32 1.0, %v4114
        %v4116 = vrcp.pop %v4069
        %v4117 = vmul.f32 1.0, %v4116
        %v4118 = vrcp.pop %v4070
        %v4119 = vmul.f32 1.0, %v4118
        %v4120 = vrcp.pop %v4071
        %v4121 = vmul.f32 1.0, %v4120
        %v4122 = vrcp.pop %v4072
        %v4123 = vmul.f32 1.0, %v4122
        %v4124 = vrcp.pop %v4073
        %v4125 = vmul.f32 1.0, %v4124
        %v4126 = vrcp.pop %v4074
        %v4127 = vmul.f32 1.0, %v4126
        %v4128 = vrcp.pop %v4075
        %v4129 = vmul.f32 1.0, %v4128
        %v4130 = vrcp.pop %v4076
        %v4131 = vmul.f32 1.0, %v4130
        %v4132 = vrcp.pop %v4077
        %v4133 = vmul.f32 1.0, %v4132
        %v4134 = vrcp.pop %v4078
        %v4135 = vmul.f32 1.0, %v4134
        %v4136 = vrcp.pop %v4079
        %v4137 = vmul.f32 1.0, %v4136
        %v4138 = vrcp.pop %v4080
        %v4139 = vmul.f32 1.0, %v4138
        %v4140 = vrcp.pop %v4081
        %v4141 = vmul.f32 1.0, %v4140
        %v4142 = vrcp.pop %v4082
        %v4143 = vmul.f32 1.0, %v4142
        %v4144 = vrcp.pop %v4083
        %v4145 = vmul.f32 1.0, %v4144
        %v4146 = vrcp.pop %v4084
        %v4147 = vmul.f32 1.0, %v4146
        %v4148 = vrcp.pop %v4085
        %v4149 = vmul.f32 1.0, %v4148
        %v4150 = vmul.f32 %v3815, %v4087
        %v4151 = vmul.f32 %v3817, %v4089
        %v4152 = vmul.f32 %v3888, %v4091
        %v4153 = vmul.f32 %v3890, %v4093
        %v4154 = vmul.f32 %v3819, %v4095
        %v4155 = vmul.f32 %v3821, %v4097
        %v4156 = vmul.f32 %v3892, %v4099
        %v4157 = vmul.f32 %v3894, %v4101
        %v4158 = vmul.f32 %v3825, %v4103
        %v4159 = vmul.f32 %v3827, %v4105
        %v4160 = vmul.f32 %v3898, %v4107
        %v4161 = vmul.f32 %v3900, %v4109
        %v4162 = vmul.f32 %v3829, %v4111
        %v4163 = vmul.f32 %v3831, %v4113
        %v4164 = vmul.f32 %v3902, %v4115
        %v4165 = vmul.f32 %v3904, %v4117
        %v4166 = vmul.f32 %v3835, %v4119
        %v4167 = vmul.f32 %v3837, %v4121
        %v4168 = vmul.f32 %v3908, %v4123
        %v4169 = vmul.f32 %v3910, %v4125
        %v4170 = vmul.f32 %v3839, %v4127
        %v4171 = vmul.f32 %v3841, %v4129
        %v4172 = vmul.f32 %v3912, %v4131
        %v4173 = vmul.f32 %v3914, %v4133
        %v4174 = vmul.f32 %v3845, %v4135
        %v4175 = vmul.f32 %v3847, %v4137
        %v4176 = vmul.f32 %v3918, %v4139
        %v4177 = vmul.f32 %v3920, %v4141
        %v4178 = vmul.f32 %v3849, %v4143
        %v4179 = vmul.f32 %v3851, %v4145
        %v4180 = vmul.f32 %v3922, %v4147
        %v4181 = vmul.f32 %v3924, %v4149
        %v4182 = vld [vmem:[%s716] sm:$0xf]
        %v4183 = vld [vmem:[%s716 + $0x4] sm:$0xf]
        %v4184 = vld [vmem:[%s716 + $0x8] sm:$0xf]
        %v4185 = vld [vmem:[%s716 + $0xc] sm:$0xf]
        %v4186 = vld [vmem:[%s716 + $0x10] sm:$0xf]
        %v4187 = vld [vmem:[%s716 + $0x14] sm:$0xf]
        %v4188 = vld [vmem:[%s716 + $0x18] sm:$0xf]
        %v4189 = vld [vmem:[%s716 + $0x1c] sm:$0xf]
        %v4190 = vld [vmem:[%s716 + $0x20] sm:$0xf]
        %v4191 = vld [vmem:[%s716 + $0x24] sm:$0xf]
        %v4192 = vld [vmem:[%s716 + $0x28] sm:$0xf]
        %v4193 = vld [vmem:[%s716 + $0x2c] sm:$0xf]
        %v4194 = vld [vmem:[%s716 + $0x30] sm:$0xf]
        %v4195 = vld [vmem:[%s716 + $0x34] sm:$0xf]
        %v4196 = vld [vmem:[%s716 + $0x38] sm:$0xf]
        %v4197 = vld [vmem:[%s716 + $0x3c] sm:$0xf]
        %v4198 = vld [vmem:[%s716 + $0x40] sm:$0xf]
        %v4199 = vld [vmem:[%s716 + $0x44] sm:$0xf]
        %v4200 = vld [vmem:[%s716 + $0x48] sm:$0xf]
        %v4201 = vld [vmem:[%s716 + $0x4c] sm:$0xf]
        %v4202 = vld [vmem:[%s716 + $0x50] sm:$0xf]
        %v4203 = vld [vmem:[%s716 + $0x54] sm:$0xf]
        %v4204 = vld [vmem:[%s716 + $0x58] sm:$0xf]
        %v4205 = vld [vmem:[%s716 + $0x5c] sm:$0xf]
        %v4206 = vld [vmem:[%s716 + $0x60] sm:$0xf]
        %v4207 = vld [vmem:[%s716 + $0x64] sm:$0xf]
        %v4208 = vld [vmem:[%s716 + $0x68] sm:$0xf]
        %v4209 = vld [vmem:[%s716 + $0x6c] sm:$0xf]
        %v4210 = vld [vmem:[%s716 + $0x70] sm:$0xf]
        %v4211 = vld [vmem:[%s716 + $0x74] sm:$0xf]
        %v4212 = vld [vmem:[%s716 + $0x78] sm:$0xf]
        %v4213 = vld [vmem:[%s716 + $0x7c] sm:$0xf]
        %v4214 = vld [vmem:[%s716 + $0x80] sm:$0xf]
        %v4215 = vld [vmem:[%s716 + $0x84] sm:$0xf]
        %v4216 = vld [vmem:[%s716 + $0x88] sm:$0xf]
        %v4217 = vld [vmem:[%s716 + $0x8c] sm:$0xf]
        %v4218 = vld [vmem:[%s716 + $0x90] sm:$0xf]
        %v4219 = vld [vmem:[%s716 + $0x94] sm:$0xf]
        %v4220 = vld [vmem:[%s716 + $0x98] sm:$0xf]
        %v4221 = vld [vmem:[%s716 + $0x9c] sm:$0xf]
        %v4222 = vld [vmem:[%s716 + $0xa0] sm:$0xf]
        %v4223 = vld [vmem:[%s716 + $0xa4] sm:$0xf]
        %v4224 = vld [vmem:[%s716 + $0xa8] sm:$0xf]
        %v4225 = vld [vmem:[%s716 + $0xac] sm:$0xf]
        %v4226 = vld [vmem:[%s716 + $0xb0] sm:$0xf]
        %v4227 = vld [vmem:[%s716 + $0xb4] sm:$0xf]
        %v4228 = vld [vmem:[%s716 + $0xb8] sm:$0xf]
        %v4229 = vld [vmem:[%s716 + $0xbc] sm:$0xf]
        %v4230 = vld [vmem:[%s716 + $0xc0] sm:$0xf]
        %v4231 = vld [vmem:[%s716 + $0xc4] sm:$0xf]
        %v4232 = vld [vmem:[%s716 + $0xc8] sm:$0xf]
        %v4233 = vld [vmem:[%s716 + $0xcc] sm:$0xf]
        %v4234 = vld [vmem:[%s716 + $0xd0] sm:$0xf]
        %v4235 = vld [vmem:[%s716 + $0xd4] sm:$0xf]
        %v4236 = vld [vmem:[%s716 + $0xd8] sm:$0xf]
        %v4237 = vld [vmem:[%s716 + $0xdc] sm:$0xf]
        %v4238 = vld [vmem:[%s716 + $0xe0] sm:$0xf]
        %v4239 = vld [vmem:[%s716 + $0xe4] sm:$0xf]
        %v4240 = vld [vmem:[%s716 + $0xe8] sm:$0xf]
        %v4241 = vld [vmem:[%s716 + $0xec] sm:$0xf]
        %v4242 = vld [vmem:[%s716 + $0xf0] sm:$0xf]
        %v4243 = vld [vmem:[%s716 + $0xf4] sm:$0xf]
        %v4244 = vld [vmem:[%s716 + $0xf8] sm:$0xf]
        %v4245 = vld [vmem:[%s716 + $0xfc] sm:$0xf]
        %v4246 = vpack.c.bf16 %v4154, %v4150
        %v4247 = vpack.c.bf16 %v4155, %v4151
        %v4248 = vpack.c.bf16 %v4156, %v4152
        %v4249 = vpack.c.bf16 %v4157, %v4153
        %v4250 = vpack.c.bf16 %v4162, %v4158
        %v4251 = vpack.c.bf16 %v4163, %v4159
        %v4252 = vpack.c.bf16 %v4164, %v4160
        %v4253 = vpack.c.bf16 %v4165, %v4161
        %v4254 = vpack.c.bf16 %v4170, %v4166
        %v4255 = vpack.c.bf16 %v4171, %v4167
        %v4256 = vpack.c.bf16 %v4172, %v4168
        %v4257 = vpack.c.bf16 %v4173, %v4169
        %v4258 = vpack.c.bf16 %v4178, %v4174
        %v4259 = vpack.c.bf16 %v4179, %v4175
        %v4260 = vpack.c.bf16 %v4180, %v4176
        %v4261 = vpack.c.bf16 %v4181, %v4177
        %v4262 = vld [vmem:[%s719] sm:$0x1]
        %v4264 = vlaneseq
        %v4265 = vshrl.u32 %v4264, 7
        %v4266 = vsub.s32 0, %v4265
        %v4267 = vrot.slane %v4262, %v4266
        %v4333 = vunpack.c.l.b16 %v4182
        %v4334 = vunpack.c.l.b16 %v4183
        %v4335 = vunpack.c.l.b16 %v4184
        %v4336 = vunpack.c.l.b16 %v4185
        %v4337 = vunpack.c.l.b16 %v4186
        %v4338 = vunpack.c.l.b16 %v4187
        %v4339 = vunpack.c.l.b16 %v4188
        %v4340 = vunpack.c.l.b16 %v4189
        %v4341 = vunpack.c.l.b16 %v4190
        %v4342 = vunpack.c.l.b16 %v4191
        %v4343 = vunpack.c.l.b16 %v4192
        %v4344 = vunpack.c.l.b16 %v4193
        %v4345 = vunpack.c.l.b16 %v4194
        %v4346 = vunpack.c.l.b16 %v4195
        %v4347 = vunpack.c.l.b16 %v4196
        %v4348 = vunpack.c.l.b16 %v4197
        %v4349 = vunpack.c.l.b16 %v4198
        %v4350 = vunpack.c.l.b16 %v4199
        %v4351 = vunpack.c.l.b16 %v4200
        %v4352 = vunpack.c.l.b16 %v4201
        %v4353 = vunpack.c.l.b16 %v4202
        %v4354 = vunpack.c.l.b16 %v4203
        %v4355 = vunpack.c.l.b16 %v4204
        %v4356 = vunpack.c.l.b16 %v4205
        %v4357 = vunpack.c.l.b16 %v4206
        %v4358 = vunpack.c.l.b16 %v4207
        %v4359 = vunpack.c.l.b16 %v4208
        %v4360 = vunpack.c.l.b16 %v4209
        %v4361 = vunpack.c.l.b16 %v4210
        %v4362 = vunpack.c.l.b16 %v4211
        %v4363 = vunpack.c.l.b16 %v4212
        %v4364 = vunpack.c.l.b16 %v4213
        %v4365 = vunpack.c.l.b16 %v4214
        %v4366 = vunpack.c.l.b16 %v4215
        %v4367 = vunpack.c.l.b16 %v4216
        %v4368 = vunpack.c.l.b16 %v4217
        %v4369 = vunpack.c.l.b16 %v4218
        %v4370 = vunpack.c.l.b16 %v4219
        %v4371 = vunpack.c.l.b16 %v4220
        %v4372 = vunpack.c.l.b16 %v4221
        %v4373 = vunpack.c.l.b16 %v4222
        %v4374 = vunpack.c.l.b16 %v4223
        %v4375 = vunpack.c.l.b16 %v4224
        %v4376 = vunpack.c.l.b16 %v4225
        %v4377 = vunpack.c.l.b16 %v4226
        %v4378 = vunpack.c.l.b16 %v4227
        %v4379 = vunpack.c.l.b16 %v4228
        %v4380 = vunpack.c.l.b16 %v4229
        %v4381 = vunpack.c.l.b16 %v4230
        %v4382 = vunpack.c.l.b16 %v4231
        %v4383 = vunpack.c.l.b16 %v4232
        %v4384 = vunpack.c.l.b16 %v4233
        %v4385 = vunpack.c.l.b16 %v4234
        %v4386 = vunpack.c.l.b16 %v4235
        %v4387 = vunpack.c.l.b16 %v4236
        %v4388 = vunpack.c.l.b16 %v4237
        %v4389 = vunpack.c.l.b16 %v4238
        %v4390 = vunpack.c.l.b16 %v4239
        %v4391 = vunpack.c.l.b16 %v4240
        %v4392 = vunpack.c.l.b16 %v4241
        %v4393 = vunpack.c.l.b16 %v4242
        %v4394 = vunpack.c.l.b16 %v4243
        %v4395 = vunpack.c.l.b16 %v4244
        %v4396 = vunpack.c.l.b16 %v4245
        %v4397 = vpack.c.b16 %v4334, %v4333
        %v4398 = vpack.c.b16 %v4336, %v4335
        %v4399 = vpack.c.b16 %v4338, %v4337
        %v4400 = vpack.c.b16 %v4340, %v4339
        %v4401 = vpack.c.b16 %v4342, %v4341
        %v4402 = vpack.c.b16 %v4344, %v4343
        %v4403 = vpack.c.b16 %v4346, %v4345
        %v4404 = vpack.c.b16 %v4348, %v4347
        %v4405 = vpack.c.b16 %v4350, %v4349
        %v4406 = vpack.c.b16 %v4352, %v4351
        %v4407 = vpack.c.b16 %v4354, %v4353
        %v4408 = vpack.c.b16 %v4356, %v4355
        %v4409 = vpack.c.b16 %v4358, %v4357
        %v4410 = vpack.c.b16 %v4360, %v4359
        %v4411 = vpack.c.b16 %v4362, %v4361
        %v4412 = vpack.c.b16 %v4364, %v4363
        %v4413 = vpack.c.b16 %v4366, %v4365
        %v4414 = vpack.c.b16 %v4368, %v4367
        %v4415 = vpack.c.b16 %v4370, %v4369
        %v4416 = vpack.c.b16 %v4372, %v4371
        %v4417 = vpack.c.b16 %v4374, %v4373
        %v4418 = vpack.c.b16 %v4376, %v4375
        %v4419 = vpack.c.b16 %v4378, %v4377
        %v4420 = vpack.c.b16 %v4380, %v4379
        %v4421 = vpack.c.b16 %v4382, %v4381
        %v4422 = vpack.c.b16 %v4384, %v4383
        %v4423 = vpack.c.b16 %v4386, %v4385
        %v4424 = vpack.c.b16 %v4388, %v4387
        %v4425 = vpack.c.b16 %v4390, %v4389
        %v4426 = vpack.c.b16 %v4392, %v4391
        %v4427 = vpack.c.b16 %v4394, %v4393
        %v4428 = vpack.c.b16 %v4396, %v4395
        %4461 = vmatprep.subr.bf16.mxu0 0
        %4462 = vmatpush1.bf16.msra.mxu0 %v4397
        %4463 = vmatprep.subr.bf16.mxu0 0
        %4464 = vmatpush1.bf16.msra.mxu0 %v4398
        %4465 = vmatprep.subr.bf16.mxu0 0
        %4466 = vmatpush1.bf16.msra.mxu0 %v4399
        %4467 = vmatprep.subr.bf16.mxu0 0
        %4468 = vmatpush1.bf16.msra.mxu0 %v4400
        %4469 = vmatprep.subr.bf16.mxu0 0
        %4470 = vmatpush1.bf16.msra.mxu0 %v4401
        %4471 = vmatprep.subr.bf16.mxu0 0
        %4472 = vmatpush1.bf16.msra.mxu0 %v4402
        %4473 = vmatprep.subr.bf16.mxu0 0
        %4474 = vmatpush1.bf16.msra.mxu0 %v4403
        %4475 = vmatprep.subr.bf16.mxu0 0
        %4476 = vmatpush1.bf16.msra.mxu0 %v4404
        %4477 = vmatprep.subr.bf16.mxu0 0
        %4478 = vmatpush1.bf16.msra.mxu0 %v4405
        %4479 = vmatprep.subr.bf16.mxu0 0
        %4480 = vmatpush1.bf16.msra.mxu0 %v4406
        %4481 = vmatprep.subr.bf16.mxu0 0
        %4482 = vmatpush1.bf16.msra.mxu0 %v4407
        %4483 = vmatprep.subr.bf16.mxu0 0
        %4484 = vmatpush1.bf16.msra.mxu0 %v4408
        %4485 = vmatprep.subr.bf16.mxu0 0
        %4486 = vmatpush1.bf16.msra.mxu0 %v4409
        %4487 = vmatprep.subr.bf16.mxu0 0
        %4488 = vmatpush1.bf16.msra.mxu0 %v4410
        %4489 = vmatprep.subr.bf16.mxu0 0
        %4490 = vmatpush1.bf16.msra.mxu0 %v4411
        %4491 = vmatprep.subr.bf16.mxu0 0
        %4492 = vmatpush1.bf16.msra.mxu0 %v4412
        %4493 = vmatprep.mubr.bf16.mxu0 %v4247
        %4494 = vmatmul.mubr.bf16.gmra.mrb[0].mxu0 %v4246
        %v4495 = vpop.f32.mrb[0].mxu0
        %v4496 = vadd.f32 %v4267, %v4495
        %v4497 = vpop.f32.mrb[0].mxu0
        %v4498 = vpop.f32.mrb[0].mxu0
        %v4499 = vadd.f32 %v4267, %v4498
        %v4500 = vpop.f32.mrb[0].mxu0
        %4501 = vmatprep.mubr.bf16.mxu0 %v4251
        %4502 = vmatmul.mubr.bf16.gmra.mrb[0].mxu0 %v4250
        %v4503 = vpop.f32.mrb[0].mxu0
        %v4504 = vadd.f32 %v4267, %v4503
        %v4505 = vpop.f32.mrb[0].mxu0
        %v4506 = vpop.f32.mrb[0].mxu0
        %v4507 = vadd.f32 %v4267, %v4506
        %v4508 = vpop.f32.mrb[0].mxu0
        %4509 = vmatprep.mubr.bf16.mxu0 %v4255
        %4510 = vmatmul.mubr.bf16.gmra.mrb[0].mxu0 %v4254
        %v4511 = vpop.f32.mrb[0].mxu0
        %v4512 = vadd.f32 %v4267, %v4511
        %v4513 = vpop.f32.mrb[0].mxu0
        %v4514 = vpop.f32.mrb[0].mxu0
        %v4515 = vadd.f32 %v4267, %v4514
        %v4516 = vpop.f32.mrb[0].mxu0
        %4517 = vmatprep.mubr.bf16.mxu0 %v4259
        %4518 = vmatmul.mubr.bf16.gmra.mrb[0].mxu0 %v4258
        %v4519 = vpop.f32.mrb[0].mxu0
        %v4520 = vadd.f32 %v4267, %v4519
        %v4521 = vpop.f32.mrb[0].mxu0
        %v4522 = vpop.f32.mrb[0].mxu0
        %v4523 = vadd.f32 %v4267, %v4522
        %v4524 = vpop.f32.mrb[0].mxu0
        %4525 = vdwg.mxu0
        %4526 = vmatprep.subr.bf16.mxu0 0
        %4527 = vmatpush1.bf16.msra.mxu0 %v4413
        %4528 = vmatprep.subr.bf16.mxu0 0
        %4529 = vmatpush1.bf16.msra.mxu0 %v4414
        %4530 = vmatprep.subr.bf16.mxu0 0
        %4531 = vmatpush1.bf16.msra.mxu0 %v4415
        %4532 = vmatprep.subr.bf16.mxu0 0
        %4533 = vmatpush1.bf16.msra.mxu0 %v4416
        %4534 = vmatprep.subr.bf16.mxu0 0
        %4535 = vmatpush1.bf16.msra.mxu0 %v4417
        %4536 = vmatprep.subr.bf16.mxu0 0
        %4537 = vmatpush1.bf16.msra.mxu0 %v4418
        %4538 = vmatprep.subr.bf16.mxu0 0
        %4539 = vmatpush1.bf16.msra.mxu0 %v4419
        %4540 = vmatprep.subr.bf16.mxu0 0
        %4541 = vmatpush1.bf16.msra.mxu0 %v4420
        %4542 = vmatprep.subr.bf16.mxu0 0
        %4543 = vmatpush1.bf16.msra.mxu0 %v4421
        %4544 = vmatprep.subr.bf16.mxu0 0
        %4545 = vmatpush1.bf16.msra.mxu0 %v4422
        %4546 = vmatprep.subr.bf16.mxu0 0
        %4547 = vmatpush1.bf16.msra.mxu0 %v4423
        %4548 = vmatprep.subr.bf16.mxu0 0
        %4549 = vmatpush1.bf16.msra.mxu0 %v4424
        %4550 = vmatprep.subr.bf16.mxu0 0
        %4551 = vmatpush1.bf16.msra.mxu0 %v4425
        %4552 = vmatprep.subr.bf16.mxu0 0
        %4553 = vmatpush1.bf16.msra.mxu0 %v4426
        %4554 = vmatprep.subr.bf16.mxu0 0
        %4555 = vmatpush1.bf16.msra.mxu0 %v4427
        %4556 = vmatprep.subr.bf16.mxu0 0
        %4557 = vmatpush1.bf16.msra.mxu0 %v4428
        %4558 = vmatprep.mubr.bf16.mxu0 %v4249
        %4559 = vmatmul.mubr.bf16.gmra.mrb[0].mxu0 %v4248
        %v4560 = vpop.f32.mrb[0].mxu0
        %v4561 = vadd.f32 %v4496, %v4560
        %v4562 = vpop.f32.mrb[0].mxu0
        %v4563 = vpop.f32.mrb[0].mxu0
        %v4564 = vadd.f32 %v4499, %v4563
        %v4565 = vpop.f32.mrb[0].mxu0
        %4566 = vmatprep.mubr.bf16.mxu0 %v4253
        %4567 = vmatmul.mubr.bf16.gmra.mrb[0].mxu0 %v4252
        %v4568 = vpop.f32.mrb[0].mxu0
        %v4569 = vadd.f32 %v4504, %v4568
        %v4570 = vpop.f32.mrb[0].mxu0
        %v4571 = vpop.f32.mrb[0].mxu0
        %v4572 = vadd.f32 %v4507, %v4571
        %v4573 = vpop.f32.mrb[0].mxu0
        %4574 = vmatprep.mubr.bf16.mxu0 %v4257
        %4575 = vmatmul.mubr.bf16.gmra.mrb[0].mxu0 %v4256
        %v4576 = vpop.f32.mrb[0].mxu0
        %v4577 = vadd.f32 %v4512, %v4576
        %v4578 = vpop.f32.mrb[0].mxu0
        %v4579 = vpop.f32.mrb[0].mxu0
        %v4580 = vadd.f32 %v4515, %v4579
        %v4581 = vpop.f32.mrb[0].mxu0
        %4582 = vmatprep.mubr.bf16.mxu0 %v4261
        %4583 = vmatmul.mubr.bf16.gmra.mrb[0].mxu0 %v4260
        %v4584 = vpop.f32.mrb[0].mxu0
        %v4585 = vadd.f32 %v4520, %v4584
        %v4586 = vpop.f32.mrb[0].mxu0
        %v4587 = vpop.f32.mrb[0].mxu0
        %v4588 = vadd.f32 %v4523, %v4587
        %v4589 = vpop.f32.mrb[0].mxu0
        %4590 = vdwg.mxu0
        %v4591 = vadd.f32 %v3436, %v4561
        %v4592 = vadd.f32 %v3437, %v4564
        %v4593 = vadd.f32 %v3438, %v4569
        %v4594 = vadd.f32 %v3439, %v4572
        %v4595 = vadd.f32 %v3440, %v4577
        %v4596 = vadd.f32 %v3441, %v4580
        %v4597 = vadd.f32 %v3442, %v4585
        %v4598 = vadd.f32 %v3443, %v4588
        %4599 = vst [vmem:[#allocation2] sm:$0xff] %v4591
        %4600 = vst [vmem:[#allocation2 + $0x8] sm:$0xff] %v4592
        %4601 = vst [vmem:[#allocation2 + $0x10] sm:$0xff] %v4593
        %4602 = vst [vmem:[#allocation2 + $0x18] sm:$0xff] %v4594
        %4603 = vst [vmem:[#allocation2 + $0x20] sm:$0xff] %v4595
        %4604 = vst [vmem:[#allocation2 + $0x28] sm:$0xff] %v4596
        %4605 = vst [vmem:[#allocation2 + $0x30] sm:$0xff] %v4597
        %4606 = vst [vmem:[#allocation2 + $0x38] sm:$0xff] %v4598
        %p4607 = scmp.eq.s32.totalorder %s36, 1
        // Predicated region
        $region93: #{_lambda_.1} parent=87 // pred_check
          %p4608 = pneg %p4607
        $region94: #{_lambda_.1} parent=87 // pred_check_branch
          %4610 = sbr.rel (%p4608) target = $region96
        $region95: #{_lambda_.1} parent=87 // pred_region
          %s4611 = sld [smem:[#allocation4]]
          %s4612 = scalar_lea.vmem [#allocation2], %s4611
          %v4613 = vld [vmem:[%s4612] sm:$0x1]
          %s4614 = sld [smem:[#allocation4 + $0x1]]
          %s4615 = sadd.s32 %s4614, 16
          %s4616 = scalar_lea.vmem [#allocation2], %s4615
          %v4617 = vld [vmem:[%s4616] sm:$0x1]
          %s4618 = sld [smem:[#allocation4 + $0x2]]
          %s4619 = sadd.s32 %s4618, 32
          %s4620 = scalar_lea.vmem [#allocation2], %s4619
          %v4621 = vld [vmem:[%s4620] sm:$0x1]
          %s4622 = sld [smem:[#allocation4 + $0x3]]
          %s4623 = sadd.s32 %s4622, 48
          %s4624 = scalar_lea.vmem [#allocation2], %s4623
          %v4625 = vld [vmem:[%s4624] sm:$0x1]
          %v4627 = vrot.slane %v4617, 7
          %v4630 = vrot.slane %v4621, 6
          %v4633 = vrot.slane %v4625, 5
          %vm4635 = vcmask 1040384
          %v4636 = vsel %vm4635, %v4613, %v4627
          %vm4637 = vcmask 1041408
          %v4638 = vsel %vm4637, %v4636, %v4630
          %vm4639 = vcmask 1042432
          %v4640 = vsel %vm4639, %v4638, %v4633
          %v4641 = vld [vmem:[%s15] sm:$0x1]
          %v4642 = vld [vmem:[%s16] sm:$0x1]
          %vm4643 = vcmask 1043456
          %v4644 = vsel %vm4643, %v4640, 0.0
          %4645 = vadd.xlane.f32.xlu0 %v4644
          %v4646 = vpop.xlane.xlu0 %4645
          %v4647 = vmul.f32 %v4646, %v777
          %v4648 = vsub.f32 %v4640, %v4647
          %v4649 = vmul.f32 %v4648, %v4648
          %v4650 = vsel %vm4643, %v4649, 0.0
          %4651 = vadd.xlane.f32.xlu0 %v4650
          %v4652 = vpop.xlane.xlu0 %4651
          %v4653 = vmul.f32 %v4652, %v777
          %v4654 = vadd.f32 %v4653, 1e-05
          %v4655 = vrsqrt.pop %v4654
          %v4656 = vmul.f32 %v4648, %v4655
          %v4658 = vlaneseq
          %v4659 = vshrl.u32 %v4658, 7
          %v4660 = vsub.s32 0, %v4659
          %v4661 = vrot.slane %v4641, %v4660
          %v4663 = vmul.f32 %v4656, %v4661
          %v4665 = vlaneseq
          %v4666 = vshrl.u32 %v4665, 7
          %v4667 = vsub.s32 0, %v4666
          %v4668 = vrot.slane %v4642, %v4667
          %v4670 = vadd.f32 %v4663, %v4668
          %v4671 = vld [vmem:[%s17] sm:$0xff]
          %v4672 = vld [vmem:[%s17 + $0x8] sm:$0xff]
          %v4673 = vld [vmem:[%s17 + $0x10] sm:$0xff]
          %v4674 = vld [vmem:[%s17 + $0x18] sm:$0xff]
          %v4675 = vld [vmem:[%s17 + $0x20] sm:$0xff]
          %v4676 = vld [vmem:[%s17 + $0x28] sm:$0xff]
          %v4677 = vld [vmem:[%s17 + $0x30] sm:$0xff]
          %v4678 = vld [vmem:[%s17 + $0x38] sm:$0xff]
          %v4679 = vld [vmem:[%s17 + $0x40] sm:$0xff]
          %v4680 = vld [vmem:[%s17 + $0x48] sm:$0xff]
          %v4681 = vld [vmem:[%s17 + $0x50] sm:$0xff]
          %v4682 = vld [vmem:[%s17 + $0x58] sm:$0xff]
          %v4683 = vld [vmem:[%s17 + $0x60] sm:$0xff]
          %v4684 = vld [vmem:[%s17 + $0x68] sm:$0xff]
          %v4685 = vld [vmem:[%s17 + $0x70] sm:$0xff]
          %v4686 = vld [vmem:[%s17 + $0x78] sm:$0xff]
          %v4687 = vld [vmem:[%s17 + $0x80] sm:$0xff]
          %v4688 = vld [vmem:[%s17 + $0x88] sm:$0xff]
          %v4689 = vld [vmem:[%s17 + $0x90] sm:$0xff]
          %v4690 = vld [vmem:[%s17 + $0x98] sm:$0xff]
          %v4691 = vld [vmem:[%s17 + $0xa0] sm:$0xff]
          %v4692 = vld [vmem:[%s17 + $0xa8] sm:$0xff]
          %v4693 = vld [vmem:[%s17 + $0xb0] sm:$0xff]
          %v4694 = vld [vmem:[%s17 + $0xb8] sm:$0xff]
          %v4695 = vld [vmem:[%s17 + $0xc0] sm:$0xff]
          %v4696 = vld [vmem:[%s17 + $0xc8] sm:$0xff]
          %v4697 = vld [vmem:[%s17 + $0xd0] sm:$0xff]
          %v4698 = vld [vmem:[%s17 + $0xd8] sm:$0xff]
          %v4699 = vld [vmem:[%s17 + $0xe0] sm:$0xff]
          %v4700 = vld [vmem:[%s17 + $0xe8] sm:$0xff]
          %v4701 = vld [vmem:[%s17 + $0xf0] sm:$0xff]
          %v4702 = vld [vmem:[%s17 + $0xf8] sm:$0xff]
          %v4703 = vld [vmem:[%s17 + $0x100] sm:$0xff]
          %v4704 = vld [vmem:[%s17 + $0x108] sm:$0xff]
          %v4705 = vld [vmem:[%s17 + $0x110] sm:$0xff]
          %v4706 = vld [vmem:[%s17 + $0x118] sm:$0xff]
          %v4707 = vld [vmem:[%s17 + $0x120] sm:$0xff]
          %v4708 = vld [vmem:[%s17 + $0x128] sm:$0xff]
          %v4709 = vld [vmem:[%s17 + $0x130] sm:$0xff]
          %v4710 = vld [vmem:[%s17 + $0x138] sm:$0xff]
          %v4711 = vld [vmem:[%s17 + $0x140] sm:$0xff]
          %v4712 = vld [vmem:[%s17 + $0x148] sm:$0xff]
          %v4713 = vld [vmem:[%s17 + $0x150] sm:$0xff]
          %v4714 = vld [vmem:[%s17 + $0x158] sm:$0xff]
          %v4715 = vld [vmem:[%s17 + $0x160] sm:$0xff]
          %v4716 = vld [vmem:[%s17 + $0x168] sm:$0xff]
          %v4717 = vld [vmem:[%s17 + $0x170] sm:$0xff]
          %v4718 = vld [vmem:[%s17 + $0x178] sm:$0xff]
          %v4719 = vld [vmem:[%s17 + $0x180] sm:$0xff]
          %v4720 = vld [vmem:[%s17 + $0x188] sm:$0xff]
          %v4721 = vld [vmem:[%s17 + $0x190] sm:$0xff]
          %v4722 = vld [vmem:[%s17 + $0x198] sm:$0xff]
          %v4723 = vld [vmem:[%s17 + $0x1a0] sm:$0xff]
          %v4724 = vld [vmem:[%s17 + $0x1a8] sm:$0xff]
          %v4725 = vld [vmem:[%s17 + $0x1b0] sm:$0xff]
          %v4726 = vld [vmem:[%s17 + $0x1b8] sm:$0xff]
          %v4727 = vld [vmem:[%s17 + $0x1c0] sm:$0xff]
          %v4728 = vld [vmem:[%s17 + $0x1c8] sm:$0xff]
          %v4729 = vld [vmem:[%s17 + $0x1d0] sm:$0xff]
          %v4730 = vld [vmem:[%s17 + $0x1d8] sm:$0xff]
          %v4731 = vld [vmem:[%s17 + $0x1e0] sm:$0xff]
          %v4732 = vld [vmem:[%s17 + $0x1e8] sm:$0xff]
          %v4733 = vld [vmem:[%s17 + $0x1f0] sm:$0xff]
          %v4734 = vld [vmem:[%s17 + $0x1f8] sm:$0xff]
          %v4735 = vpack.c.bf16 %v4670, %v4670
          %v4800 = vunpack.c.l.b16 %v4671
          %v4801 = vunpack.c.h.b16 %v4671
          %v4802 = vunpack.c.l.b16 %v4672
          %v4803 = vunpack.c.h.b16 %v4672
          %v4804 = vunpack.c.l.b16 %v4673
          %v4805 = vunpack.c.h.b16 %v4673
          %v4806 = vunpack.c.l.b16 %v4674
          %v4807 = vunpack.c.h.b16 %v4674
          %v4808 = vunpack.c.l.b16 %v4675
          %v4809 = vunpack.c.h.b16 %v4675
          %v4810 = vunpack.c.l.b16 %v4676
          %v4811 = vunpack.c.h.b16 %v4676
          %v4812 = vunpack.c.l.b16 %v4677
          %v4813 = vunpack.c.h.b16 %v4677
          %v4814 = vunpack.c.l.b16 %v4678
          %v4815 = vunpack.c.h.b16 %v4678
          %v4816 = vunpack.c.l.b16 %v4679
          %v4817 = vunpack.c.h.b16 %v4679
          %v4818 = vunpack.c.l.b16 %v4680
          %v4819 = vunpack.c.h.b16 %v4680
          %v4820 = vunpack.c.l.b16 %v4681
          %v4821 = vunpack.c.h.b16 %v4681
          %v4822 = vunpack.c.l.b16 %v4682
          %v4823 = vunpack.c.h.b16 %v4682
          %v4824 = vunpack.c.l.b16 %v4683
          %v4825 = vunpack.c.h.b16 %v4683
          %v4826 = vunpack.c.l.b16 %v4684
          %v4827 = vunpack.c.h.b16 %v4684
          %v4828 = vunpack.c.l.b16 %v4685
          %v4829 = vunpack.c.h.b16 %v4685
          %v4830 = vunpack.c.l.b16 %v4686
          %v4831 = vunpack.c.h.b16 %v4686
          %v4832 = vunpack.c.l.b16 %v4687
          %v4833 = vunpack.c.h.b16 %v4687
          %v4834 = vunpack.c.l.b16 %v4688
          %v4835 = vunpack.c.h.b16 %v4688
          %v4836 = vunpack.c.l.b16 %v4689
          %v4837 = vunpack.c.h.b16 %v4689
          %v4838 = vunpack.c.l.b16 %v4690
          %v4839 = vunpack.c.h.b16 %v4690
          %v4840 = vunpack.c.l.b16 %v4691
          %v4841 = vunpack.c.h.b16 %v4691
          %v4842 = vunpack.c.l.b16 %v4692
          %v4843 = vunpack.c.h.b16 %v4692
          %v4844 = vunpack.c.l.b16 %v4693
          %v4845 = vunpack.c.h.b16 %v4693
          %v4846 = vunpack.c.l.b16 %v4694
          %v4847 = vunpack.c.h.b16 %v4694
          %v4848 = vunpack.c.l.b16 %v4695
          %v4849 = vunpack.c.h.b16 %v4695
          %v4850 = vunpack.c.l.b16 %v4696
          %v4851 = vunpack.c.h.b16 %v4696
          %v4852 = vunpack.c.l.b16 %v4697
          %v4853 = vunpack.c.h.b16 %v4697
          %v4854 = vunpack.c.l.b16 %v4698
          %v4855 = vunpack.c.h.b16 %v4698
          %v4856 = vunpack.c.l.b16 %v4699
          %v4857 = vunpack.c.h.b16 %v4699
          %v4858 = vunpack.c.l.b16 %v4700
          %v4859 = vunpack.c.h.b16 %v4700
          %v4860 = vunpack.c.l.b16 %v4701
          %v4861 = vunpack.c.h.b16 %v4701
          %v4862 = vunpack.c.l.b16 %v4702
          %v4863 = vunpack.c.h.b16 %v4702
          %v4864 = vunpack.c.l.b16 %v4703
          %v4865 = vunpack.c.h.b16 %v4703
          %v4866 = vunpack.c.l.b16 %v4704
          %v4867 = vunpack.c.h.b16 %v4704
          %v4868 = vunpack.c.l.b16 %v4705
          %v4869 = vunpack.c.h.b16 %v4705
          %v4870 = vunpack.c.l.b16 %v4706
          %v4871 = vunpack.c.h.b16 %v4706
          %v4872 = vunpack.c.l.b16 %v4707
          %v4873 = vunpack.c.h.b16 %v4707
          %v4874 = vunpack.c.l.b16 %v4708
          %v4875 = vunpack.c.h.b16 %v4708
          %v4876 = vunpack.c.l.b16 %v4709
          %v4877 = vunpack.c.h.b16 %v4709
          %v4878 = vunpack.c.l.b16 %v4710
          %v4879 = vunpack.c.h.b16 %v4710
          %v4880 = vunpack.c.l.b16 %v4711
          %v4881 = vunpack.c.h.b16 %v4711
          %v4882 = vunpack.c.l.b16 %v4712
          %v4883 = vunpack.c.h.b16 %v4712
          %v4884 = vunpack.c.l.b16 %v4713
          %v4885 = vunpack.c.h.b16 %v4713
          %v4886 = vunpack.c.l.b16 %v4714
          %v4887 = vunpack.c.h.b16 %v4714
          %v4888 = vunpack.c.l.b16 %v4715
          %v4889 = vunpack.c.h.b16 %v4715
          %v4890 = vunpack.c.l.b16 %v4716
          %v4891 = vunpack.c.h.b16 %v4716
          %v4892 = vunpack.c.l.b16 %v4717
          %v4893 = vunpack.c.h.b16 %v4717
          %v4894 = vunpack.c.l.b16 %v4718
          %v4895 = vunpack.c.h.b16 %v4718
          %v4896 = vunpack.c.l.b16 %v4719
          %v4897 = vunpack.c.h.b16 %v4719
          %v4898 = vunpack.c.l.b16 %v4720
          %v4899 = vunpack.c.h.b16 %v4720
          %v4900 = vunpack.c.l.b16 %v4721
          %v4901 = vunpack.c.h.b16 %v4721
          %v4902 = vunpack.c.l.b16 %v4722
          %v4903 = vunpack.c.h.b16 %v4722
          %v4904 = vunpack.c.l.b16 %v4723
          %v4905 = vunpack.c.h.b16 %v4723
          %v4906 = vunpack.c.l.b16 %v4724
          %v4907 = vunpack.c.h.b16 %v4724
          %v4908 = vunpack.c.l.b16 %v4725
          %v4909 = vunpack.c.h.b16 %v4725
          %v4910 = vunpack.c.l.b16 %v4726
          %v4911 = vunpack.c.h.b16 %v4726
          %v4912 = vunpack.c.l.b16 %v4727
          %v4913 = vunpack.c.h.b16 %v4727
          %v4914 = vunpack.c.l.b16 %v4728
          %v4915 = vunpack.c.h.b16 %v4728
          %v4916 = vunpack.c.l.b16 %v4729
          %v4917 = vunpack.c.h.b16 %v4729
          %v4918 = vunpack.c.l.b16 %v4730
          %v4919 = vunpack.c.h.b16 %v4730
          %v4920 = vunpack.c.l.b16 %v4731
          %v4921 = vunpack.c.h.b16 %v4731
          %v4922 = vunpack.c.l.b16 %v4732
          %v4923 = vunpack.c.h.b16 %v4732
          %v4924 = vunpack.c.l.b16 %v4733
          %v4925 = vunpack.c.h.b16 %v4733
          %v4926 = vunpack.c.l.b16 %v4734
          %v4927 = vunpack.c.h.b16 %v4734
          %v4928 = vpack.c.b16 %v4808, %v4800
          %v4929 = vpack.c.b16 %v4809, %v4801
          %v4930 = vpack.c.b16 %v4810, %v4802
          %v4931 = vpack.c.b16 %v4811, %v4803
          %v4932 = vpack.c.b16 %v4812, %v4804
          %v4933 = vpack.c.b16 %v4813, %v4805
          %v4934 = vpack.c.b16 %v4814, %v4806
          %v4935 = vpack.c.b16 %v4815, %v4807
          %v4936 = vpack.c.b16 %v4824, %v4816
          %v4937 = vpack.c.b16 %v4825, %v4817
          %v4938 = vpack.c.b16 %v4826, %v4818
          %v4939 = vpack.c.b16 %v4827, %v4819
          %v4940 = vpack.c.b16 %v4828, %v4820
          %v4941 = vpack.c.b16 %v4829, %v4821
          %v4942 = vpack.c.b16 %v4830, %v4822
          %v4943 = vpack.c.b16 %v4831, %v4823
          %v4944 = vpack.c.b16 %v4840, %v4832
          %v4945 = vpack.c.b16 %v4841, %v4833
          %v4946 = vpack.c.b16 %v4842, %v4834
          %v4947 = vpack.c.b16 %v4843, %v4835
          %v4948 = vpack.c.b16 %v4844, %v4836
          %v4949 = vpack.c.b16 %v4845, %v4837
          %v4950 = vpack.c.b16 %v4846, %v4838
          %v4951 = vpack.c.b16 %v4847, %v4839
          %v4952 = vpack.c.b16 %v4856, %v4848
          %v4953 = vpack.c.b16 %v4857, %v4849
          %v4954 = vpack.c.b16 %v4858, %v4850
          %v4955 = vpack.c.b16 %v4859, %v4851
          %v4956 = vpack.c.b16 %v4860, %v4852
          %v4957 = vpack.c.b16 %v4861, %v4853
          %v4958 = vpack.c.b16 %v4862, %v4854
          %v4959 = vpack.c.b16 %v4863, %v4855
          %v4960 = vpack.c.b16 %v4872, %v4864
          %v4961 = vpack.c.b16 %v4873, %v4865
          %v4962 = vpack.c.b16 %v4874, %v4866
          %v4963 = vpack.c.b16 %v4875, %v4867
          %v4964 = vpack.c.b16 %v4876, %v4868
          %v4965 = vpack.c.b16 %v4877, %v4869
          %v4966 = vpack.c.b16 %v4878, %v4870
          %v4967 = vpack.c.b16 %v4879, %v4871
          %v4968 = vpack.c.b16 %v4888, %v4880
          %v4969 = vpack.c.b16 %v4889, %v4881
          %v4970 = vpack.c.b16 %v4890, %v4882
          %v4971 = vpack.c.b16 %v4891, %v4883
          %v4972 = vpack.c.b16 %v4892, %v4884
          %v4973 = vpack.c.b16 %v4893, %v4885
          %v4974 = vpack.c.b16 %v4894, %v4886
          %v4975 = vpack.c.b16 %v4895, %v4887
          %v4976 = vpack.c.b16 %v4904, %v4896
          %v4977 = vpack.c.b16 %v4905, %v4897
          %v4978 = vpack.c.b16 %v4906, %v4898
          %v4979 = vpack.c.b16 %v4907, %v4899
          %v4980 = vpack.c.b16 %v4908, %v4900
          %v4981 = vpack.c.b16 %v4909, %v4901
          %v4982 = vpack.c.b16 %v4910, %v4902
          %v4983 = vpack.c.b16 %v4911, %v4903
          %v4984 = vpack.c.b16 %v4920, %v4912
          %v4985 = vpack.c.b16 %v4921, %v4913
          %v4986 = vpack.c.b16 %v4922, %v4914
          %v4987 = vpack.c.b16 %v4923, %v4915
          %v4988 = vpack.c.b16 %v4924, %v4916
          %v4989 = vpack.c.b16 %v4925, %v4917
          %v4990 = vpack.c.b16 %v4926, %v4918
          %v4991 = vpack.c.b16 %v4927, %v4919
          %5056 = vmatprep.subr.bf16.mxu0 %v4929
          %5057 = vmatpush1.bf16.msra.mxu0 %v4928
          %5058 = vmatprep.subr.bf16.mxu0 %v4937
          %5059 = vmatpush1.bf16.msra.mxu0 %v4936
          %5060 = vmatprep.subr.bf16.mxu0 %v4945
          %5061 = vmatpush1.bf16.msra.mxu0 %v4944
          %5062 = vmatprep.subr.bf16.mxu0 %v4953
          %5063 = vmatpush1.bf16.msra.mxu0 %v4952
          %5064 = vmatprep.subr.bf16.mxu0 %v4961
          %5065 = vmatpush1.bf16.msra.mxu0 %v4960
          %5066 = vmatprep.subr.bf16.mxu0 %v4969
          %5067 = vmatpush1.bf16.msra.mxu0 %v4968
          %5068 = vmatprep.subr.bf16.mxu0 %v4977
          %5069 = vmatpush1.bf16.msra.mxu0 %v4976
          %5070 = vmatprep.subr.bf16.mxu0 %v4985
          %5071 = vmatpush1.bf16.msra.mxu0 %v4984
          %5072 = vmatprep.subr.bf16.mxu0 0
          %5073 = vmatpush1.bf16.msra.mxu0 0
          %5074 = vmatprep.subr.bf16.mxu0 0
          %5075 = vmatpush1.bf16.msra.mxu0 0
          %5076 = vmatprep.subr.bf16.mxu0 0
          %5077 = vmatpush1.bf16.msra.mxu0 0
          %5078 = vmatprep.subr.bf16.mxu0 0
          %5079 = vmatpush1.bf16.msra.mxu0 0
          %5080 = vmatprep.subr.bf16.mxu0 0
          %5081 = vmatpush1.bf16.msra.mxu0 0
          %5082 = vmatprep.subr.bf16.mxu0 0
          %5083 = vmatpush1.bf16.msra.mxu0 0
          %5084 = vmatprep.subr.bf16.mxu0 0
          %5085 = vmatpush1.bf16.msra.mxu0 0
          %5086 = vmatprep.subr.bf16.mxu0 0
          %5087 = vmatpush1.bf16.msra.mxu0 0
          %5088 = vmatprep.mubr.bf16.mxu0 0
          %5089 = vmatmul.mubr.bf16.gmra.mrb[0].mxu0 %v4735
          %v5090 = vpop.f32.mrb[0].mxu0
          %v5091 = vadd.f32 0.0, %v5090
          %v5092 = vpop.f32.mrb[0].mxu0
          %v5093 = vadd.f32 0.0, %v5092
          %v5094 = vpop.f32.mrb[0].mxu0
          %v5095 = vpop.f32.mrb[0].mxu0
          %5096 = vdwg.mxu0
          %5097 = vmatprep.subr.bf16.mxu0 %v4931
          %5098 = vmatpush1.bf16.msra.mxu0 %v4930
          %5099 = vmatprep.subr.bf16.mxu0 %v4939
          %5100 = vmatpush1.bf16.msra.mxu0 %v4938
          %5101 = vmatprep.subr.bf16.mxu0 %v4947
          %5102 = vmatpush1.bf16.msra.mxu0 %v4946
          %5103 = vmatprep.subr.bf16.mxu0 %v4955
          %5104 = vmatpush1.bf16.msra.mxu0 %v4954
          %5105 = vmatprep.subr.bf16.mxu0 %v4963
          %5106 = vmatpush1.bf16.msra.mxu0 %v4962
          %5107 = vmatprep.subr.bf16.mxu0 %v4971
          %5108 = vmatpush1.bf16.msra.mxu0 %v4970
          %5109 = vmatprep.subr.bf16.mxu0 %v4979
          %5110 = vmatpush1.bf16.msra.mxu0 %v4978
          %5111 = vmatprep.subr.bf16.mxu0 %v4987
          %5112 = vmatpush1.bf16.msra.mxu0 %v4986
          %5113 = vmatprep.subr.bf16.mxu0 0
          %5114 = vmatpush1.bf16.msra.mxu0 0
          %5115 = vmatprep.subr.bf16.mxu0 0
          %5116 = vmatpush1.bf16.msra.mxu0 0
          %5117 = vmatprep.subr.bf16.mxu0 0
          %5118 = vmatpush1.bf16.msra.mxu0 0
          %5119 = vmatprep.subr.bf16.mxu0 0
          %5120 = vmatpush1.bf16.msra.mxu0 0
          %5121 = vmatprep.subr.bf16.mxu0 0
          %5122 = vmatpush1.bf16.msra.mxu0 0
          %5123 = vmatprep.subr.bf16.mxu0 0
          %5124 = vmatpush1.bf16.msra.mxu0 0
          %5125 = vmatprep.subr.bf16.mxu0 0
          %5126 = vmatpush1.bf16.msra.mxu0 0
          %5127 = vmatprep.subr.bf16.mxu0 0
          %5128 = vmatpush1.bf16.msra.mxu0 0
          %5129 = vmatprep.mubr.bf16.mxu0 0
          %5130 = vmatmul.mubr.bf16.gmra.mrb[0].mxu0 %v4735
          %v5131 = vpop.f32.mrb[0].mxu0
          %v5132 = vadd.f32 0.0, %v5131
          %v5133 = vpop.f32.mrb[0].mxu0
          %v5134 = vadd.f32 0.0, %v5133
          %v5135 = vpop.f32.mrb[0].mxu0
          %v5136 = vpop.f32.mrb[0].mxu0
          %5137 = vdwg.mxu0
          %5138 = vmatprep.subr.bf16.mxu0 %v4933
          %5139 = vmatpush1.bf16.msra.mxu0 %v4932
          %5140 = vmatprep.subr.bf16.mxu0 %v4941
          %5141 = vmatpush1.bf16.msra.mxu0 %v4940
          %5142 = vmatprep.subr.bf16.mxu0 %v4949
          %5143 = vmatpush1.bf16.msra.mxu0 %v4948
          %5144 = vmatprep.subr.bf16.mxu0 %v4957
          %5145 = vmatpush1.bf16.msra.mxu0 %v4956
          %5146 = vmatprep.subr.bf16.mxu0 %v4965
          %5147 = vmatpush1.bf16.msra.mxu0 %v4964
          %5148 = vmatprep.subr.bf16.mxu0 %v4973
          %5149 = vmatpush1.bf16.msra.mxu0 %v4972
          %5150 = vmatprep.subr.bf16.mxu0 %v4981
          %5151 = vmatpush1.bf16.msra.mxu0 %v4980
          %5152 = vmatprep.subr.bf16.mxu0 %v4989
          %5153 = vmatpush1.bf16.msra.mxu0 %v4988
          %5154 = vmatprep.subr.bf16.mxu0 0
          %5155 = vmatpush1.bf16.msra.mxu0 0
          %5156 = vmatprep.subr.bf16.mxu0 0
          %5157 = vmatpush1.bf16.msra.mxu0 0
          %5158 = vmatprep.subr.bf16.mxu0 0
          %5159 = vmatpush1.bf16.msra.mxu0 0
          %5160 = vmatprep.subr.bf16.mxu0 0
          %5161 = vmatpush1.bf16.msra.mxu0 0
          %5162 = vmatprep.subr.bf16.mxu0 0
          %5163 = vmatpush1.bf16.msra.mxu0 0
          %5164 = vmatprep.subr.bf16.mxu0 0
          %5165 = vmatpush1.bf16.msra.mxu0 0
          %5166 = vmatprep.subr.bf16.mxu0 0
          %5167 = vmatpush1.bf16.msra.mxu0 0
          %5168 = vmatprep.subr.bf16.mxu0 0
          %5169 = vmatpush1.bf16.msra.mxu0 0
          %5170 = vmatprep.mubr.bf16.mxu0 0
          %5171 = vmatmul.mubr.bf16.gmra.mrb[0].mxu0 %v4735
          %v5172 = vpop.f32.mrb[0].mxu0
          %v5173 = vadd.f32 0.0, %v5172
          %v5174 = vpop.f32.mrb[0].mxu0
          %v5175 = vadd.f32 0.0, %v5174
          %v5176 = vpop.f32.mrb[0].mxu0
          %v5177 = vpop.f32.mrb[0].mxu0
          %5178 = vdwg.mxu0
          %5179 = vmatprep.subr.bf16.mxu0 %v4935
          %5180 = vmatpush1.bf16.msra.mxu0 %v4934
          %5181 = vmatprep.subr.bf16.mxu0 %v4943
          %5182 = vmatpush1.bf16.msra.mxu0 %v4942
          %5183 = vmatprep.subr.bf16.mxu0 %v4951
          %5184 = vmatpush1.bf16.msra.mxu0 %v4950
          %5185 = vmatprep.subr.bf16.mxu0 %v4959
          %5186 = vmatpush1.bf16.msra.mxu0 %v4958
          %5187 = vmatprep.subr.bf16.mxu0 %v4967
          %5188 = vmatpush1.bf16.msra.mxu0 %v4966
          %5189 = vmatprep.subr.bf16.mxu0 %v4975
          %5190 = vmatpush1.bf16.msra.mxu0 %v4974
          %5191 = vmatprep.subr.bf16.mxu0 %v4983
          %5192 = vmatpush1.bf16.msra.mxu0 %v4982
          %5193 = vmatprep.subr.bf16.mxu0 %v4991
          %5194 = vmatpush1.bf16.msra.mxu0 %v4990
          %5195 = vmatprep.subr.bf16.mxu0 0
          %5196 = vmatpush1.bf16.msra.mxu0 0
          %5197 = vmatprep.subr.bf16.mxu0 0
          %5198 = vmatpush1.bf16.msra.mxu0 0
          %5199 = vmatprep.subr.bf16.mxu0 0
          %5200 = vmatpush1.bf16.msra.mxu0 0
          %5201 = vmatprep.subr.bf16.mxu0 0
          %5202 = vmatpush1.bf16.msra.mxu0 0
          %5203 = vmatprep.subr.bf16.mxu0 0
          %5204 = vmatpush1.bf16.msra.mxu0 0
          %5205 = vmatprep.subr.bf16.mxu0 0
          %5206 = vmatpush1.bf16.msra.mxu0 0
          %5207 = vmatprep.subr.bf16.mxu0 0
          %5208 = vmatpush1.bf16.msra.mxu0 0
          %5209 = vmatprep.subr.bf16.mxu0 0
          %5210 = vmatpush1.bf16.msra.mxu0 0
          %5211 = vmatprep.mubr.bf16.mxu0 0
          %5212 = vmatmul.mubr.bf16.gmra.mrb[0].mxu0 %v4735
          %v5213 = vpop.f32.mrb[0].mxu0
          %v5214 = vadd.f32 0.0, %v5213
          %v5215 = vpop.f32.mrb[0].mxu0
          %v5216 = vadd.f32 0.0, %v5215
          %v5217 = vpop.f32.mrb[0].mxu0
          %v5218 = vpop.f32.mrb[0].mxu0
          %5219 = vdwg.mxu0
          %v5228 = vcombine.low %v5091, %v5093
          %v5229 = vcombine.low %v5132, %v5134
          %v5230 = vcombine.low %v5173, %v5175
          %v5231 = vcombine.low %v5214, %v5216
          %5236 = vst [vmem:[#allocation5] sm:$0xff] %v5228
          %5237 = vst [vmem:[#allocation5 + $0x8] sm:$0xff] %v5229
          %5238 = vst [vmem:[#allocation5 + $0x10] sm:$0xff] %v5230
          %5239 = vst [vmem:[#allocation5 + $0x18] sm:$0xff] %v5231
        $region96: #{_lambda_.1} parent=87 // pred_fallthru
          _
        // Predicated region
        $region97: #{_lambda_.1} parent=87 // pred_check
          %p5240 = pneg %p466
        $region98: #{_lambda_.1} parent=87 // pred_check_branch
          %5242 = sbr.rel (%p5240) target = $region100
        $region99: #{_lambda_.1} parent=87 // pred_region
          %s5244 = ssub.s32 512, 512
          %5245 = vsyncadd [#allocation6], %s5244
          %s5247 = sshll.u32 [#allocation5], 4
          %s5248 = int_to_ptr.vmem [resolvable:$true] %s5247
          %5250 = dma.vmem_to_hbm [thread:$0]  %s5248, 512, %s18, [#allocation6]
        $region100: #{_lambda_.1} parent=87 // pred_fallthru
          _
        // Predicated region
        $region101: #{_lambda_.1} parent=87 // pred_check
          %p5251 = pneg %p466
        $region102: #{_lambda_.1} parent=87 // pred_check_branch
          %5253 = sbr.rel (%p5251) target = $region104
        $region103: #{_lambda_.1} parent=87 // pred_region
          %5254 = dma.done [#allocation6], 512
        $region104: #{_lambda_.1} parent=87 // pred_fallthru
          _
      $region88: #{_lambda_.1} parent=5 // pred_fallthru
        _
      %p5255 = scmp.le.s32.totalorder 2, %s31
      // Predicated region
      $region105: #{_lambda_.1} parent=5 // pred_check
        %p5256 = pneg %p5255
      $region106: #{_lambda_.1} parent=5 // pred_check_branch
        %5258 = sbr.rel (%p5256) target = $region108
      $region107: #{_lambda_.1} parent=5 // pred_region
        %s5259 = ssub.s32 %s31, 2
      $region108: #{_lambda_.1} parent=5 // pred_fallthru
        _
    $region6: #{_lambda_.1} parent=1 // loop_footer
      %s35 = sadd.s32 1, %s31
    $region7: #{_lambda_.1} parent=1 // loop_footer_branch
      %30 = sbr.rel target = $region3
    $region8: #{_lambda_.1} parent=1 // loop_exit
      _
    %5260 = vsyncpa [#allocation6], 1
    %s5261 = scalar_lea.sflag [#allocation6], 1
    %5262 = vsyncpa %s5261, 1

</llo_original>
